<compile_context>
chip_gen: v7x
topology: tpu7x:2x2x1
jax: 0.10.0
libtpu: 0.0.40
codegen_flags: <defaults>
</compile_context>

<pallas_src>
import jax
import jax.numpy as jnp
import numpy as np
from jax.experimental import pallas as pl
from jax.experimental.pallas import tpu as pltpu

ALPHA_SCALE = 9.9
LN_EPS = 1e-5       # torch.nn.LayerNorm default eps
NORM_EPS = 1e-12    # torch F.normalize default eps


def _layernorm(y, gamma, beta):
    mean = jnp.mean(y, axis=-1, keepdims=True)
    var = jnp.mean(jnp.square(y - mean), axis=-1, keepdims=True)
    return (y - mean) * jax.lax.rsqrt(var + LN_EPS) * gamma + beta


# ---------------------------------------------------------------------------
# Kernel 1: fully fused forward
#   stim_out = relu(stimulus @ W_heb);  rec_out = relu(prev @ W_rec)
#   final    = stim_out + LayerNorm(rec_out)
#   dop      = tanh(LN(fc3(relu(LN(fc2(relu(LN(fc1(final)))))))))
#   alpha    = repeat_interleave(mean_batch(dop), D//U) * ALPHA_SCALE   (lane-dense (1,D))
# Also emits bf16 X=[stimulus, prev] and Y=[stim_out, rec_out] for the update kernel.
# ---------------------------------------------------------------------------
def _fused_forward_kernel(stim_ref, prev_ref, w_ref,
                          lnr_g_ref, lnr_b_ref,
                          fc1_w_ref, fc1_b_ref, ln1_g_ref, ln1_b_ref,
                          fc2_w_ref, fc2_b_ref, ln2_g_ref, ln2_b_ref,
                          fc3_w_ref, fc3_b_ref, ln3_g_ref, ln3_b_ref,
                          expand_ref,
                          final_ref, x_bf_ref, y_bf_ref, alpha_ref):
    stim_bf = stim_ref[...].astype(jnp.bfloat16)
    prev_bf = prev_ref[...].astype(jnp.bfloat16)
    w_heb = w_ref[0].astype(jnp.bfloat16)     # no-op if already bf16
    w_rec = w_ref[1].astype(jnp.bfloat16)

    stim_out = jnp.maximum(
        jnp.dot(stim_bf, w_heb, preferred_element_type=jnp.float32), 0.0)
    rec_out = jnp.maximum(
        jnp.dot(prev_bf, w_rec, preferred_element_type=jnp.float32), 0.0)
    final = stim_out + _layernorm(rec_out, lnr_g_ref[...], lnr_b_ref[...])
    final_ref[...] = final

    # bf16 matmul operands for the weight-update kernel (no wrapper casts / stacks).
    x_bf_ref[0] = stim_bf
    x_bf_ref[1] = prev_bf
    y_bf_ref[0] = stim_out.astype(jnp.bfloat16)
    y_bf_ref[1] = rec_out.astype(jnp.bfloat16)

    # Neuromodulator, all in VMEM.
    h = jnp.dot(final.astype(jnp.bfloat16), fc1_w_ref[...],
                preferred_element_type=jnp.float32) + fc1_b_ref[...]
    h = jnp.maximum(_layernorm(h, ln1_g_ref[...], ln1_b_ref[...]), 0.0)
    h = jnp.dot(h.astype(jnp.bfloat16), fc2_w_ref[...],
                preferred_element_type=jnp.float32) + fc2_b_ref[...]
    h = jnp.maximum(_layernorm(h, ln2_g_ref[...], ln2_b_ref[...]), 0.0)
    d = jnp.dot(h.astype(jnp.bfloat16), fc3_w_ref[...],
                preferred_element_type=jnp.float32) + fc3_b_ref[...]
    d = jnp.tanh(_layernorm(d, ln3_g_ref[...], ln3_b_ref[...]))      # (B, U)

    # mean over batch; repeat_interleave via exact 0/1 expansion matmul; scale.
    dop_mean = jnp.mean(d, axis=0, keepdims=True)                    # (1, U)
    alpha_ref[...] = ALPHA_SCALE * jnp.dot(
        dop_mean, expand_ref[...], preferred_element_type=jnp.float32)


def fused_forward(stimulus, prev, w_fwd, kp):
    B, D = stimulus.shape
    return pl.pallas_call(
        _fused_forward_kernel,
        out_shape=(
            jax.ShapeDtypeStruct((B, D), jnp.float32),      # final_output
            jax.ShapeDtypeStruct((2, B, D), jnp.bfloat16),  # X = [stimulus, prev]
            jax.ShapeDtypeStruct((2, B, D), jnp.bfloat16),  # Y = [stim_out, rec_out]
            jax.ShapeDtypeStruct((1, D), jnp.float32),      # alpha (lane-dense)
        ),
    )(stimulus, prev, w_fwd,
      kp["ln_rec_g"], kp["ln_rec_b"],
      kp["fc1_w"], kp["fc1_b"], kp["ln1_g"], kp["ln1_b"],
      kp["fc2_w"], kp["fc2_b"], kp["ln2_g"], kp["ln2_b"],
      kp["fc3_w"], kp["fc3_b"], kp["ln3_g"], kp["ln3_b"],
      kp["expand"])


# ---------------------------------------------------------------------------
# Kernel 2: fused Hebbian weight update for BOTH matrices (grid axis 0 = which matrix)
#   upd = X^T @ Y                      (sum of per-sample outer products, K = batch)
#   W'  = (W + upd * alpha[None, :]) * (1 - decay)[:, None]
#   out = W' / max(||W'||_row, 1e-12)  (F.normalize(p=2, dim=1), via rsqrt on EUP)
# Emits f32 state and a bf16 copy for the next step's forward matmuls.
# NOTE: the (1 - decay) row scale is mathematically cancelled by the row normalize
# (decay ~ U[0,1)); kept anyway to match the reference semantics bit-for-bit in style.
# ---------------------------------------------------------------------------
def _hebbian_update_kernel(x_ref, y_ref, w_ref, alpha_ref, decay_ref,
                           wf_ref, wb_ref):
    upd = jax.lax.dot_general(
        x_ref[0], y_ref[0], (((0,), (0,)), ((), ())),
        preferred_element_type=jnp.float32)                       # (tm, D) = X^T @ Y
    w = (w_ref[0] + upd * alpha_ref[...]) * (1.0 - decay_ref[...])
    ss = jnp.sum(w * w, axis=-1, keepdims=True)
    wn = w * jax.lax.rsqrt(jnp.maximum(ss, NORM_EPS * NORM_EPS))
    wf_ref[0] = wn
    wb_ref[0] = wn.astype(jnp.bfloat16)


def hebbian_update_fused(w_all, x_bf, y_bf, alpha, decay_col):
    _, D, _ = w_all.shape
    B = x_bf.shape[1]
    # Full-matrix block for small D (single grid step per matrix on v5e/v6e);
    # 256-row tiles for large D to stay inside v7x's smaller (64 MiB) VMEM.
    tm = D if D <= 1024 else 256
    assert D % tm == 0
    nb = D // tm
    return pl.pallas_call(
        _hebbian_update_kernel,
        out_shape=(
            jax.ShapeDtypeStruct((2, D, D), jnp.float32),
            jax.ShapeDtypeStruct((2, D, D), jnp.bfloat16),
        ),
        grid_spec=pltpu.PrefetchScalarGridSpec(
            num_scalar_prefetch=0,
            grid=(2, nb),
            in_specs=[
                pl.BlockSpec((1, B, tm), lambda m, i: (m, 0, i)),   # X columns
                pl.BlockSpec((1, B, D), lambda m, i: (m, 0, 0)),    # Y
                pl.BlockSpec((1, tm, D), lambda m, i: (m, i, 0)),   # W rows
                pl.BlockSpec((1, D), lambda m, i: (0, 0)),          # alpha (shared)
                pl.BlockSpec((tm, 1), lambda m, i: (i, 0)),         # decay rows
            ],
            out_specs=[
                pl.BlockSpec((1, tm, D), lambda m, i: (m, i, 0)),
                pl.BlockSpec((1, tm, D), lambda m, i: (m, i, 0)),
            ],
        ),
        compiler_params=pltpu.CompilerParams(
            dimension_semantics=("parallel", "parallel"),
        ),
    )(x_bf, y_bf, w_all, alpha, decay_col)


# ---------------------------------------------------------------------------
# Functional HebbianLayer forward (single step)
# ---------------------------------------------------------------------------
def hebbian_layer_forward(stimulus, prev, kp, w_fwd=None):
    if w_fwd is None:
        w_fwd = kp["w_all"]        # later steps can pass the bf16 copy instead

    final, x_bf, y_bf, alpha = fused_forward(stimulus, prev, w_fwd, kp)
    w_new, w_new_bf = hebbian_update_fused(
        kp["w_all"], x_bf, y_bf, alpha, kp["decay_col"])

    # TODO(synk): PyTorch mutates module buffers in place; returned here as new state.
    new_state = {
        "previous_activation": final,
        "alpha": alpha[0],          # (D,)
        "w_all": w_new,             # f32 master state [W_heb, W_rec]
        "w_all_bf16": w_new_bf,     # bf16 copy: halves next step's forward weight DMA
    }
    return final, new_state


# ---------------------------------------------------------------------------
# Parameters: f32 "PyTorch-like" params + one-time kernel-side preparation
# ---------------------------------------------------------------------------
def init_params(key, total_dim, num_units):
    D, U = total_dim, num_units
    ks = jax.random.split(key, 17)

    def lin(kw, kb, din, dout):
        w = jax.random.normal(kw, (din, dout), jnp.float32) / np.sqrt(din)
        b = 0.01 * jax.random.normal(kb, (dout,), jnp.float32)
        return w, b

    def ln(kg, kb, n):
        g = 1.0 + 0.1 * jax.random.normal(kg, (n,), jnp.float32)
        b = 0.1 * jax.random.normal(kb, (n,), jnp.float32)
        return g, b

    fc1_w, fc1_b = lin(ks[0], ks[1], D, 512)
    fc2_w, fc2_b = lin(ks[2], ks[3], 512, 256)
    fc3_w, fc3_b = lin(ks[4], ks[5], 256, U)
    ln1_g, ln1_b = ln(ks[6], ks[7], 512)
    ln2_g, ln2_b = ln(ks[8], ks[9], 256)
    ln3_g, ln3_b = ln(ks[10], ks[11], U)
    ln_rec_g, ln_rec_b = ln(ks[12], ks[13], D)

    return {
        "w_heb": jax.random.normal(ks[14], (D, D), jnp.float32),
        "w_rec": jax.random.normal(ks[15], (D, D), jnp.float32),
        "decay": jax.random.uniform(ks[16], (D,), jnp.float32),
        "ln_rec_g": ln_rec_g, "ln_rec_b": ln_rec_b,
        "fc1_w": fc1_w, "fc1_b": fc1_b, "ln1_g": ln1_g, "ln1_b": ln1_b,
        "fc2_w": fc2_w, "fc2_b": fc2_b, "ln2_g": ln2_g, "ln2_b": ln2_b,
        "fc3_w": fc3_w, "fc3_b": fc3_b, "ln3_g": ln3_g, "ln3_b": ln3_b,
    }


def prepare_params(p):
    """One-time casts/reshapes so the per-step path has zero glue dispatches."""
    D = p["w_heb"].shape[0]
    U = p["fc3_b"].shape[0]
    rep = D // U
    return {
        "w_all": jnp.stack([p["w_heb"], p["w_rec"]]),                  # (2, D, D) f32
        "decay_col": p["decay"].reshape(D, 1),
        "ln_rec_g": p["ln_rec_g"].reshape(1, D),
        "ln_rec_b": p["ln_rec_b"].reshape(1, D),
        "fc1_w": p["fc1_w"].astype(jnp.bfloat16),
        "fc1_b": p["fc1_b"].reshape(1, 512),
        "ln1_g": p["ln1_g"].reshape(1, 512), "ln1_b": p["ln1_b"].reshape(1, 512),
        "fc2_w": p["fc2_w"].astype(jnp.bfloat16),
        "fc2_b": p["fc2_b"].reshape(1, 256),
        "ln2_g": p["ln2_g"].reshape(1, 256), "ln2_b": p["ln2_b"].reshape(1, 256),
        "fc3_w": p["fc3_w"].astype(jnp.bfloat16),
        "fc3_b": p["fc3_b"].reshape(1, U),
        "ln3_g": p["ln3_g"].reshape(1, U), "ln3_b": p["ln3_b"].reshape(1, U),
        # repeat_interleave as an exact 0/1 selection matrix: (U, D)
        "expand": jnp.repeat(jnp.eye(U, dtype=jnp.float32), rep, axis=1),
    }


# ---------------------------------------------------------------------------
# Pure-JAX f32 reference for validation
# ---------------------------------------------------------------------------
def ref_forward(stimulus, prev, p):
    D = stimulus.shape[1]
    U = p["fc3_b"].shape[0]
    rec_out = jnp.maximum(prev @ p["w_rec"], 0.0)
    rec_norm = _layernorm(rec_out, p["ln_rec_g"], p["ln_rec_b"])
    stim_out = jnp.maximum(stimulus @ p["w_heb"], 0.0)
    final = stim_out + rec_norm

    h = jnp.maximum(_layernorm(final @ p["fc1_w"] + p["fc1_b"],
                               p["ln1_g"], p["ln1_b"]), 0.0)
    h = jnp.maximum(_layernorm(h @ p["fc2_w"] + p["fc2_b"],
                               p["ln2_g"], p["ln2_b"]), 0.0)
    dop = jnp.tanh(_layernorm(h @ p["fc3_w"] + p["fc3_b"],
                              p["ln3_g"], p["ln3_b"]))
    dopamine = jnp.mean(dop, axis=0)
    alpha = jnp.repeat(dopamine, D // U) * ALPHA_SCALE
    return final, alpha, stim_out, rec_out


def ref_update(w, x, y, alpha, decay):
    upd = x.T @ y
    w_new = (w + upd * alpha[None, :]) * (1.0 - decay)[:, None]
    norm = jnp.sqrt(jnp.sum(w_new * w_new, axis=1, keepdims=True))
    return w_new / jnp.maximum(norm, NORM_EPS)


if __name__ == "__main__":
    key = jax.random.PRNGKey(0)
    B, D, U = 8, 256, 32          # batch, total_dim, num_units (total_dim % num_units == 0)
    k_stim, k_param = jax.random.split(key)
    stimulus = jax.random.normal(k_stim, (B, D), jnp.float32)
    prev = jnp.zeros((B, D), jnp.float32)   # previous_activation buffer starts None -> zeros
    raw = init_params(k_param, D, U)
    kp = prepare_params(raw)

    step = jax.jit(hebbian_layer_forward)
    final, state = step(stimulus, prev, kp)
    final = jax.block_until_ready(final)
    state = jax.block_until_ready(state)

    assert final.shape == (B, D), final.shape
    assert state["alpha"].shape == (D,)
    assert state["w_all"].shape == (2, D, D)
    assert state["w_all_bf16"].dtype == jnp.bfloat16

    # Pure-JAX f32 reference.
    ref_final, ref_alpha, ref_stim_out, ref_rec_out = ref_forward(stimulus, prev, raw)
    np.testing.assert_allclose(np.asarray(final), np.asarray(ref_final),
                               rtol=5e-2, atol=5e-1)
    np.testing.assert_allclose(np.asarray(state["alpha"]), np.asarray(ref_alpha),
                               rtol=5e-2, atol=7.5e-1)
    # Validate the update with matched alpha (isolates it from upstream bf16 drift).
    wh_ref = ref_update(raw["w_heb"], stimulus, ref_stim_out,
                        state["alpha"], raw["decay"])
    wr_ref = ref_update(raw["w_rec"], prev, ref_rec_out,
                        state["alpha"], raw["decay"])
    np.testing.assert_allclose(np.asarray(state["w_all"][0]), np.asarray(wh_ref),
                               rtol=5e-2, atol=1e-2)
    np.testing.assert_allclose(np.asarray(state["w_all"][1]), np.asarray(wr_ref),
                               rtol=5e-2, atol=1e-2)
    print("KERNEL_OK")
</pallas_src>

<mosaic_0001>
module attributes {stable_mosaic.version = 11 : i64} {
  func.func @_hebbian_update_kernel(%arg0: i32, %arg1: i32, %arg2: memref<1x8x256xbf16, #tpu.memory_space<vmem>>, %arg3: memref<1x8x256xbf16, #tpu.memory_space<vmem>>, %arg4: memref<1x256x256xf32, #tpu.memory_space<vmem>>, %arg5: memref<1x256xf32, #tpu.memory_space<vmem>>, %arg6: memref<256x1xf32, #tpu.memory_space<vmem>>, %arg7: memref<1x256x256xf32, #tpu.memory_space<vmem>>, %arg8: memref<1x256x256xbf16, #tpu.memory_space<vmem>>) attributes {dimension_semantics = [#tpu.dimension_semantics<parallel>, #tpu.dimension_semantics<parallel>], iteration_bounds = array<i64: 2, 1>, scalar_prefetch = 0 : i64, scratch_operands = 0 : i64, tpu.core_type = #tpu.core_type<tc>, window_params = [{transform_indices = @transform_0, window_bounds = array<i64: 1, 8, 256>}, {transform_indices = @transform_1, window_bounds = array<i64: 1, 8, 256>}, {transform_indices = @transform_2, window_bounds = array<i64: 1, 256, 256>}, {pipeline_mode = #tpu.pipeline_mode<synchronous>, transform_indices = @transform_3, window_bounds = array<i64: 1, 256>}, {transform_indices = @transform_4, window_bounds = array<i64: 256, 1>}, {transform_indices = @transform_5, window_bounds = array<i64: 1, 256, 256>}, {transform_indices = @transform_6, window_bounds = array<i64: 1, 256, 256>}]} {
    %c0 = arith.constant 0 : index
    %c0_0 = arith.constant 0 : index
    %c0_1 = arith.constant 0 : index
    %0 = vector.load %arg2[%c0, %c0_0, %c0_1] : memref<1x8x256xbf16, #tpu.memory_space<vmem>>, vector<1x8x256xbf16>
    %1 = vector.shape_cast %0 : vector<1x8x256xbf16> to vector<8x256xbf16>
    %c0_2 = arith.constant 0 : index
    %c0_3 = arith.constant 0 : index
    %c0_4 = arith.constant 0 : index
    %2 = vector.load %arg3[%c0_2, %c0_3, %c0_4] : memref<1x8x256xbf16, #tpu.memory_space<vmem>>, vector<1x8x256xbf16>
    %3 = vector.shape_cast %2 : vector<1x8x256xbf16> to vector<8x256xbf16>
    %cst = arith.constant dense<0.000000e+00> : vector<256x256xf32>
    %4 = tpu.matmul %1, %3, %cst {dimension_numbers = #tpu.dot_dimension_numbers<[0], [0], [1], [1], [0, 1, 1, 1], [], []>} : vector<8x256xbf16>, vector<8x256xbf16>, vector<256x256xf32> -> vector<256x256xf32>
    %c0_5 = arith.constant 0 : index
    %c0_6 = arith.constant 0 : index
    %c0_7 = arith.constant 0 : index
    %5 = vector.load %arg4[%c0_5, %c0_6, %c0_7] : memref<1x256x256xf32, #tpu.memory_space<vmem>>, vector<1x256x256xf32>
    %6 = vector.shape_cast %5 : vector<1x256x256xf32> to vector<256x256xf32>
    %c0_8 = arith.constant 0 : index
    %c0_9 = arith.constant 0 : index
    %7 = vector.load %arg5[%c0_8, %c0_9] : memref<1x256xf32, #tpu.memory_space<vmem>>, vector<1x256xf32>
    %8 = vector.broadcast %7 : vector<1x256xf32> to vector<256x256xf32>
    %9 = arith.mulf %4, %8 : vector<256x256xf32>
    %10 = arith.addf %6, %9 : vector<256x256xf32>
    %c0_10 = arith.constant 0 : index
    %c0_11 = arith.constant 0 : index
    %11 = vector.load %arg6[%c0_10, %c0_11] : memref<256x1xf32, #tpu.memory_space<vmem>>, vector<256x1xf32>
    %cst_12 = arith.constant 1.000000e+00 : f32
    %12 = vector.broadcast %cst_12 : f32 to vector<256x1xf32>
    %13 = arith.subf %12, %11 : vector<256x1xf32>
    %14 = vector.broadcast %13 : vector<256x1xf32> to vector<256x256xf32>
    %15 = arith.mulf %10, %14 : vector<256x256xf32>
    %16 = arith.mulf %15, %15 : vector<256x256xf32>
    %cst_13 = arith.constant dense<0.000000e+00> : vector<256xf32>
    %17 = vector.multi_reduction <add>, %16, %cst_13 [1] : vector<256x256xf32> to vector<256xf32>
    %18 = vector.shape_cast %17 : vector<256xf32> to vector<256x1xf32>
    %cst_14 = arith.constant 1.000000e-24 : f32
    %19 = vector.broadcast %cst_14 : f32 to vector<256x1xf32>
    %20 = arith.maximumf %18, %19 : vector<256x1xf32>
    %21 = math.rsqrt %20 : vector<256x1xf32>
    %22 = vector.broadcast %21 : vector<256x1xf32> to vector<256x256xf32>
    %23 = arith.mulf %15, %22 : vector<256x256xf32>
    %c0_15 = arith.constant 0 : index
    %c0_16 = arith.constant 0 : index
    %c0_17 = arith.constant 0 : index
    %24 = vector.load %arg7[%c0_15, %c0_16, %c0_17] : memref<1x256x256xf32, #tpu.memory_space<vmem>>, vector<1x256x256xf32>
    %25 = vector.shape_cast %24 : vector<1x256x256xf32> to vector<256x256xf32>
    %26 = vector.shape_cast %23 : vector<256x256xf32> to vector<1x256x256xf32>
    tpu.vector_store %arg7[%c0_15, %c0_16, %c0_17], %26 {strides = array<i32>} : memref<1x256x256xf32, #tpu.memory_space<vmem>>, vector<1x256x256xf32>,
    %27 = arith.truncf %23 : vector<256x256xf32> to vector<256x256xbf16>
    %c0_18 = arith.constant 0 : index
    %c0_19 = arith.constant 0 : index
    %c0_20 = arith.constant 0 : index
    %28 = vector.load %arg8[%c0_18, %c0_19, %c0_20] : memref<1x256x256xbf16, #tpu.memory_space<vmem>>, vector<1x256x256xbf16>
    %29 = vector.shape_cast %28 : vector<1x256x256xbf16> to vector<256x256xbf16>
    %30 = vector.shape_cast %27 : vector<256x256xbf16> to vector<1x256x256xbf16>
    tpu.vector_store %arg8[%c0_18, %c0_19, %c0_20], %30 {strides = array<i32>} : memref<1x256x256xbf16, #tpu.memory_space<vmem>>, vector<1x256x256xbf16>,
    return
  }
  func.func @transform_0(%arg0: i32, %arg1: i32) -> (i32, i32, i32) {
    %c0_i32 = arith.constant 0 : i32
    %c0_i32_0 = arith.constant 0 : i32
    return %arg0, %c0_i32, %arg1 : i32, i32, i32
  }
  func.func @transform_1(%arg0: i32, %arg1: i32) -> (i32, i32, i32) {
    %c0_i32 = arith.constant 0 : i32
    %c0_i32_0 = arith.constant 0 : i32
    %c0_i32_1 = arith.constant 0 : i32
    return %arg0, %c0_i32, %c0_i32_0 : i32, i32, i32
  }
  func.func @transform_2(%arg0: i32, %arg1: i32) -> (i32, i32, i32) {
    %c0_i32 = arith.constant 0 : i32
    %c0_i32_0 = arith.constant 0 : i32
    return %arg0, %arg1, %c0_i32 : i32, i32, i32
  }
  func.func @transform_3(%arg0: i32, %arg1: i32) -> (i32, i32) {
    %c0_i32 = arith.constant 0 : i32
    %c0_i32_0 = arith.constant 0 : i32
    %c0_i32_1 = arith.constant 0 : i32
    return %c0_i32, %c0_i32_0 : i32, i32
  }
  func.func @transform_4(%arg0: i32, %arg1: i32) -> (i32, i32) {
    %c0_i32 = arith.constant 0 : i32
    %c0_i32_0 = arith.constant 0 : i32
    return %arg1, %c0_i32 : i32, i32
  }
  func.func @transform_5(%arg0: i32, %arg1: i32) -> (i32, i32, i32) {
    %c0_i32 = arith.constant 0 : i32
    %c0_i32_0 = arith.constant 0 : i32
    return %arg0, %arg1, %c0_i32 : i32, i32, i32
  }
  func.func @transform_6(%arg0: i32, %arg1: i32) -> (i32, i32, i32) {
    %c0_i32 = arith.constant 0 : i32
    %c0_i32_0 = arith.constant 0 : i32
    return %arg0, %arg1, %c0_i32 : i32, i32, i32
  }
}

module attributes {stable_mosaic.version = 11 : i64} {
  func.func @_fused_forward_kernel(%arg0: memref<8x256xf32, #tpu.memory_space<vmem>>, %arg1: memref<8x256xf32, #tpu.memory_space<vmem>>, %arg2: memref<2x256x256xf32, #tpu.memory_space<vmem>>, %arg3: memref<1x256xf32, #tpu.memory_space<vmem>>, %arg4: memref<1x256xf32, #tpu.memory_space<vmem>>, %arg5: memref<256x512xbf16, #tpu.memory_space<vmem>>, %arg6: memref<1x512xf32, #tpu.memory_space<vmem>>, %arg7: memref<1x512xf32, #tpu.memory_space<vmem>>, %arg8: memref<1x512xf32, #tpu.memory_space<vmem>>, %arg9: memref<512x256xbf16, #tpu.memory_space<vmem>>, %arg10: memref<1x256xf32, #tpu.memory_space<vmem>>, %arg11: memref<1x256xf32, #tpu.memory_space<vmem>>, %arg12: memref<1x256xf32, #tpu.memory_space<vmem>>, %arg13: memref<256x32xbf16, #tpu.memory_space<vmem>>, %arg14: memref<1x32xf32, #tpu.memory_space<vmem>>, %arg15: memref<1x32xf32, #tpu.memory_space<vmem>>, %arg16: memref<1x32xf32, #tpu.memory_space<vmem>>, %arg17: memref<32x256xf32, #tpu.memory_space<vmem>>, %arg18: memref<8x256xf32, #tpu.memory_space<vmem>>, %arg19: memref<2x8x256xbf16, #tpu.memory_space<vmem>>, %arg20: memref<2x8x256xbf16, #tpu.memory_space<vmem>>, %arg21: memref<1x256xf32, #tpu.memory_space<vmem>>) attributes {dimension_semantics = [], scalar_prefetch = 0 : i64, scratch_operands = 0 : i64, tpu.core_type = #tpu.core_type<tc>} {
    %c0 = arith.constant 0 : index
    %c0_0 = arith.constant 0 : index
    %0 = vector.load %arg0[%c0, %c0_0] : memref<8x256xf32, #tpu.memory_space<vmem>>, vector<8x256xf32>
    %1 = arith.truncf %0 : vector<8x256xf32> to vector<8x256xbf16>
    %c0_1 = arith.constant 0 : index
    %c0_2 = arith.constant 0 : index
    %2 = vector.load %arg1[%c0_1, %c0_2] : memref<8x256xf32, #tpu.memory_space<vmem>>, vector<8x256xf32>
    %3 = arith.truncf %2 : vector<8x256xf32> to vector<8x256xbf16>
    %c0_3 = arith.constant 0 : index
    %c0_4 = arith.constant 0 : index
    %c0_5 = arith.constant 0 : index
    %4 = vector.load %arg2[%c0_3, %c0_4, %c0_5] : memref<2x256x256xf32, #tpu.memory_space<vmem>>, vector<1x256x256xf32>
    %5 = vector.shape_cast %4 : vector<1x256x256xf32> to vector<256x256xf32>
    %6 = arith.truncf %5 : vector<256x256xf32> to vector<256x256xbf16>
    %c1 = arith.constant 1 : index
    %c0_6 = arith.constant 0 : index
    %c0_7 = arith.constant 0 : index
    %7 = vector.load %arg2[%c1, %c0_6, %c0_7] : memref<2x256x256xf32, #tpu.memory_space<vmem>>, vector<1x256x256xf32>
    %8 = vector.shape_cast %7 : vector<1x256x256xf32> to vector<256x256xf32>
    %9 = arith.truncf %8 : vector<256x256xf32> to vector<256x256xbf16>
    %cst = arith.constant dense<0.000000e+00> : vector<8x256xf32>
    %10 = tpu.matmul %1, %6, %cst {dimension_numbers = #tpu.dot_dimension_numbers<[1], [0], [0], [1], [0, 0, 1, 1], [], []>} : vector<8x256xbf16>, vector<256x256xbf16>, vector<8x256xf32> -> vector<8x256xf32>
    %cst_8 = arith.constant 0.000000e+00 : f32
    %11 = vector.broadcast %cst_8 : f32 to vector<8x256xf32>
    %12 = arith.maximumf %10, %11 : vector<8x256xf32>
    %cst_9 = arith.constant dense<0.000000e+00> : vector<8x256xf32>
    %13 = tpu.matmul %3, %9, %cst_9 {dimension_numbers = #tpu.dot_dimension_numbers<[1], [0], [0], [1], [0, 0, 1, 1], [], []>} : vector<8x256xbf16>, vector<256x256xbf16>, vector<8x256xf32> -> vector<8x256xf32>
    %cst_10 = arith.constant 0.000000e+00 : f32
    %14 = vector.broadcast %cst_10 : f32 to vector<8x256xf32>
    %15 = arith.maximumf %13, %14 : vector<8x256xf32>
    %c0_11 = arith.constant 0 : index
    %c0_12 = arith.constant 0 : index
    %16 = vector.load %arg3[%c0_11, %c0_12] : memref<1x256xf32, #tpu.memory_space<vmem>>, vector<1x256xf32>
    %c0_13 = arith.constant 0 : index
    %c0_14 = arith.constant 0 : index
    %17 = vector.load %arg4[%c0_13, %c0_14] : memref<1x256xf32, #tpu.memory_space<vmem>>, vector<1x256xf32>
    %cst_15 = arith.constant dense<0.000000e+00> : vector<8xf32>
    %18 = vector.multi_reduction <add>, %15, %cst_15 [1] : vector<8x256xf32> to vector<8xf32>
    %19 = vector.shape_cast %18 : vector<8xf32> to vector<8x1xf32>
    %cst_16 = arith.constant 2.560000e+02 : f32
    %20 = vector.broadcast %cst_16 : f32 to vector<8x1xf32>
    %21 = arith.divf %19, %20 : vector<8x1xf32>
    %22 = vector.broadcast %21 : vector<8x1xf32> to vector<8x256xf32>
    %23 = arith.subf %15, %22 : vector<8x256xf32>
    %24 = arith.mulf %23, %23 : vector<8x256xf32>
    %cst_17 = arith.constant dense<0.000000e+00> : vector<8xf32>
    %25 = vector.multi_reduction <add>, %24, %cst_17 [1] : vector<8x256xf32> to vector<8xf32>
    %26 = vector.shape_cast %25 : vector<8xf32> to vector<8x1xf32>
    %cst_18 = arith.constant 2.560000e+02 : f32
    %27 = vector.broadcast %cst_18 : f32 to vector<8x1xf32>
    %28 = arith.divf %26, %27 : vector<8x1xf32>
    %29 = vector.broadcast %21 : vector<8x1xf32> to vector<8x256xf32>
    %30 = arith.subf %15, %29 : vector<8x256xf32>
    %cst_19 = arith.constant 9.99999974E-6 : f32
    %31 = vector.broadcast %cst_19 : f32 to vector<8x1xf32>
    %32 = arith.addf %28, %31 : vector<8x1xf32>
    %33 = math.rsqrt %32 : vector<8x1xf32>
    %34 = vector.broadcast %33 : vector<8x1xf32> to vector<8x256xf32>
    %35 = arith.mulf %30, %34 : vector<8x256xf32>
    %36 = vector.broadcast %16 : vector<1x256xf32> to vector<8x256xf32>
    %37 = arith.mulf %35, %36 : vector<8x256xf32>
    %38 = vector.broadcast %17 : vector<1x256xf32> to vector<8x256xf32>
    %39 = arith.addf %37, %38 : vector<8x256xf32>
    %40 = arith.addf %12, %39 : vector<8x256xf32>
    %c0_20 = arith.constant 0 : index
    %c0_21 = arith.constant 0 : index
    %41 = vector.load %arg18[%c0_20, %c0_21] : memref<8x256xf32, #tpu.memory_space<vmem>>, vector<8x256xf32>
    tpu.vector_store %arg18[%c0_20, %c0_21], %40 {strides = array<i32>} : memref<8x256xf32, #tpu.memory_space<vmem>>, vector<8x256xf32>,
    %c0_22 = arith.constant 0 : index
    %c0_23 = arith.constant 0 : index
    %c0_24 = arith.constant 0 : index
    %42 = vector.load %arg19[%c0_22, %c0_23, %c0_24] : memref<2x8x256xbf16, #tpu.memory_space<vmem>>, vector<1x8x256xbf16>
    %43 = vector.shape_cast %42 : vector<1x8x256xbf16> to vector<8x256xbf16>
    %44 = vector.shape_cast %1 : vector<8x256xbf16> to vector<1x8x256xbf16>
    tpu.vector_store %arg19[%c0_22, %c0_23, %c0_24], %44 {strides = array<i32>} : memref<2x8x256xbf16, #tpu.memory_space<vmem>>, vector<1x8x256xbf16>,
    %c1_25 = arith.constant 1 : index
    %c0_26 = arith.constant 0 : index
    %c0_27 = arith.constant 0 : index
    %45 = vector.load %arg19[%c1_25, %c0_26, %c0_27] : memref<2x8x256xbf16, #tpu.memory_space<vmem>>, vector<1x8x256xbf16>
    %46 = vector.shape_cast %45 : vector<1x8x256xbf16> to vector<8x256xbf16>
    %47 = vector.shape_cast %3 : vector<8x256xbf16> to vector<1x8x256xbf16>
    tpu.vector_store %arg19[%c1_25, %c0_26, %c0_27], %47 {strides = array<i32>} : memref<2x8x256xbf16, #tpu.memory_space<vmem>>, vector<1x8x256xbf16>,
    %48 = arith.truncf %12 : vector<8x256xf32> to vector<8x256xbf16>
    %c0_28 = arith.constant 0 : index
    %c0_29 = arith.constant 0 : index
    %c0_30 = arith.constant 0 : index
    %49 = vector.load %arg20[%c0_28, %c0_29, %c0_30] : memref<2x8x256xbf16, #tpu.memory_space<vmem>>, vector<1x8x256xbf16>
    %50 = vector.shape_cast %49 : vector<1x8x256xbf16> to vector<8x256xbf16>
    %51 = vector.shape_cast %48 : vector<8x256xbf16> to vector<1x8x256xbf16>
    tpu.vector_store %arg20[%c0_28, %c0_29, %c0_30], %51 {strides = array<i32>} : memref<2x8x256xbf16, #tpu.memory_space<vmem>>, vector<1x8x256xbf16>,
    %52 = arith.truncf %15 : vector<8x256xf32> to vector<8x256xbf16>
    %c1_31 = arith.constant 1 : index
    %c0_32 = arith.constant 0 : index
    %c0_33 = arith.constant 0 : index
    %53 = vector.load %arg20[%c1_31, %c0_32, %c0_33] : memref<2x8x256xbf16, #tpu.memory_space<vmem>>, vector<1x8x256xbf16>
    %54 = vector.shape_cast %53 : vector<1x8x256xbf16> to vector<8x256xbf16>
    %55 = vector.shape_cast %52 : vector<8x256xbf16> to vector<1x8x256xbf16>
    tpu.vector_store %arg20[%c1_31, %c0_32, %c0_33], %55 {strides = array<i32>} : memref<2x8x256xbf16, #tpu.memory_space<vmem>>, vector<1x8x256xbf16>,
    %56 = arith.truncf %40 : vector<8x256xf32> to vector<8x256xbf16>
    %c0_34 = arith.constant 0 : index
    %c0_35 = arith.constant 0 : index
    %57 = vector.load %arg5[%c0_34, %c0_35] : memref<256x512xbf16, #tpu.memory_space<vmem>>, vector<256x512xbf16>
    %cst_36 = arith.constant dense<0.000000e+00> : vector<8x512xf32>
    %58 = tpu.matmul %56, %57, %cst_36 {dimension_numbers = #tpu.dot_dimension_numbers<[1], [0], [0], [1], [0, 0, 1, 1], [], []>} : vector<8x256xbf16>, vector<256x512xbf16>, vector<8x512xf32> -> vector<8x512xf32>
    %c0_37 = arith.constant 0 : index
    %c0_38 = arith.constant 0 : index
    %59 = vector.load %arg6[%c0_37, %c0_38] : memref<1x512xf32, #tpu.memory_space<vmem>>, vector<1x512xf32>
    %60 = vector.broadcast %59 : vector<1x512xf32> to vector<8x512xf32>
    %61 = arith.addf %58, %60 : vector<8x512xf32>
    %c0_39 = arith.constant 0 : index
    %c0_40 = arith.constant 0 : index
    %62 = vector.load %arg7[%c0_39, %c0_40] : memref<1x512xf32, #tpu.memory_space<vmem>>, vector<1x512xf32>
    %c0_41 = arith.constant 0 : index
    %c0_42 = arith.constant 0 : index
    %63 = vector.load %arg8[%c0_41, %c0_42] : memref<1x512xf32, #tpu.memory_space<vmem>>, vector<1x512xf32>
    %cst_43 = arith.constant dense<0.000000e+00> : vector<8xf32>
    %64 = vector.multi_reduction <add>, %61, %cst_43 [1] : vector<8x512xf32> to vector<8xf32>
    %65 = vector.shape_cast %64 : vector<8xf32> to vector<8x1xf32>
    %cst_44 = arith.constant 5.120000e+02 : f32
    %66 = vector.broadcast %cst_44 : f32 to vector<8x1xf32>
    %67 = arith.divf %65, %66 : vector<8x1xf32>
    %68 = vector.broadcast %67 : vector<8x1xf32> to vector<8x512xf32>
    %69 = arith.subf %61, %68 : vector<8x512xf32>
    %70 = arith.mulf %69, %69 : vector<8x512xf32>
    %cst_45 = arith.constant dense<0.000000e+00> : vector<8xf32>
    %71 = vector.multi_reduction <add>, %70, %cst_45 [1] : vector<8x512xf32> to vector<8xf32>
    %72 = vector.shape_cast %71 : vector<8xf32> to vector<8x1xf32>
    %cst_46 = arith.constant 5.120000e+02 : f32
    %73 = vector.broadcast %cst_46 : f32 to vector<8x1xf32>
    %74 = arith.divf %72, %73 : vector<8x1xf32>
    %75 = vector.broadcast %67 : vector<8x1xf32> to vector<8x512xf32>
    %76 = arith.subf %61, %75 : vector<8x512xf32>
    %cst_47 = arith.constant 9.99999974E-6 : f32
    %77 = vector.broadcast %cst_47 : f32 to vector<8x1xf32>
    %78 = arith.addf %74, %77 : vector<8x1xf32>
    %79 = math.rsqrt %78 : vector<8x1xf32>
    %80 = vector.broadcast %79 : vector<8x1xf32> to vector<8x512xf32>
    %81 = arith.mulf %76, %80 : vector<8x512xf32>
    %82 = vector.broadcast %62 : vector<1x512xf32> to vector<8x512xf32>
    %83 = arith.mulf %81, %82 : vector<8x512xf32>
    %84 = vector.broadcast %63 : vector<1x512xf32> to vector<8x512xf32>
    %85 = arith.addf %83, %84 : vector<8x512xf32>
    %cst_48 = arith.constant 0.000000e+00 : f32
    %86 = vector.broadcast %cst_48 : f32 to vector<8x512xf32>
    %87 = arith.maximumf %85, %86 : vector<8x512xf32>
    %88 = arith.truncf %87 : vector<8x512xf32> to vector<8x512xbf16>
    %c0_49 = arith.constant 0 : index
    %c0_50 = arith.constant 0 : index
    %89 = vector.load %arg9[%c0_49, %c0_50] : memref<512x256xbf16, #tpu.memory_space<vmem>>, vector<512x256xbf16>
    %cst_51 = arith.constant dense<0.000000e+00> : vector<8x256xf32>
    %90 = tpu.matmul %88, %89, %cst_51 {dimension_numbers = #tpu.dot_dimension_numbers<[1], [0], [0], [1], [0, 0, 1, 1], [], []>} : vector<8x512xbf16>, vector<512x256xbf16>, vector<8x256xf32> -> vector<8x256xf32>
    %c0_52 = arith.constant 0 : index
    %c0_53 = arith.constant 0 : index
    %91 = vector.load %arg10[%c0_52, %c0_53] : memref<1x256xf32, #tpu.memory_space<vmem>>, vector<1x256xf32>
    %92 = vector.broadcast %91 : vector<1x256xf32> to vector<8x256xf32>
    %93 = arith.addf %90, %92 : vector<8x256xf32>
    %c0_54 = arith.constant 0 : index
    %c0_55 = arith.constant 0 : index
    %94 = vector.load %arg11[%c0_54, %c0_55] : memref<1x256xf32, #tpu.memory_space<vmem>>, vector<1x256xf32>
    %c0_56 = arith.constant 0 : index
    %c0_57 = arith.constant 0 : index
    %95 = vector.load %arg12[%c0_56, %c0_57] : memref<1x256xf32, #tpu.memory_space<vmem>>, vector<1x256xf32>
    %cst_58 = arith.constant dense<0.000000e+00> : vector<8xf32>
    %96 = vector.multi_reduction <add>, %93, %cst_58 [1] : vector<8x256xf32> to vector<8xf32>
    %97 = vector.shape_cast %96 : vector<8xf32> to vector<8x1xf32>
    %cst_59 = arith.constant 2.560000e+02 : f32
    %98 = vector.broadcast %cst_59 : f32 to vector<8x1xf32>
    %99 = arith.divf %97, %98 : vector<8x1xf32>
    %100 = vector.broadcast %99 : vector<8x1xf32> to vector<8x256xf32>
    %101 = arith.subf %93, %100 : vector<8x256xf32>
    %102 = arith.mulf %101, %101 : vector<8x256xf32>
    %cst_60 = arith.constant dense<0.000000e+00> : vector<8xf32>
    %103 = vector.multi_reduction <add>, %102, %cst_60 [1] : vector<8x256xf32> to vector<8xf32>
    %104 = vector.shape_cast %103 : vector<8xf32> to vector<8x1xf32>
    %cst_61 = arith.constant 2.560000e+02 : f32
    %105 = vector.broadcast %cst_61 : f32 to vector<8x1xf32>
    %106 = arith.divf %104, %105 : vector<8x1xf32>
    %107 = vector.broadcast %99 : vector<8x1xf32> to vector<8x256xf32>
    %108 = arith.subf %93, %107 : vector<8x256xf32>
    %cst_62 = arith.constant 9.99999974E-6 : f32
    %109 = vector.broadcast %cst_62 : f32 to vector<8x1xf32>
    %110 = arith.addf %106, %109 : vector<8x1xf32>
    %111 = math.rsqrt %110 : vector<8x1xf32>
    %112 = vector.broadcast %111 : vector<8x1xf32> to vector<8x256xf32>
    %113 = arith.mulf %108, %112 : vector<8x256xf32>
    %114 = vector.broadcast %94 : vector<1x256xf32> to vector<8x256xf32>
    %115 = arith.mulf %113, %114 : vector<8x256xf32>
    %116 = vector.broadcast %95 : vector<1x256xf32> to vector<8x256xf32>
    %117 = arith.addf %115, %116 : vector<8x256xf32>
    %cst_63 = arith.constant 0.000000e+00 : f32
    %118 = vector.broadcast %cst_63 : f32 to vector<8x256xf32>
    %119 = arith.maximumf %117, %118 : vector<8x256xf32>
    %120 = arith.truncf %119 : vector<8x256xf32> to vector<8x256xbf16>
    %c0_64 = arith.constant 0 : index
    %c0_65 = arith.constant 0 : index
    %121 = vector.load %arg13[%c0_64, %c0_65] : memref<256x32xbf16, #tpu.memory_space<vmem>>, vector<256x32xbf16>
    %cst_66 = arith.constant dense<0.000000e+00> : vector<8x32xf32>
    %122 = tpu.matmul %120, %121, %cst_66 {dimension_numbers = #tpu.dot_dimension_numbers<[1], [0], [0], [1], [0, 0, 1, 1], [], []>} : vector<8x256xbf16>, vector<256x32xbf16>, vector<8x32xf32> -> vector<8x32xf32>
    %c0_67 = arith.constant 0 : index
    %c0_68 = arith.constant 0 : index
    %123 = vector.load %arg14[%c0_67, %c0_68] : memref<1x32xf32, #tpu.memory_space<vmem>>, vector<1x32xf32>
    %124 = vector.broadcast %123 : vector<1x32xf32> to vector<8x32xf32>
    %125 = arith.addf %122, %124 : vector<8x32xf32>
    %c0_69 = arith.constant 0 : index
    %c0_70 = arith.constant 0 : index
    %126 = vector.load %arg15[%c0_69, %c0_70] : memref<1x32xf32, #tpu.memory_space<vmem>>, vector<1x32xf32>
    %c0_71 = arith.constant 0 : index
    %c0_72 = arith.constant 0 : index
    %127 = vector.load %arg16[%c0_71, %c0_72] : memref<1x32xf32, #tpu.memory_space<vmem>>, vector<1x32xf32>
    %cst_73 = arith.constant dense<0.000000e+00> : vector<8xf32>
    %128 = vector.multi_reduction <add>, %125, %cst_73 [1] : vector<8x32xf32> to vector<8xf32>
    %129 = vector.shape_cast %128 : vector<8xf32> to vector<8x1xf32>
    %cst_74 = arith.constant 3.200000e+01 : f32
    %130 = vector.broadcast %cst_74 : f32 to vector<8x1xf32>
    %131 = arith.divf %129, %130 : vector<8x1xf32>
    %132 = vector.broadcast %131 : vector<8x1xf32> to vector<8x32xf32>
    %133 = arith.subf %125, %132 : vector<8x32xf32>
    %134 = arith.mulf %133, %133 : vector<8x32xf32>
    %cst_75 = arith.constant dense<0.000000e+00> : vector<8xf32>
    %135 = vector.multi_reduction <add>, %134, %cst_75 [1] : vector<8x32xf32> to vector<8xf32>
    %136 = vector.shape_cast %135 : vector<8xf32> to vector<8x1xf32>
    %cst_76 = arith.constant 3.200000e+01 : f32
    %137 = vector.broadcast %cst_76 : f32 to vector<8x1xf32>
    %138 = arith.divf %136, %137 : vector<8x1xf32>
    %139 = vector.broadcast %131 : vector<8x1xf32> to vector<8x32xf32>
    %140 = arith.subf %125, %139 : vector<8x32xf32>
    %cst_77 = arith.constant 9.99999974E-6 : f32
    %141 = vector.broadcast %cst_77 : f32 to vector<8x1xf32>
    %142 = arith.addf %138, %141 : vector<8x1xf32>
    %143 = math.rsqrt %142 : vector<8x1xf32>
    %144 = vector.broadcast %143 : vector<8x1xf32> to vector<8x32xf32>
    %145 = arith.mulf %140, %144 : vector<8x32xf32>
    %146 = vector.broadcast %126 : vector<1x32xf32> to vector<8x32xf32>
    %147 = arith.mulf %145, %146 : vector<8x32xf32>
    %148 = vector.broadcast %127 : vector<1x32xf32> to vector<8x32xf32>
    %149 = arith.addf %147, %148 : vector<8x32xf32>
    %150 = math.tanh %149 : vector<8x32xf32>
    %cst_78 = arith.constant dense<0.000000e+00> : vector<32xf32>
    %151 = vector.multi_reduction <add>, %150, %cst_78 [0] : vector<8x32xf32> to vector<32xf32>
    %152 = vector.shape_cast %151 : vector<32xf32> to vector<1x32xf32>
    %cst_79 = arith.constant 8.000000e+00 : f32
    %153 = vector.broadcast %cst_79 : f32 to vector<1x32xf32>
    %154 = arith.divf %152, %153 : vector<1x32xf32>
    %c0_80 = arith.constant 0 : index
    %c0_81 = arith.constant 0 : index
    %155 = vector.load %arg17[%c0_80, %c0_81] : memref<32x256xf32, #tpu.memory_space<vmem>>, vector<32x256xf32>
    %cst_82 = arith.constant dense<0.000000e+00> : vector<1x256xf32>
    %156 = tpu.matmul %154, %155, %cst_82 {dimension_numbers = #tpu.dot_dimension_numbers<[1], [0], [0], [1], [0, 0, 1, 1], [], []>} : vector<1x32xf32>, vector<32x256xf32>, vector<1x256xf32> -> vector<1x256xf32>
    %cst_83 = arith.constant 9.89999961 : f32
    %157 = vector.broadcast %cst_83 : f32 to vector<1x256xf32>
    %158 = arith.mulf %157, %156 : vector<1x256xf32>
    %c0_84 = arith.constant 0 : index
    %c0_85 = arith.constant 0 : index
    %159 = vector.load %arg21[%c0_84, %c0_85] : memref<1x256xf32, #tpu.memory_space<vmem>>, vector<1x256xf32>
    tpu.vector_store %arg21[%c0_84, %c0_85], %158 {strides = array<i32>} : memref<1x256xf32, #tpu.memory_space<vmem>>, vector<1x256xf32>,
    return
  }
}

</mosaic_0001>

<llo_original>
// kernel: hebbian_layer_forward.3
$region0: #{hebbian_layer_forward.3}
  #allocation0 [shape = 'u32[]', space=smem, size = 0x4, offset = 0x4, fixed_abs, tag = 'smem constant byte address 0x4 - core index']
  #allocation1 [shape = 'u32[144,128]{1,0:T(1,128)}', space=vmem, size = 0x12000, scoped, tag = 'internal scratch']
  %s0 = inlined_call_operand.vmem [shape: bf16[2,8,256], index: 0, kind: input, shape index: {}]
  %s1 = inlined_call_operand.vmem [shape: bf16[2,8,256], index: 1, kind: input, shape index: {}]
  %s2 = inlined_call_operand.vmem [shape: f32[2,256,256], index: 2, kind: input, shape index: {}]
  %s3 = inlined_call_operand.vmem [shape: f32[1,256], index: 3, kind: input, shape index: {}]
  %s4 = inlined_call_operand.vmem [shape: f32[256,1], index: 4, kind: input, shape index: {}]
  %s5 = inlined_call_operand.hbm [shape: f32[2,256,256], index: 5, kind: output, shape index: {0}]
  %s6 = inlined_call_operand.hbm [shape: bf16[2,256,256], index: 6, kind: output, shape index: {1}]
  %7 = xla_tuple %s5, %s6
  %s8 = sld [smem:[#allocation0]]
  $region61: #{hebbian_layer_forward.3} parent=0
    _
  %s10 = ssub.s32 1, %s8
  %s11 = scalar_select 0, %s10, %s8
  $region1: #{hebbian_layer_forward.3} parent=0
    #allocation2 [shape = 'u8[524288]{0}', space=vmem, size = 0x80000, scoped, tag = 'output window, operand 0']
    #allocation3 [shape = 's32[2]{0}', space=sflag, size = 0x8, scoped, tag = 'scoped memory for hebbian_layer_forward.3']
    #allocation4 [shape = 'u8[262144]{0}', space=vmem, size = 0x40000, scoped, tag = 'output window, operand 1']
    #allocation5 [shape = 's32[2]{0}', space=sflag, size = 0x8, scoped, tag = 'scoped memory for hebbian_layer_forward.3']
    %12 = vsyncpa [#allocation3], 0
    %s13 = scalar_lea.sflag [#allocation3], 1
    %14 = vsyncpa %s13, 0
    %15 = vsyncpa [#allocation5], 0
    %s16 = scalar_lea.sflag [#allocation5], 1
    %17 = vsyncpa %s16, 0
    loop: start=0, step=1, limit=4
    $region2: #{hebbian_layer_forward.3} parent=1 // loop_pre_header
      _
    $region3: #{hebbian_layer_forward.3} parent=1 // loop_header
      %s19 = sphi 0, %s23
      %p20 = scmp.ge.s32.totalorder %s19, 4
      %s26 = sphi 0, %s38
      %s27 = sphi 0, %s34
      %s28 = sphi 0, %s26
      %s29 = sphi 0, %s27
      %s30 = sphi 0, %s28
      %s31 = sphi 0, %s29
      %s43 = sphi 0, %s45
      %s46 = sphi 0, %s43
      %s47 = sphi 0, %s46
      %s63 = sphi 0, %s47
      %s69 = sphi 0, %s71
      %s72 = sphi 0, %s69
      %s73 = sphi 0, %s72
      %s89 = sphi 0, %s73
      %s97 = sphi 0, %s99
      %s100 = sphi 0, %s97
      %s101 = sphi 0, %s100
      %s117 = sphi 0, %s101
      %s121 = sphi 0, %s121
      %s123 = sphi 0, %s121
      %s124 = sphi 0, %s123
      %s138 = sphi 0, %s124
      %s144 = sphi 0, %s146
      %s147 = sphi 0, %s144
      %s148 = sphi 0, %s147
      %s164 = sphi 0, %s148
      %s172 = sphi 0, %s174
      %s175 = sphi 0, %s172
      %s176 = sphi 0, %s175
      %s192 = sphi 0, %s176
      %s200 = sphi 0, %s202
      %s203 = sphi 0, %s200
      %s204 = sphi 0, %s203
      %s220 = sphi 0, %s204
    $region4: #{hebbian_layer_forward.3} parent=1 // loop_header_branch
      %22 = sbr.rel (%p20) target = $region8
    $region5: #{hebbian_layer_forward.3} parent=1 // loop_body
      %s24 = ssub.s32 %s19, 1
      %s25 = ssub.s32 %s19, 2
      %s32 = sadd.s32 1, %s27
      %p33 = scmp.ge.s32.totalorder %s32, 1
      %s34 = scalar_select %p33, 0, %s32
      %s35 = sadd.s32 1, %s26
      %s36 = scalar_select %p33, %s35, %s26
      %p37 = scmp.ge.s32.totalorder %s36, 2
      %s38 = scalar_select %p37, 0, %s36
      %s39 = ssub.s32 %s26, %s38
      %s40 = ssub.s32 %s27, %s34
      %s41 = sor.u32 %s39, %s40
      %p42 = scmp.eq.s32.totalorder %s41, 0
      %s44 = sadd.s32 %s43, 1
      %s45 = scalar_select %p42, %s43, %s44
      %p48 = pneg %p42
      %p49 = scmp.eq.s32.totalorder %s19, 1
      %p50 = por %p48, %p49
      %p51 = scmp.ne.s32.totalorder %s43, %s46
      %p52 = scmp.eq.s32.totalorder %s19, 0
      %p53 = por %p51, %p52
      %p54 = scmp.ne.s32.totalorder %s43, %s46
      %p55 = scmp.eq.s32.totalorder %s24, 1
      %p56 = por %p54, %p55
      %p57 = scmp.ne.s32.totalorder %s46, %s47
      %p58 = scmp.eq.s32.totalorder %s24, 0
      %p59 = por %p57, %p58
      %p60 = scmp.ne.s32.totalorder %s46, %s47
      %p61 = scmp.eq.s32.totalorder %s25, 1
      %p62 = por %p60, %p61
      %p64 = scmp.ne.s32.totalorder %s47, %s63
      %p65 = scmp.eq.s32.totalorder %s25, 0
      %p66 = por %p64, %p65
      %s67 = ssub.s32 %s26, %s38
      %p68 = scmp.eq.s32.totalorder %s67, 0
      %s70 = sadd.s32 %s69, 1
      %s71 = scalar_select %p68, %s69, %s70
      %p74 = pneg %p68
      %p75 = scmp.eq.s32.totalorder %s19, 1
      %p76 = por %p74, %p75
      %p77 = scmp.ne.s32.totalorder %s69, %s72
      %p78 = scmp.eq.s32.totalorder %s19, 0
      %p79 = por %p77, %p78
      %p80 = scmp.ne.s32.totalorder %s69, %s72
      %p81 = scmp.eq.s32.totalorder %s24, 1
      %p82 = por %p80, %p81
      %p83 = scmp.ne.s32.totalorder %s72, %s73
      %p84 = scmp.eq.s32.totalorder %s24, 0
      %p85 = por %p83, %p84
      %p86 = scmp.ne.s32.totalorder %s72, %s73
      %p87 = scmp.eq.s32.totalorder %s25, 1
      %p88 = por %p86, %p87
      %p90 = scmp.ne.s32.totalorder %s73, %s89
      %p91 = scmp.eq.s32.totalorder %s25, 0
      %p92 = por %p90, %p91
      %s93 = ssub.s32 %s26, %s38
      %s94 = ssub.s32 %s27, %s34
      %s95 = sor.u32 %s93, %s94
      %p96 = scmp.eq.s32.totalorder %s95, 0
      %s98 = sadd.s32 %s97, 1
      %s99 = scalar_select %p96, %s97, %s98
      %p102 = pneg %p96
      %p103 = scmp.eq.s32.totalorder %s19, 1
      %p104 = por %p102, %p103
      %p105 = scmp.ne.s32.totalorder %s97, %s100
      %p106 = scmp.eq.s32.totalorder %s19, 0
      %p107 = por %p105, %p106
      %p108 = scmp.ne.s32.totalorder %s97, %s100
      %p109 = scmp.eq.s32.totalorder %s24, 1
      %p110 = por %p108, %p109
      %p111 = scmp.ne.s32.totalorder %s100, %s101
      %p112 = scmp.eq.s32.totalorder %s24, 0
      %p113 = por %p111, %p112
      %p114 = scmp.ne.s32.totalorder %s100, %s101
      %p115 = scmp.eq.s32.totalorder %s25, 1
      %p116 = por %p114, %p115
      %p118 = scmp.ne.s32.totalorder %s101, %s117
      %p119 = scmp.eq.s32.totalorder %s25, 0
      %p120 = por %p118, %p119
      %s122 = sadd.s32 %s121, 1
      %p125 = scmp.eq.s32.totalorder %s19, 1
      %p126 = scmp.ne.s32.totalorder %s121, %s123
      %p127 = scmp.eq.s32.totalorder %s19, 0
      %p128 = por %p126, %p127
      %p129 = scmp.ne.s32.totalorder %s121, %s123
      %p130 = scmp.eq.s32.totalorder %s24, 1
      %p131 = por %p129, %p130
      %p132 = scmp.ne.s32.totalorder %s123, %s124
      %p133 = scmp.eq.s32.totalorder %s24, 0
      %p134 = por %p132, %p133
      %p135 = scmp.ne.s32.totalorder %s123, %s124
      %p136 = scmp.eq.s32.totalorder %s25, 1
      %p137 = por %p135, %p136
      %p139 = scmp.ne.s32.totalorder %s124, %s138
      %p140 = scmp.eq.s32.totalorder %s25, 0
      %p141 = por %p139, %p140
      %s142 = ssub.s32 %s27, %s34
      %p143 = scmp.eq.s32.totalorder %s142, 0
      %s145 = sadd.s32 %s144, 1
      %s146 = scalar_select %p143, %s144, %s145
      %p149 = pneg %p143
      %p150 = scmp.eq.s32.totalorder %s19, 1
      %p151 = por %p149, %p150
      %p152 = scmp.ne.s32.totalorder %s144, %s147
      %p153 = scmp.eq.s32.totalorder %s19, 0
      %p154 = por %p152, %p153
      %p155 = scmp.ne.s32.totalorder %s144, %s147
      %p156 = scmp.eq.s32.totalorder %s24, 1
      %p157 = por %p155, %p156
      %p158 = scmp.ne.s32.totalorder %s147, %s148
      %p159 = scmp.eq.s32.totalorder %s24, 0
      %p160 = por %p158, %p159
      %p161 = scmp.ne.s32.totalorder %s147, %s148
      %p162 = scmp.eq.s32.totalorder %s25, 1
      %p163 = por %p161, %p162
      %p165 = scmp.ne.s32.totalorder %s148, %s164
      %p166 = scmp.eq.s32.totalorder %s25, 0
      %p167 = por %p165, %p166
      %s168 = ssub.s32 %s26, %s38
      %s169 = ssub.s32 %s27, %s34
      %s170 = sor.u32 %s168, %s169
      %p171 = scmp.eq.s32.totalorder %s170, 0
      %s173 = sadd.s32 %s172, 1
      %s174 = scalar_select %p171, %s172, %s173
      %p177 = pneg %p171
      %p178 = scmp.eq.s32.totalorder %s19, 1
      %p179 = por %p177, %p178
      %p180 = scmp.ne.s32.totalorder %s172, %s175
      %p181 = scmp.eq.s32.totalorder %s19, 0
      %p182 = por %p180, %p181
      %p183 = scmp.ne.s32.totalorder %s172, %s175
      %p184 = scmp.eq.s32.totalorder %s24, 1
      %p185 = por %p183, %p184
      %p186 = scmp.ne.s32.totalorder %s175, %s176
      %p187 = scmp.eq.s32.totalorder %s24, 0
      %p188 = por %p186, %p187
      %p189 = scmp.ne.s32.totalorder %s175, %s176
      %p190 = scmp.eq.s32.totalorder %s25, 1
      %p191 = por %p189, %p190
      %p193 = scmp.ne.s32.totalorder %s176, %s192
      %p194 = scmp.eq.s32.totalorder %s25, 0
      %p195 = por %p193, %p194
      %s196 = ssub.s32 %s26, %s38
      %s197 = ssub.s32 %s27, %s34
      %s198 = sor.u32 %s196, %s197
      %p199 = scmp.eq.s32.totalorder %s198, 0
      %s201 = sadd.s32 %s200, 1
      %s202 = scalar_select %p199, %s200, %s201
      %p205 = pneg %p199
      %p206 = scmp.eq.s32.totalorder %s19, 1
      %p207 = por %p205, %p206
      %p208 = scmp.ne.s32.totalorder %s200, %s203
      %p209 = scmp.eq.s32.totalorder %s19, 0
      %p210 = por %p208, %p209
      %p211 = scmp.ne.s32.totalorder %s200, %s203
      %p212 = scmp.eq.s32.totalorder %s24, 1
      %p213 = por %p211, %p212
      %p214 = scmp.ne.s32.totalorder %s203, %s204
      %p215 = scmp.eq.s32.totalorder %s24, 0
      %p216 = por %p214, %p215
      %p217 = scmp.ne.s32.totalorder %s203, %s204
      %p218 = scmp.eq.s32.totalorder %s25, 1
      %p219 = por %p217, %p218
      %p221 = scmp.ne.s32.totalorder %s204, %s220
      %p222 = scmp.eq.s32.totalorder %s25, 0
      %p223 = por %p221, %p222
      %p224 = scmp.le.s32.totalorder 1, %s19
      %p225 = scmp.lt.s32.totalorder %s19, 3
      %p226 = pnand %p224, %p225
      %p227 = pneg %p226
      // Predicated region
      $region9: #{hebbian_layer_forward.3} parent=5 // pred_check
        _
      $region10: #{hebbian_layer_forward.3} parent=5 // pred_check_branch
        %229 = sbr.rel (%p226) target = $region12
      $region11: #{hebbian_layer_forward.3} parent=5 // pred_region
        %s230 = ssub.s32 %s19, 1
        // Predicated region
        $region13: #{hebbian_layer_forward.3} parent=11 // pred_check
          %p231 = pneg %p134
        $region14: #{hebbian_layer_forward.3} parent=11 // pred_check_branch
          %233 = sbr.rel (%p231) target = $region16
        $region15: #{hebbian_layer_forward.3} parent=11 // pred_region
          _
        $region16: #{hebbian_layer_forward.3} parent=11 // pred_fallthru
          _
        // Predicated region
        $region17: #{hebbian_layer_forward.3} parent=11 // pred_check
          %p234 = pneg %p160
        $region18: #{hebbian_layer_forward.3} parent=11 // pred_check_branch
          %236 = sbr.rel (%p234) target = $region20
        $region19: #{hebbian_layer_forward.3} parent=11 // pred_region
          %s237 = smul.u32 32, %s29
          %p238 = scmp.lt.s32.totalorder %s237, 31
          %s239 = scalar_select %p238, %s237, 31
          %s240 = smul.addr %s239, 8
          %s241 = scalar_lea.vmem %s4, %s240
          %s242 = smul.u32 32, %s29
        $region20: #{hebbian_layer_forward.3} parent=11 // pred_fallthru
          _
      $region12: #{hebbian_layer_forward.3} parent=5 // pred_fallthru
        _
      %p243 = scmp.lt.s32.totalorder %s19, 2
      // Predicated region
      $region21: #{hebbian_layer_forward.3} parent=5 // pred_check
        %p244 = pneg %p243
      $region22: #{hebbian_layer_forward.3} parent=5 // pred_check_branch
        %246 = sbr.rel (%p244) target = $region24
      $region23: #{hebbian_layer_forward.3} parent=5 // pred_region
        // Predicated region
        $region25: #{hebbian_layer_forward.3} parent=23 // pred_check
          %p247 = pneg %p53
        $region26: #{hebbian_layer_forward.3} parent=23 // pred_check_branch
          %249 = sbr.rel (%p247) target = $region28
        $region27: #{hebbian_layer_forward.3} parent=23 // pred_region
          %s250 = smul.u32 2, %s27
          %p251 = scmp.lt.s32.totalorder %s26, 1
          %s252 = scalar_select %p251, %s26, 1
          %p253 = scmp.lt.s32.totalorder %s250, 1
          %s254 = scalar_select %p253, %s250, 1
          %s255 = smul.addr %s252, 2
          %s256 = sadd.s32 %s254, %s255
          %s257 = smul.addr %s256, 4
          %s258 = scalar_lea.vmem %s0, %s257
          %s259 = smul.u32 2, %s27
        $region28: #{hebbian_layer_forward.3} parent=23 // pred_fallthru
          _
        // Predicated region
        $region29: #{hebbian_layer_forward.3} parent=23 // pred_check
          %p260 = pneg %p79
        $region30: #{hebbian_layer_forward.3} parent=23 // pred_check_branch
          %262 = sbr.rel (%p260) target = $region32
        $region31: #{hebbian_layer_forward.3} parent=23 // pred_region
          %p263 = scmp.lt.s32.totalorder %s26, 1
          %s264 = scalar_select %p263, %s26, 1
          %s265 = smul.addr %s264, 2
          %s266 = smul.addr %s265, 4
          %s267 = scalar_lea.vmem %s1, %s266
        $region32: #{hebbian_layer_forward.3} parent=23 // pred_fallthru
          _
        // Predicated region
        $region33: #{hebbian_layer_forward.3} parent=23 // pred_check
          %p268 = pneg %p107
        $region34: #{hebbian_layer_forward.3} parent=23 // pred_check_branch
          %270 = sbr.rel (%p268) target = $region36
        $region35: #{hebbian_layer_forward.3} parent=23 // pred_region
          %s271 = smul.u32 32, %s27
          %p272 = scmp.lt.s32.totalorder %s26, 1
          %s273 = scalar_select %p272, %s26, 1
          %p274 = scmp.lt.s32.totalorder %s271, 31
          %s275 = scalar_select %p274, %s271, 31
          %s276 = smul.addr %s275, 2
          %s277 = smul.addr %s273, 64
          %s278 = sadd.s32 %s276, %s277
          %s279 = smul.addr %s278, 8
          %s280 = scalar_lea.vmem %s2, %s279
          %s281 = smul.u32 32, %s27
        $region36: #{hebbian_layer_forward.3} parent=23 // pred_fallthru
          _
      $region24: #{hebbian_layer_forward.3} parent=5 // pred_fallthru
        _
      %p282 = scmp.le.s32.totalorder 1, %s19
      %p283 = scmp.lt.s32.totalorder %s19, 3
      %p284 = pnand %p282, %p283
      %p285 = pneg %p284
      // Predicated region
      $region37: #{hebbian_layer_forward.3} parent=5 // pred_check
        _
      $region38: #{hebbian_layer_forward.3} parent=5 // pred_check_branch
        %287 = sbr.rel (%p284) target = $region40
      $region39: #{hebbian_layer_forward.3} parent=5 // pred_region
        %s288 = ssub.s32 %s19, 1
        %s289 = smul.u32 2, %s29
        %p290 = scmp.lt.s32.totalorder %s28, 1
        %s291 = scalar_select %p290, %s28, 1
        %p292 = scmp.lt.s32.totalorder %s289, 1
        %s293 = scalar_select %p292, %s289, 1
        %s294 = smul.addr %s291, 2
        %s295 = sadd.s32 %s293, %s294
        %s296 = smul.addr %s295, 4
        %s297 = scalar_lea.vmem %s0, %s296
        %p298 = pneg %p59
        %p299 = pneg %p56
        %p300 = scmp.lt.s32.totalorder %s28, 1
        %s301 = scalar_select %p300, %s28, 1
        %s302 = smul.addr %s301, 2
        %s303 = smul.addr %s302, 4
        %s304 = scalar_lea.vmem %s1, %s303
        %p305 = pneg %p85
        %p306 = pneg %p82
        %s307 = smul.u32 32, %s29
        %p308 = scmp.lt.s32.totalorder %s28, 1
        %s309 = scalar_select %p308, %s28, 1
        %p310 = scmp.lt.s32.totalorder %s307, 31
        %s311 = scalar_select %p310, %s307, 31
        %s312 = smul.addr %s311, 2
        %s313 = smul.addr %s309, 64
        %s314 = sadd.s32 %s312, %s313
        %s315 = smul.addr %s314, 8
        %s316 = scalar_lea.vmem %s2, %s315
        %p317 = pneg %p113
        %p318 = pneg %p110
        %p319 = pneg %p134
        %p320 = pneg %p131
        %s321 = smul.u32 32, %s29
        %p322 = scmp.lt.s32.totalorder %s321, 31
        %s323 = scalar_select %p322, %s321, 31
        %s324 = smul.addr %s323, 8
        %s325 = scalar_lea.vmem %s4, %s324
        %p326 = pneg %p160
        %p327 = pneg %p157
        %p328 = pneg %p188
        %p329 = pneg %p185
        %s330 = sand.u32 %s175, 1
        %s331 = scalar_lea.sflag [#allocation3], %s330
        %s332 = sand.u32 %s175, 1
        %s333 = smul.addr %s332, 512
        %s334 = scalar_lea.vmem [#allocation2], %s333
        %p335 = pneg %p216
        %p336 = pneg %p213
        %s337 = sand.u32 %s203, 1
        %s338 = scalar_lea.sflag [#allocation5], %s337
        %s339 = sand.u32 %s203, 1
        %s340 = smul.addr %s339, 256
        %s341 = scalar_lea.vmem [#allocation4], %s340
        %s342 = smul.u32 2, %s29
        %p343 = scmp.lt.s32.totalorder %s28, 1
        %s344 = scalar_select %p343, %s28, 1
        %p345 = scmp.lt.s32.totalorder %s342, 1
        %s346 = scalar_select %p345, %s342, 1
        %s347 = smul.addr %s344, 2
        %s348 = sadd.s32 %s346, %s347
        %s349 = smul.addr %s348, 4
        %s350 = scalar_lea.vmem %s0, %s349
        %s351 = smul.u32 2, %s29
        %p352 = scmp.lt.s32.totalorder %s28, 1
        %s353 = scalar_select %p352, %s28, 1
        %s354 = smul.addr %s353, 2
        %s355 = smul.addr %s354, 4
        %s356 = scalar_lea.vmem %s1, %s355
        %s357 = smul.u32 32, %s29
        %p358 = scmp.lt.s32.totalorder %s28, 1
        %s359 = scalar_select %p358, %s28, 1
        %p360 = scmp.lt.s32.totalorder %s357, 31
        %s361 = scalar_select %p360, %s357, 31
        %s362 = smul.addr %s361, 2
        %s363 = smul.addr %s359, 64
        %s364 = sadd.s32 %s362, %s363
        %s365 = smul.addr %s364, 8
        %s366 = scalar_lea.vmem %s2, %s365
        %s367 = smul.u32 32, %s29
        %s368 = smul.u32 32, %s29
        %p369 = scmp.lt.s32.totalorder %s368, 31
        %s370 = scalar_select %p369, %s368, 31
        %s371 = smul.addr %s370, 8
        %s372 = scalar_lea.vmem %s4, %s371
        %s373 = smul.u32 32, %s29
        %s374 = smul.u32 32, %s29
        %s375 = smul.u32 32, %s29
        %v377 = vld [vmem:[%s350] sm:$0xff]
        %v378 = vld [vmem:[%s356] sm:$0xff]
        %v380 = vunpack.c.l.b16 %v377
        %v381 = vunpack.c.h.b16 %v377
        %v382 = vpack.c.b16 %v380, %v380
        %v383 = vpack.c.b16 %v381, %v381
        %386 = vxpose.xlu0.c.b16.start [1/8] %v382, 128
        %387 = vxpose.xlu0.c.b16.cont [2/8] 0, 128
        %388 = vxpose.xlu0.c.b16.cont [3/8] 0, 128
        %389 = vxpose.xlu0.c.b16.cont [4/8] 0, 128
        %390 = vxpose.xlu0.c.b16.cont [5/8] 0, 128
        %391 = vxpose.xlu0.c.b16.cont [6/8] 0, 128
        %392 = vxpose.xlu0.c.b16.cont [7/8] 0, 128
        %393 = vxpose.xlu0.c.b16.end [8/8] 0, 128
        %v394 = vpop.trf.xlu0
        %v395 = vpop.trf.xlu0
        %v396 = vpop.trf.xlu0
        %v397 = vpop.trf.xlu0
        %v398 = vpop.trf.xlu0
        %v399 = vpop.trf.xlu0
        %v400 = vpop.trf.xlu0
        %v401 = vpop.trf.xlu0
        %402 = vxpose.xlu0.c.b16.start [1/8] %v383, 128
        %403 = vxpose.xlu0.c.b16.cont [2/8] 0, 128
        %404 = vxpose.xlu0.c.b16.cont [3/8] 0, 128
        %405 = vxpose.xlu0.c.b16.cont [4/8] 0, 128
        %406 = vxpose.xlu0.c.b16.cont [5/8] 0, 128
        %407 = vxpose.xlu0.c.b16.cont [6/8] 0, 128
        %408 = vxpose.xlu0.c.b16.cont [7/8] 0, 128
        %409 = vxpose.xlu0.c.b16.end [8/8] 0, 128
        %v410 = vpop.trf.xlu0
        %v411 = vpop.trf.xlu0
        %v412 = vpop.trf.xlu0
        %v413 = vpop.trf.xlu0
        %v414 = vpop.trf.xlu0
        %v415 = vpop.trf.xlu0
        %v416 = vpop.trf.xlu0
        %v417 = vpop.trf.xlu0
        %v419 = vunpack.c.l.b16 %v378
        %v420 = vunpack.c.h.b16 %v378
        %v421 = vpack.c.b16 %v419, %v419
        %v422 = vpack.c.b16 %v420, %v420
        %vm423 = vcmask 64512
        %v425 = vsel %vm423, %v394, 0
        %v428 = vsel %vm423, %v395, 0
        %v431 = vsel %vm423, %v396, 0
        %v434 = vsel %vm423, %v397, 0
        %v437 = vsel %vm423, %v398, 0
        %v440 = vsel %vm423, %v399, 0
        %v443 = vsel %vm423, %v400, 0
        %v446 = vsel %vm423, %v401, 0
        %v449 = vsel %vm423, %v410, 0
        %v452 = vsel %vm423, %v411, 0
        %v455 = vsel %vm423, %v412, 0
        %v458 = vsel %vm423, %v413, 0
        %v461 = vsel %vm423, %v414, 0
        %v464 = vsel %vm423, %v415, 0
        %v467 = vsel %vm423, %v416, 0
        %v470 = vsel %vm423, %v417, 0
        %vm472 = vcmask 1043456
        %v474 = vsel %vm472, %v421, 0
        %v477 = vsel %vm472, %v422, 0
        %479 = vmatprep.subr.bf16.mxu0 %v477
        %480 = vmatpush1.bf16.msra.mxu0 %v474
        %481 = vmatprep.subr.bf16.mxu0 0
        %482 = vmatpush1.bf16.msra.mxu0 0
        %483 = vmatprep.subr.bf16.mxu0 0
        %484 = vmatpush1.bf16.msra.mxu0 0
        %485 = vmatprep.subr.bf16.mxu0 0
        %486 = vmatpush1.bf16.msra.mxu0 0
        %487 = vmatprep.subr.bf16.mxu0 0
        %488 = vmatpush1.bf16.msra.mxu0 0
        %489 = vmatprep.subr.bf16.mxu0 0
        %490 = vmatpush1.bf16.msra.mxu0 0
        %491 = vmatprep.subr.bf16.mxu0 0
        %492 = vmatpush1.bf16.msra.mxu0 0
        %493 = vmatprep.subr.bf16.mxu0 0
        %494 = vmatpush1.bf16.msra.mxu0 0
        %495 = vmatprep.subr.bf16.mxu0 0
        %496 = vmatpush1.bf16.msra.mxu0 0
        %497 = vmatprep.subr.bf16.mxu0 0
        %498 = vmatpush1.bf16.msra.mxu0 0
        %499 = vmatprep.subr.bf16.mxu0 0
        %500 = vmatpush1.bf16.msra.mxu0 0
        %501 = vmatprep.subr.bf16.mxu0 0
        %502 = vmatpush1.bf16.msra.mxu0 0
        %503 = vmatprep.subr.bf16.mxu0 0
        %504 = vmatpush1.bf16.msra.mxu0 0
        %505 = vmatprep.subr.bf16.mxu0 0
        %506 = vmatpush1.bf16.msra.mxu0 0
        %507 = vmatprep.subr.bf16.mxu0 0
        %508 = vmatpush1.bf16.msra.mxu0 0
        %509 = vmatprep.subr.bf16.mxu0 0
        %510 = vmatpush1.bf16.msra.mxu0 0
        %511 = vmatprep.mubr.bf16.mxu0 0
        %512 = vmatmul.mubr.bf16.gmra.mrb[0].mxu0 %v425
        %v513 = vpop.f32.mrb[0].mxu0
        %v514 = vadd.f32 0.0, %v513
        %v515 = vpop.f32.mrb[0].mxu0
        %v516 = vadd.f32 0.0, %v515
        %v517 = vpop.f32.mrb[0].mxu0
        %v518 = vadd.f32 0.0, %v517
        %v519 = vpop.f32.mrb[0].mxu0
        %v520 = vadd.f32 0.0, %v519
        %521 = vmatprep.mubr.bf16.mxu0 0
        %522 = vmatmul.mubr.bf16.gmra.mrb[0].mxu0 %v428
        %v523 = vpop.f32.mrb[0].mxu0
        %v524 = vadd.f32 0.0, %v523
        %v525 = vpop.f32.mrb[0].mxu0
        %v526 = vadd.f32 0.0, %v525
        %v527 = vpop.f32.mrb[0].mxu0
        %v528 = vadd.f32 0.0, %v527
        %v529 = vpop.f32.mrb[0].mxu0
        %v530 = vadd.f32 0.0, %v529
        %531 = vmatprep.mubr.bf16.mxu0 0
        %532 = vmatmul.mubr.bf16.gmra.mrb[0].mxu0 %v431
        %v533 = vpop.f32.mrb[0].mxu0
        %v534 = vadd.f32 0.0, %v533
        %v535 = vpop.f32.mrb[0].mxu0
        %v536 = vadd.f32 0.0, %v535
        %v537 = vpop.f32.mrb[0].mxu0
        %v538 = vadd.f32 0.0, %v537
        %v539 = vpop.f32.mrb[0].mxu0
        %v540 = vadd.f32 0.0, %v539
        %541 = vmatprep.mubr.bf16.mxu0 0
        %542 = vmatmul.mubr.bf16.gmra.mrb[0].mxu0 %v434
        %v543 = vpop.f32.mrb[0].mxu0
        %v544 = vadd.f32 0.0, %v543
        %v545 = vpop.f32.mrb[0].mxu0
        %v546 = vadd.f32 0.0, %v545
        %v547 = vpop.f32.mrb[0].mxu0
        %v548 = vadd.f32 0.0, %v547
        %v549 = vpop.f32.mrb[0].mxu0
        %v550 = vadd.f32 0.0, %v549
        %551 = vmatprep.mubr.bf16.mxu0 0
        %552 = vmatmul.mubr.bf16.gmra.mrb[0].mxu0 %v437
        %v553 = vpop.f32.mrb[0].mxu0
        %v554 = vadd.f32 0.0, %v553
        %v555 = vpop.f32.mrb[0].mxu0
        %v556 = vadd.f32 0.0, %v555
        %v557 = vpop.f32.mrb[0].mxu0
        %v558 = vadd.f32 0.0, %v557
        %v559 = vpop.f32.mrb[0].mxu0
        %v560 = vadd.f32 0.0, %v559
        %561 = vmatprep.mubr.bf16.mxu0 0
        %562 = vmatmul.mubr.bf16.gmra.mrb[0].mxu0 %v440
        %v563 = vpop.f32.mrb[0].mxu0
        %v564 = vadd.f32 0.0, %v563
        %v565 = vpop.f32.mrb[0].mxu0
        %v566 = vadd.f32 0.0, %v565
        %v567 = vpop.f32.mrb[0].mxu0
        %v568 = vadd.f32 0.0, %v567
        %v569 = vpop.f32.mrb[0].mxu0
        %v570 = vadd.f32 0.0, %v569
        %571 = vmatprep.mubr.bf16.mxu0 0
        %572 = vmatmul.mubr.bf16.gmra.mrb[0].mxu0 %v443
        %v573 = vpop.f32.mrb[0].mxu0
        %v574 = vadd.f32 0.0, %v573
        %v575 = vpop.f32.mrb[0].mxu0
        %v576 = vadd.f32 0.0, %v575
        %v577 = vpop.f32.mrb[0].mxu0
        %v578 = vadd.f32 0.0, %v577
        %v579 = vpop.f32.mrb[0].mxu0
        %v580 = vadd.f32 0.0, %v579
        %581 = vmatprep.mubr.bf16.mxu0 0
        %582 = vmatmul.mubr.bf16.gmra.mrb[0].mxu0 %v446
        %v583 = vpop.f32.mrb[0].mxu0
        %v584 = vadd.f32 0.0, %v583
        %v585 = vpop.f32.mrb[0].mxu0
        %v586 = vadd.f32 0.0, %v585
        %v587 = vpop.f32.mrb[0].mxu0
        %v588 = vadd.f32 0.0, %v587
        %v589 = vpop.f32.mrb[0].mxu0
        %v590 = vadd.f32 0.0, %v589
        %591 = vmatprep.mubr.bf16.mxu0 0
        %592 = vmatmul.mubr.bf16.gmra.mrb[0].mxu0 %v449
        %v593 = vpop.f32.mrb[0].mxu0
        %v594 = vadd.f32 0.0, %v593
        %v595 = vpop.f32.mrb[0].mxu0
        %v596 = vadd.f32 0.0, %v595
        %v597 = vpop.f32.mrb[0].mxu0
        %v598 = vadd.f32 0.0, %v597
        %v599 = vpop.f32.mrb[0].mxu0
        %v600 = vadd.f32 0.0, %v599
        %601 = vmatprep.mubr.bf16.mxu0 0
        %602 = vmatmul.mubr.bf16.gmra.mrb[0].mxu0 %v452
        %v603 = vpop.f32.mrb[0].mxu0
        %v604 = vadd.f32 0.0, %v603
        %v605 = vpop.f32.mrb[0].mxu0
        %v606 = vadd.f32 0.0, %v605
        %v607 = vpop.f32.mrb[0].mxu0
        %v608 = vadd.f32 0.0, %v607
        %v609 = vpop.f32.mrb[0].mxu0
        %v610 = vadd.f32 0.0, %v609
        %611 = vmatprep.mubr.bf16.mxu0 0
        %612 = vmatmul.mubr.bf16.gmra.mrb[0].mxu0 %v455
        %v613 = vpop.f32.mrb[0].mxu0
        %v614 = vadd.f32 0.0, %v613
        %v615 = vpop.f32.mrb[0].mxu0
        %v616 = vadd.f32 0.0, %v615
        %v617 = vpop.f32.mrb[0].mxu0
        %v618 = vadd.f32 0.0, %v617
        %v619 = vpop.f32.mrb[0].mxu0
        %v620 = vadd.f32 0.0, %v619
        %621 = vmatprep.mubr.bf16.mxu0 0
        %622 = vmatmul.mubr.bf16.gmra.mrb[0].mxu0 %v458
        %v623 = vpop.f32.mrb[0].mxu0
        %v624 = vadd.f32 0.0, %v623
        %v625 = vpop.f32.mrb[0].mxu0
        %v626 = vadd.f32 0.0, %v625
        %v627 = vpop.f32.mrb[0].mxu0
        %v628 = vadd.f32 0.0, %v627
        %v629 = vpop.f32.mrb[0].mxu0
        %v630 = vadd.f32 0.0, %v629
        %631 = vmatprep.mubr.bf16.mxu0 0
        %632 = vmatmul.mubr.bf16.gmra.mrb[0].mxu0 %v461
        %v633 = vpop.f32.mrb[0].mxu0
        %v634 = vadd.f32 0.0, %v633
        %v635 = vpop.f32.mrb[0].mxu0
        %v636 = vadd.f32 0.0, %v635
        %v637 = vpop.f32.mrb[0].mxu0
        %v638 = vadd.f32 0.0, %v637
        %v639 = vpop.f32.mrb[0].mxu0
        %v640 = vadd.f32 0.0, %v639
        %641 = vmatprep.mubr.bf16.mxu0 0
        %642 = vmatmul.mubr.bf16.gmra.mrb[0].mxu0 %v464
        %v643 = vpop.f32.mrb[0].mxu0
        %v644 = vadd.f32 0.0, %v643
        %v645 = vpop.f32.mrb[0].mxu0
        %v646 = vadd.f32 0.0, %v645
        %v647 = vpop.f32.mrb[0].mxu0
        %v648 = vadd.f32 0.0, %v647
        %v649 = vpop.f32.mrb[0].mxu0
        %v650 = vadd.f32 0.0, %v649
        %651 = vmatprep.mubr.bf16.mxu0 0
        %652 = vmatmul.mubr.bf16.gmra.mrb[0].mxu0 %v467
        %v653 = vpop.f32.mrb[0].mxu0
        %v654 = vadd.f32 0.0, %v653
        %v655 = vpop.f32.mrb[0].mxu0
        %v656 = vadd.f32 0.0, %v655
        %v657 = vpop.f32.mrb[0].mxu0
        %v658 = vadd.f32 0.0, %v657
        %v659 = vpop.f32.mrb[0].mxu0
        %v660 = vadd.f32 0.0, %v659
        %661 = vmatprep.mubr.bf16.mxu0 0
        %662 = vmatmul.mubr.bf16.gmra.mrb[0].mxu0 %v470
        %v663 = vpop.f32.mrb[0].mxu0
        %v664 = vadd.f32 0.0, %v663
        %v665 = vpop.f32.mrb[0].mxu0
        %v666 = vadd.f32 0.0, %v665
        %v667 = vpop.f32.mrb[0].mxu0
        %v668 = vadd.f32 0.0, %v667
        %v669 = vpop.f32.mrb[0].mxu0
        %v670 = vadd.f32 0.0, %v669
        %671 = vdwg.mxu0
        %v672 = vld [vmem:[%s366] sm:$0xff]
        %v673 = vld [vmem:[%s366 + $0x8] sm:$0xff]
        %v674 = vld [vmem:[%s366 + $0x10] sm:$0xff]
        %v675 = vld [vmem:[%s366 + $0x18] sm:$0xff]
        %v676 = vld [vmem:[%s366 + $0x20] sm:$0xff]
        %v677 = vld [vmem:[%s366 + $0x28] sm:$0xff]
        %v678 = vld [vmem:[%s366 + $0x30] sm:$0xff]
        %v679 = vld [vmem:[%s366 + $0x38] sm:$0xff]
        %v680 = vld [vmem:[%s366 + $0x40] sm:$0xff]
        %v681 = vld [vmem:[%s366 + $0x48] sm:$0xff]
        %v682 = vld [vmem:[%s366 + $0x50] sm:$0xff]
        %v683 = vld [vmem:[%s366 + $0x58] sm:$0xff]
        %v684 = vld [vmem:[%s366 + $0x60] sm:$0xff]
        %v685 = vld [vmem:[%s366 + $0x68] sm:$0xff]
        %v686 = vld [vmem:[%s366 + $0x70] sm:$0xff]
        %v687 = vld [vmem:[%s366 + $0x78] sm:$0xff]
        %v688 = vld [vmem:[%s366 + $0x80] sm:$0xff]
        %v689 = vld [vmem:[%s366 + $0x88] sm:$0xff]
        %v690 = vld [vmem:[%s366 + $0x90] sm:$0xff]
        %v691 = vld [vmem:[%s366 + $0x98] sm:$0xff]
        %v692 = vld [vmem:[%s366 + $0xa0] sm:$0xff]
        %v693 = vld [vmem:[%s366 + $0xa8] sm:$0xff]
        %v694 = vld [vmem:[%s366 + $0xb0] sm:$0xff]
        %v695 = vld [vmem:[%s366 + $0xb8] sm:$0xff]
        %v696 = vld [vmem:[%s366 + $0xc0] sm:$0xff]
        %v697 = vld [vmem:[%s366 + $0xc8] sm:$0xff]
        %v698 = vld [vmem:[%s366 + $0xd0] sm:$0xff]
        %v699 = vld [vmem:[%s366 + $0xd8] sm:$0xff]
        %v700 = vld [vmem:[%s366 + $0xe0] sm:$0xff]
        %v701 = vld [vmem:[%s366 + $0xe8] sm:$0xff]
        %v702 = vld [vmem:[%s366 + $0xf0] sm:$0xff]
        %v703 = vld [vmem:[%s366 + $0xf8] sm:$0xff]
        %v704 = vld [vmem:[%s366 + $0x100] sm:$0xff]
        %v705 = vld [vmem:[%s366 + $0x108] sm:$0xff]
        %v706 = vld [vmem:[%s366 + $0x110] sm:$0xff]
        %v707 = vld [vmem:[%s366 + $0x118] sm:$0xff]
        %v708 = vld [vmem:[%s366 + $0x120] sm:$0xff]
        %v709 = vld [vmem:[%s366 + $0x128] sm:$0xff]
        %v710 = vld [vmem:[%s366 + $0x130] sm:$0xff]
        %v711 = vld [vmem:[%s366 + $0x138] sm:$0xff]
        %v712 = vld [vmem:[%s366 + $0x140] sm:$0xff]
        %v713 = vld [vmem:[%s366 + $0x148] sm:$0xff]
        %v714 = vld [vmem:[%s366 + $0x150] sm:$0xff]
        %v715 = vld [vmem:[%s366 + $0x158] sm:$0xff]
        %v716 = vld [vmem:[%s366 + $0x160] sm:$0xff]
        %v717 = vld [vmem:[%s366 + $0x168] sm:$0xff]
        %v718 = vld [vmem:[%s366 + $0x170] sm:$0xff]
        %v719 = vld [vmem:[%s366 + $0x178] sm:$0xff]
        %v720 = vld [vmem:[%s366 + $0x180] sm:$0xff]
        %v721 = vld [vmem:[%s366 + $0x188] sm:$0xff]
        %v722 = vld [vmem:[%s366 + $0x190] sm:$0xff]
        %v723 = vld [vmem:[%s366 + $0x198] sm:$0xff]
        %v724 = vld [vmem:[%s366 + $0x1a0] sm:$0xff]
        %v725 = vld [vmem:[%s366 + $0x1a8] sm:$0xff]
        %v726 = vld [vmem:[%s366 + $0x1b0] sm:$0xff]
        %v727 = vld [vmem:[%s366 + $0x1b8] sm:$0xff]
        %v728 = vld [vmem:[%s366 + $0x1c0] sm:$0xff]
        %v729 = vld [vmem:[%s366 + $0x1c8] sm:$0xff]
        %v730 = vld [vmem:[%s366 + $0x1d0] sm:$0xff]
        %v731 = vld [vmem:[%s366 + $0x1d8] sm:$0xff]
        %v732 = vld [vmem:[%s366 + $0x1e0] sm:$0xff]
        %v733 = vld [vmem:[%s366 + $0x1e8] sm:$0xff]
        %v734 = vld [vmem:[%s366 + $0x1f0] sm:$0xff]
        %v735 = vld [vmem:[%s366 + $0x1f8] sm:$0xff]
        %v736 = vld [vmem:[%s3] sm:$0x3]
        %v738 = vlaneseq
        %v739 = vshrl.u32 %v738, 7
        %v740 = vsub.s32 0, %v739
        %v741 = vrot.slane %v736, %v740
        %v742 = vlaneseq
        %v743 = vshrl.u32 %v742, 7
        %v744 = vsub.s32 1, %v743
        %v745 = vrot.slane %v736, %v744
        %v748 = vmul.f32 %v514, %v741
        %v749 = vmul.f32 %v516, %v745
        %v750 = vmul.f32 %v518, %v741
        %v751 = vmul.f32 %v520, %v745
        %v752 = vmul.f32 %v524, %v741
        %v753 = vmul.f32 %v526, %v745
        %v754 = vmul.f32 %v528, %v741
        %v755 = vmul.f32 %v530, %v745
        %v756 = vmul.f32 %v534, %v741
        %v757 = vmul.f32 %v536, %v745
        %v758 = vmul.f32 %v538, %v741
        %v759 = vmul.f32 %v540, %v745
        %v760 = vmul.f32 %v544, %v741
        %v761 = vmul.f32 %v546, %v745
        %v762 = vmul.f32 %v548, %v741
        %v763 = vmul.f32 %v550, %v745
        %v764 = vmul.f32 %v554, %v741
        %v765 = vmul.f32 %v556, %v745
        %v766 = vmul.f32 %v558, %v741
        %v767 = vmul.f32 %v560, %v745
        %v768 = vmul.f32 %v564, %v741
        %v769 = vmul.f32 %v566, %v745
        %v770 = vmul.f32 %v568, %v741
        %v771 = vmul.f32 %v570, %v745
        %v772 = vmul.f32 %v574, %v741
        %v773 = vmul.f32 %v576, %v745
        %v774 = vmul.f32 %v578, %v741
        %v775 = vmul.f32 %v580, %v745
        %v776 = vmul.f32 %v584, %v741
        %v777 = vmul.f32 %v586, %v745
        %v778 = vmul.f32 %v588, %v741
        %v779 = vmul.f32 %v590, %v745
        %v780 = vmul.f32 %v594, %v741
        %v781 = vmul.f32 %v596, %v745
        %v782 = vmul.f32 %v598, %v741
        %v783 = vmul.f32 %v600, %v745
        %v784 = vmul.f32 %v604, %v741
        %v785 = vmul.f32 %v606, %v745
        %v786 = vmul.f32 %v608, %v741
        %v787 = vmul.f32 %v610, %v745
        %v788 = vmul.f32 %v614, %v741
        %v789 = vmul.f32 %v616, %v745
        %v790 = vmul.f32 %v618, %v741
        %v791 = vmul.f32 %v620, %v745
        %v792 = vmul.f32 %v624, %v741
        %v793 = vmul.f32 %v626, %v745
        %v794 = vmul.f32 %v628, %v741
        %v795 = vmul.f32 %v630, %v745
        %v796 = vmul.f32 %v634, %v741
        %v797 = vmul.f32 %v636, %v745
        %v798 = vmul.f32 %v638, %v741
        %v799 = vmul.f32 %v640, %v745
        %v800 = vmul.f32 %v644, %v741
        %v801 = vmul.f32 %v646, %v745
        %v802 = vmul.f32 %v648, %v741
        %v803 = vmul.f32 %v650, %v745
        %v804 = vmul.f32 %v654, %v741
        %v805 = vmul.f32 %v656, %v745
        %v806 = vmul.f32 %v658, %v741
        %v807 = vmul.f32 %v660, %v745
        %v808 = vmul.f32 %v664, %v741
        %v809 = vmul.f32 %v666, %v745
        %v810 = vmul.f32 %v668, %v741
        %v811 = vmul.f32 %v670, %v745
        %v812 = vadd.f32 %v672, %v748
        %v813 = vadd.f32 %v673, %v749
        %v814 = vadd.f32 %v674, %v750
        %v815 = vadd.f32 %v675, %v751
        %v816 = vadd.f32 %v676, %v752
        %v817 = vadd.f32 %v677, %v753
        %v818 = vadd.f32 %v678, %v754
        %v819 = vadd.f32 %v679, %v755
        %v820 = vadd.f32 %v680, %v756
        %v821 = vadd.f32 %v681, %v757
        %v822 = vadd.f32 %v682, %v758
        %v823 = vadd.f32 %v683, %v759
        %v824 = vadd.f32 %v684, %v760
        %v825 = vadd.f32 %v685, %v761
        %v826 = vadd.f32 %v686, %v762
        %v827 = vadd.f32 %v687, %v763
        %v828 = vadd.f32 %v688, %v764
        %v829 = vadd.f32 %v689, %v765
        %v830 = vadd.f32 %v690, %v766
        %v831 = vadd.f32 %v691, %v767
        %v832 = vadd.f32 %v692, %v768
        %v833 = vadd.f32 %v693, %v769
        %v834 = vadd.f32 %v694, %v770
        %v835 = vadd.f32 %v695, %v771
        %v836 = vadd.f32 %v696, %v772
        %v837 = vadd.f32 %v697, %v773
        %v838 = vadd.f32 %v698, %v774
        %v839 = vadd.f32 %v699, %v775
        %v840 = vadd.f32 %v700, %v776
        %v841 = vadd.f32 %v701, %v777
        %v842 = vadd.f32 %v702, %v778
        %v843 = vadd.f32 %v703, %v779
        %v844 = vadd.f32 %v704, %v780
        %v845 = vadd.f32 %v705, %v781
        %v846 = vadd.f32 %v706, %v782
        %v847 = vadd.f32 %v707, %v783
        %v848 = vadd.f32 %v708, %v784
        %v849 = vadd.f32 %v709, %v785
        %v850 = vadd.f32 %v710, %v786
        %v851 = vadd.f32 %v711, %v787
        %v852 = vadd.f32 %v712, %v788
        %v853 = vadd.f32 %v713, %v789
        %v854 = vadd.f32 %v714, %v790
        %v855 = vadd.f32 %v715, %v791
        %v856 = vadd.f32 %v716, %v792
        %v857 = vadd.f32 %v717, %v793
        %v858 = vadd.f32 %v718, %v794
        %v859 = vadd.f32 %v719, %v795
        %v860 = vadd.f32 %v720, %v796
        %v861 = vadd.f32 %v721, %v797
        %v862 = vadd.f32 %v722, %v798
        %v863 = vadd.f32 %v723, %v799
        %v864 = vadd.f32 %v724, %v800
        %v865 = vadd.f32 %v725, %v801
        %v866 = vadd.f32 %v726, %v802
        %v867 = vadd.f32 %v727, %v803
        %v868 = vadd.f32 %v728, %v804
        %v869 = vadd.f32 %v729, %v805
        %v870 = vadd.f32 %v730, %v806
        %v871 = vadd.f32 %v731, %v807
        %v872 = vadd.f32 %v732, %v808
        %v873 = vadd.f32 %v733, %v809
        %v874 = vadd.f32 %v734, %v810
        %v875 = vadd.f32 %v735, %v811
        %v876 = vld [vmem:[%s372] sm:$0xff]
        %v877 = vld [vmem:[%s372 + $0x8] sm:$0xff]
        %v878 = vld [vmem:[%s372 + $0x10] sm:$0xff]
        %v879 = vld [vmem:[%s372 + $0x18] sm:$0xff]
        %v880 = vld [vmem:[%s372 + $0x20] sm:$0xff]
        %v881 = vld [vmem:[%s372 + $0x28] sm:$0xff]
        %v882 = vld [vmem:[%s372 + $0x30] sm:$0xff]
        %v883 = vld [vmem:[%s372 + $0x38] sm:$0xff]
        %v884 = vld [vmem:[%s372 + $0x40] sm:$0xff]
        %v885 = vld [vmem:[%s372 + $0x48] sm:$0xff]
        %v886 = vld [vmem:[%s372 + $0x50] sm:$0xff]
        %v887 = vld [vmem:[%s372 + $0x58] sm:$0xff]
        %v888 = vld [vmem:[%s372 + $0x60] sm:$0xff]
        %v889 = vld [vmem:[%s372 + $0x68] sm:$0xff]
        %v890 = vld [vmem:[%s372 + $0x70] sm:$0xff]
        %v891 = vld [vmem:[%s372 + $0x78] sm:$0xff]
        %v892 = vld [vmem:[%s372 + $0x80] sm:$0xff]
        %v893 = vld [vmem:[%s372 + $0x88] sm:$0xff]
        %v894 = vld [vmem:[%s372 + $0x90] sm:$0xff]
        %v895 = vld [vmem:[%s372 + $0x98] sm:$0xff]
        %v896 = vld [vmem:[%s372 + $0xa0] sm:$0xff]
        %v897 = vld [vmem:[%s372 + $0xa8] sm:$0xff]
        %v898 = vld [vmem:[%s372 + $0xb0] sm:$0xff]
        %v899 = vld [vmem:[%s372 + $0xb8] sm:$0xff]
        %v900 = vld [vmem:[%s372 + $0xc0] sm:$0xff]
        %v901 = vld [vmem:[%s372 + $0xc8] sm:$0xff]
        %v902 = vld [vmem:[%s372 + $0xd0] sm:$0xff]
        %v903 = vld [vmem:[%s372 + $0xd8] sm:$0xff]
        %v904 = vld [vmem:[%s372 + $0xe0] sm:$0xff]
        %v905 = vld [vmem:[%s372 + $0xe8] sm:$0xff]
        %v906 = vld [vmem:[%s372 + $0xf0] sm:$0xff]
        %v907 = vld [vmem:[%s372 + $0xf8] sm:$0xff]
        %v908 = vsub.f32 1.0, %v876
        %v909 = vsub.f32 1.0, %v877
        %v910 = vsub.f32 1.0, %v878
        %v911 = vsub.f32 1.0, %v879
        %v912 = vsub.f32 1.0, %v880
        %v913 = vsub.f32 1.0, %v881
        %v914 = vsub.f32 1.0, %v882
        %v915 = vsub.f32 1.0, %v883
        %v916 = vsub.f32 1.0, %v884
        %v917 = vsub.f32 1.0, %v885
        %v918 = vsub.f32 1.0, %v886
        %v919 = vsub.f32 1.0, %v887
        %v920 = vsub.f32 1.0, %v888
        %v921 = vsub.f32 1.0, %v889
        %v922 = vsub.f32 1.0, %v890
        %v923 = vsub.f32 1.0, %v891
        %v924 = vsub.f32 1.0, %v892
        %v925 = vsub.f32 1.0, %v893
        %v926 = vsub.f32 1.0, %v894
        %v927 = vsub.f32 1.0, %v895
        %v928 = vsub.f32 1.0, %v896
        %v929 = vsub.f32 1.0, %v897
        %v930 = vsub.f32 1.0, %v898
        %v931 = vsub.f32 1.0, %v899
        %v932 = vsub.f32 1.0, %v900
        %v933 = vsub.f32 1.0, %v901
        %v934 = vsub.f32 1.0, %v902
        %v935 = vsub.f32 1.0, %v903
        %v936 = vsub.f32 1.0, %v904
        %v937 = vsub.f32 1.0, %v905
        %v938 = vsub.f32 1.0, %v906
        %v939 = vsub.f32 1.0, %v907
        %941 = vset.pattern.permute.xlu0 0
        %942 = vperm.xlu0 %941, %v908
        %v943 = vpop.permute.xlu0 %942
        %946 = vset.pattern.permute.xlu0 0
        %947 = vperm.xlu0 %946, %v909
        %v948 = vpop.permute.xlu0 %947
        %951 = vset.pattern.permute.xlu0 0
        %952 = vperm.xlu0 %951, %v910
        %v953 = vpop.permute.xlu0 %952
        %956 = vset.pattern.permute.xlu0 0
        %957 = vperm.xlu0 %956, %v911
        %v958 = vpop.permute.xlu0 %957
        %961 = vset.pattern.permute.xlu0 0
        %962 = vperm.xlu0 %961, %v912
        %v963 = vpop.permute.xlu0 %962
        %966 = vset.pattern.permute.xlu0 0
        %967 = vperm.xlu0 %966, %v913
        %v968 = vpop.permute.xlu0 %967
        %971 = vset.pattern.permute.xlu0 0
        %972 = vperm.xlu0 %971, %v914
        %v973 = vpop.permute.xlu0 %972
        %976 = vset.pattern.permute.xlu0 0
        %977 = vperm.xlu0 %976, %v915
        %v978 = vpop.permute.xlu0 %977
        %981 = vset.pattern.permute.xlu0 0
        %982 = vperm.xlu0 %981, %v916
        %v983 = vpop.permute.xlu0 %982
        %986 = vset.pattern.permute.xlu0 0
        %987 = vperm.xlu0 %986, %v917
        %v988 = vpop.permute.xlu0 %987
        %991 = vset.pattern.permute.xlu0 0
        %992 = vperm.xlu0 %991, %v918
        %v993 = vpop.permute.xlu0 %992
        %996 = vset.pattern.permute.xlu0 0
        %997 = vperm.xlu0 %996, %v919
        %v998 = vpop.permute.xlu0 %997
        %1001 = vset.pattern.permute.xlu0 0
        %1002 = vperm.xlu0 %1001, %v920
        %v1003 = vpop.permute.xlu0 %1002
        %1006 = vset.pattern.permute.xlu0 0
        %1007 = vperm.xlu0 %1006, %v921
        %v1008 = vpop.permute.xlu0 %1007
        %1011 = vset.pattern.permute.xlu0 0
        %1012 = vperm.xlu0 %1011, %v922
        %v1013 = vpop.permute.xlu0 %1012
        %1016 = vset.pattern.permute.xlu0 0
        %1017 = vperm.xlu0 %1016, %v923
        %v1018 = vpop.permute.xlu0 %1017
        %1021 = vset.pattern.permute.xlu0 0
        %1022 = vperm.xlu0 %1021, %v924
        %v1023 = vpop.permute.xlu0 %1022
        %1026 = vset.pattern.permute.xlu0 0
        %1027 = vperm.xlu0 %1026, %v925
        %v1028 = vpop.permute.xlu0 %1027
        %1031 = vset.pattern.permute.xlu0 0
        %1032 = vperm.xlu0 %1031, %v926
        %v1033 = vpop.permute.xlu0 %1032
        %1036 = vset.pattern.permute.xlu0 0
        %1037 = vperm.xlu0 %1036, %v927
        %v1038 = vpop.permute.xlu0 %1037
        %1041 = vset.pattern.permute.xlu0 0
        %1042 = vperm.xlu0 %1041, %v928
        %v1043 = vpop.permute.xlu0 %1042
        %1046 = vset.pattern.permute.xlu0 0
        %1047 = vperm.xlu0 %1046, %v929
        %v1048 = vpop.permute.xlu0 %1047
        %1051 = vset.pattern.permute.xlu0 0
        %1052 = vperm.xlu0 %1051, %v930
        %v1053 = vpop.permute.xlu0 %1052
        %1056 = vset.pattern.permute.xlu0 0
        %1057 = vperm.xlu0 %1056, %v931
        %v1058 = vpop.permute.xlu0 %1057
        %1061 = vset.pattern.permute.xlu0 0
        %1062 = vperm.xlu0 %1061, %v932
        %v1063 = vpop.permute.xlu0 %1062
        %1066 = vset.pattern.permute.xlu0 0
        %1067 = vperm.xlu0 %1066, %v933
        %v1068 = vpop.permute.xlu0 %1067
        %1071 = vset.pattern.permute.xlu0 0
        %1072 = vperm.xlu0 %1071, %v934
        %v1073 = vpop.permute.xlu0 %1072
        %1076 = vset.pattern.permute.xlu0 0
        %1077 = vperm.xlu0 %1076, %v935
        %v1078 = vpop.permute.xlu0 %1077
        %1081 = vset.pattern.permute.xlu0 0
        %1082 = vperm.xlu0 %1081, %v936
        %v1083 = vpop.permute.xlu0 %1082
        %1086 = vset.pattern.permute.xlu0 0
        %1087 = vperm.xlu0 %1086, %v937
        %v1088 = vpop.permute.xlu0 %1087
        %1091 = vset.pattern.permute.xlu0 0
        %1092 = vperm.xlu0 %1091, %v938
        %v1093 = vpop.permute.xlu0 %1092
        %1096 = vset.pattern.permute.xlu0 0
        %1097 = vperm.xlu0 %1096, %v939
        %v1098 = vpop.permute.xlu0 %1097
        %v1100 = vmul.f32 %v812, %v943
        %v1101 = vmul.f32 %v813, %v943
        %v1102 = vmul.f32 %v814, %v948
        %v1103 = vmul.f32 %v815, %v948
        %v1104 = vmul.f32 %v816, %v953
        %v1105 = vmul.f32 %v817, %v953
        %v1106 = vmul.f32 %v818, %v958
        %v1107 = vmul.f32 %v819, %v958
        %v1108 = vmul.f32 %v820, %v963
        %v1109 = vmul.f32 %v821, %v963
        %v1110 = vmul.f32 %v822, %v968
        %v1111 = vmul.f32 %v823, %v968
        %v1112 = vmul.f32 %v824, %v973
        %v1113 = vmul.f32 %v825, %v973
        %v1114 = vmul.f32 %v826, %v978
        %v1115 = vmul.f32 %v827, %v978
        %v1116 = vmul.f32 %v828, %v983
        %v1117 = vmul.f32 %v829, %v983
        %v1118 = vmul.f32 %v830, %v988
        %v1119 = vmul.f32 %v831, %v988
        %v1120 = vmul.f32 %v832, %v993
        %v1121 = vmul.f32 %v833, %v993
        %v1122 = vmul.f32 %v834, %v998
        %v1123 = vmul.f32 %v835, %v998
        %v1124 = vmul.f32 %v836, %v1003
        %v1125 = vmul.f32 %v837, %v1003
        %v1126 = vmul.f32 %v838, %v1008
        %v1127 = vmul.f32 %v839, %v1008
        %v1128 = vmul.f32 %v840, %v1013
        %v1129 = vmul.f32 %v841, %v1013
        %v1130 = vmul.f32 %v842, %v1018
        %v1131 = vmul.f32 %v843, %v1018
        %v1132 = vmul.f32 %v844, %v1023
        %v1133 = vmul.f32 %v845, %v1023
        %v1134 = vmul.f32 %v846, %v1028
        %v1135 = vmul.f32 %v847, %v1028
        %v1136 = vmul.f32 %v848, %v1033
        %v1137 = vmul.f32 %v849, %v1033
        %v1138 = vmul.f32 %v850, %v1038
        %v1139 = vmul.f32 %v851, %v1038
        %v1140 = vmul.f32 %v852, %v1043
        %v1141 = vmul.f32 %v853, %v1043
        %v1142 = vmul.f32 %v854, %v1048
        %v1143 = vmul.f32 %v855, %v1048
        %v1144 = vmul.f32 %v856, %v1053
        %v1145 = vmul.f32 %v857, %v1053
        %v1146 = vmul.f32 %v858, %v1058
        %v1147 = vmul.f32 %v859, %v1058
        %v1148 = vmul.f32 %v860, %v1063
        %v1149 = vmul.f32 %v861, %v1063
        %v1150 = vmul.f32 %v862, %v1068
        %v1151 = vmul.f32 %v863, %v1068
        %v1152 = vmul.f32 %v864, %v1073
        %v1153 = vmul.f32 %v865, %v1073
        %v1154 = vmul.f32 %v866, %v1078
        %v1155 = vmul.f32 %v867, %v1078
        %v1156 = vmul.f32 %v868, %v1083
        %v1157 = vmul.f32 %v869, %v1083
        %v1158 = vmul.f32 %v870, %v1088
        %v1159 = vmul.f32 %v871, %v1088
        %v1160 = vmul.f32 %v872, %v1093
        %v1161 = vmul.f32 %v873, %v1093
        %v1162 = vmul.f32 %v874, %v1098
        %v1163 = vmul.f32 %v875, %v1098
        %v1164 = vmul.f32 %v1100, %v1100
        %v1165 = vmul.f32 %v1101, %v1101
        %v1166 = vmul.f32 %v1102, %v1102
        %v1167 = vmul.f32 %v1103, %v1103
        %v1168 = vmul.f32 %v1104, %v1104
        %v1169 = vmul.f32 %v1105, %v1105
        %v1170 = vmul.f32 %v1106, %v1106
        %v1171 = vmul.f32 %v1107, %v1107
        %v1172 = vmul.f32 %v1108, %v1108
        %v1173 = vmul.f32 %v1109, %v1109
        %v1174 = vmul.f32 %v1110, %v1110
        %v1175 = vmul.f32 %v1111, %v1111
        %v1176 = vmul.f32 %v1112, %v1112
        %v1177 = vmul.f32 %v1113, %v1113
        %v1178 = vmul.f32 %v1114, %v1114
        %v1179 = vmul.f32 %v1115, %v1115
        %v1180 = vmul.f32 %v1116, %v1116
        %v1181 = vmul.f32 %v1117, %v1117
        %v1182 = vmul.f32 %v1118, %v1118
        %v1183 = vmul.f32 %v1119, %v1119
        %v1184 = vmul.f32 %v1120, %v1120
        %v1185 = vmul.f32 %v1121, %v1121
        %v1186 = vmul.f32 %v1122, %v1122
        %v1187 = vmul.f32 %v1123, %v1123
        %v1188 = vmul.f32 %v1124, %v1124
        %v1189 = vmul.f32 %v1125, %v1125
        %v1190 = vmul.f32 %v1126, %v1126
        %v1191 = vmul.f32 %v1127, %v1127
        %v1192 = vmul.f32 %v1128, %v1128
        %v1193 = vmul.f32 %v1129, %v1129
        %v1194 = vmul.f32 %v1130, %v1130
        %v1195 = vmul.f32 %v1131, %v1131
        %v1196 = vmul.f32 %v1132, %v1132
        %v1197 = vmul.f32 %v1133, %v1133
        %v1198 = vmul.f32 %v1134, %v1134
        %v1199 = vmul.f32 %v1135, %v1135
        %v1200 = vmul.f32 %v1136, %v1136
        %v1201 = vmul.f32 %v1137, %v1137
        %v1202 = vmul.f32 %v1138, %v1138
        %v1203 = vmul.f32 %v1139, %v1139
        %v1204 = vmul.f32 %v1140, %v1140
        %v1205 = vmul.f32 %v1141, %v1141
        %v1206 = vmul.f32 %v1142, %v1142
        %v1207 = vmul.f32 %v1143, %v1143
        %v1208 = vmul.f32 %v1144, %v1144
        %v1209 = vmul.f32 %v1145, %v1145
        %v1210 = vmul.f32 %v1146, %v1146
        %v1211 = vmul.f32 %v1147, %v1147
        %v1212 = vmul.f32 %v1148, %v1148
        %v1213 = vmul.f32 %v1149, %v1149
        %v1214 = vmul.f32 %v1150, %v1150
        %v1215 = vmul.f32 %v1151, %v1151
        %v1216 = vmul.f32 %v1152, %v1152
        %v1217 = vmul.f32 %v1153, %v1153
        %v1218 = vmul.f32 %v1154, %v1154
        %v1219 = vmul.f32 %v1155, %v1155
        %v1220 = vmul.f32 %v1156, %v1156
        %v1221 = vmul.f32 %v1157, %v1157
        %v1222 = vmul.f32 %v1158, %v1158
        %v1223 = vmul.f32 %v1159, %v1159
        %v1224 = vmul.f32 %v1160, %v1160
        %v1225 = vmul.f32 %v1161, %v1161
        %v1226 = vmul.f32 %v1162, %v1162
        %v1227 = vmul.f32 %v1163, %v1163
        %v1228 = vadd.f32 %v1164, %v1165
        %1229 = vadd.xlane.f32.xlu0 %v1228
        %v1230 = vpop.xlane.xlu0 %1229
        %v1231 = vadd.f32 %v1166, %v1167
        %1232 = vadd.xlane.f32.xlu0 %v1231
        %v1233 = vpop.xlane.xlu0 %1232
        %v1234 = vadd.f32 %v1168, %v1169
        %1235 = vadd.xlane.f32.xlu0 %v1234
        %v1236 = vpop.xlane.xlu0 %1235
        %v1237 = vadd.f32 %v1170, %v1171
        %1238 = vadd.xlane.f32.xlu0 %v1237
        %v1239 = vpop.xlane.xlu0 %1238
        %v1240 = vadd.f32 %v1172, %v1173
        %1241 = vadd.xlane.f32.xlu0 %v1240
        %v1242 = vpop.xlane.xlu0 %1241
        %v1243 = vadd.f32 %v1174, %v1175
        %1244 = vadd.xlane.f32.xlu0 %v1243
        %v1245 = vpop.xlane.xlu0 %1244
        %v1246 = vadd.f32 %v1176, %v1177
        %1247 = vadd.xlane.f32.xlu0 %v1246
        %v1248 = vpop.xlane.xlu0 %1247
        %v1249 = vadd.f32 %v1178, %v1179
        %1250 = vadd.xlane.f32.xlu0 %v1249
        %v1251 = vpop.xlane.xlu0 %1250
        %v1252 = vadd.f32 %v1180, %v1181
        %1253 = vadd.xlane.f32.xlu0 %v1252
        %v1254 = vpop.xlane.xlu0 %1253
        %v1255 = vadd.f32 %v1182, %v1183
        %1256 = vadd.xlane.f32.xlu0 %v1255
        %v1257 = vpop.xlane.xlu0 %1256
        %v1258 = vadd.f32 %v1184, %v1185
        %1259 = vadd.xlane.f32.xlu0 %v1258
        %v1260 = vpop.xlane.xlu0 %1259
        %v1261 = vadd.f32 %v1186, %v1187
        %1262 = vadd.xlane.f32.xlu0 %v1261
        %v1263 = vpop.xlane.xlu0 %1262
        %v1264 = vadd.f32 %v1188, %v1189
        %1265 = vadd.xlane.f32.xlu0 %v1264
        %v1266 = vpop.xlane.xlu0 %1265
        %v1267 = vadd.f32 %v1190, %v1191
        %1268 = vadd.xlane.f32.xlu0 %v1267
        %v1269 = vpop.xlane.xlu0 %1268
        %v1270 = vadd.f32 %v1192, %v1193
        %1271 = vadd.xlane.f32.xlu0 %v1270
        %v1272 = vpop.xlane.xlu0 %1271
        %v1273 = vadd.f32 %v1194, %v1195
        %1274 = vadd.xlane.f32.xlu0 %v1273
        %v1275 = vpop.xlane.xlu0 %1274
        %v1276 = vadd.f32 %v1196, %v1197
        %1277 = vadd.xlane.f32.xlu0 %v1276
        %v1278 = vpop.xlane.xlu0 %1277
        %v1279 = vadd.f32 %v1198, %v1199
        %1280 = vadd.xlane.f32.xlu0 %v1279
        %v1281 = vpop.xlane.xlu0 %1280
        %v1282 = vadd.f32 %v1200, %v1201
        %1283 = vadd.xlane.f32.xlu0 %v1282
        %v1284 = vpop.xlane.xlu0 %1283
        %v1285 = vadd.f32 %v1202, %v1203
        %1286 = vadd.xlane.f32.xlu0 %v1285
        %v1287 = vpop.xlane.xlu0 %1286
        %v1288 = vadd.f32 %v1204, %v1205
        %1289 = vadd.xlane.f32.xlu0 %v1288
        %v1290 = vpop.xlane.xlu0 %1289
        %v1291 = vadd.f32 %v1206, %v1207
        %1292 = vadd.xlane.f32.xlu0 %v1291
        %v1293 = vpop.xlane.xlu0 %1292
        %v1294 = vadd.f32 %v1208, %v1209
        %1295 = vadd.xlane.f32.xlu0 %v1294
        %v1296 = vpop.xlane.xlu0 %1295
        %v1297 = vadd.f32 %v1210, %v1211
        %1298 = vadd.xlane.f32.xlu0 %v1297
        %v1299 = vpop.xlane.xlu0 %1298
        %v1300 = vadd.f32 %v1212, %v1213
        %1301 = vadd.xlane.f32.xlu0 %v1300
        %v1302 = vpop.xlane.xlu0 %1301
        %v1303 = vadd.f32 %v1214, %v1215
        %1304 = vadd.xlane.f32.xlu0 %v1303
        %v1305 = vpop.xlane.xlu0 %1304
        %v1306 = vadd.f32 %v1216, %v1217
        %1307 = vadd.xlane.f32.xlu0 %v1306
        %v1308 = vpop.xlane.xlu0 %1307
        %v1309 = vadd.f32 %v1218, %v1219
        %1310 = vadd.xlane.f32.xlu0 %v1309
        %v1311 = vpop.xlane.xlu0 %1310
        %v1312 = vadd.f32 %v1220, %v1221
        %1313 = vadd.xlane.f32.xlu0 %v1312
        %v1314 = vpop.xlane.xlu0 %1313
        %v1315 = vadd.f32 %v1222, %v1223
        %1316 = vadd.xlane.f32.xlu0 %v1315
        %v1317 = vpop.xlane.xlu0 %1316
        %v1318 = vadd.f32 %v1224, %v1225
        %1319 = vadd.xlane.f32.xlu0 %v1318
        %v1320 = vpop.xlane.xlu0 %1319
        %v1321 = vadd.f32 %v1226, %v1227
        %1322 = vadd.xlane.f32.xlu0 %v1321
        %v1323 = vpop.xlane.xlu0 %1322
        %v1324 = vmax.f32 %v1230, 1e-24
        %v1325 = vmax.f32 %v1233, 1e-24
        %v1326 = vmax.f32 %v1236, 1e-24
        %v1327 = vmax.f32 %v1239, 1e-24
        %v1328 = vmax.f32 %v1242, 1e-24
        %v1329 = vmax.f32 %v1245, 1e-24
        %v1330 = vmax.f32 %v1248, 1e-24
        %v1331 = vmax.f32 %v1251, 1e-24
        %v1332 = vmax.f32 %v1254, 1e-24
        %v1333 = vmax.f32 %v1257, 1e-24
        %v1334 = vmax.f32 %v1260, 1e-24
        %v1335 = vmax.f32 %v1263, 1e-24
        %v1336 = vmax.f32 %v1266, 1e-24
        %v1337 = vmax.f32 %v1269, 1e-24
        %v1338 = vmax.f32 %v1272, 1e-24
        %v1339 = vmax.f32 %v1275, 1e-24
        %v1340 = vmax.f32 %v1278, 1e-24
        %v1341 = vmax.f32 %v1281, 1e-24
        %v1342 = vmax.f32 %v1284, 1e-24
        %v1343 = vmax.f32 %v1287, 1e-24
        %v1344 = vmax.f32 %v1290, 1e-24
        %v1345 = vmax.f32 %v1293, 1e-24
        %v1346 = vmax.f32 %v1296, 1e-24
        %v1347 = vmax.f32 %v1299, 1e-24
        %v1348 = vmax.f32 %v1302, 1e-24
        %v1349 = vmax.f32 %v1305, 1e-24
        %v1350 = vmax.f32 %v1308, 1e-24
        %v1351 = vmax.f32 %v1311, 1e-24
        %v1352 = vmax.f32 %v1314, 1e-24
        %v1353 = vmax.f32 %v1317, 1e-24
        %v1354 = vmax.f32 %v1320, 1e-24
        %v1355 = vmax.f32 %v1323, 1e-24
        %v1356 = vrsqrt.pop %v1324
        %v1357 = vrsqrt.pop %v1325
        %v1358 = vrsqrt.pop %v1326
        %v1359 = vrsqrt.pop %v1327
        %v1360 = vrsqrt.pop %v1328
        %v1361 = vrsqrt.pop %v1329
        %v1362 = vrsqrt.pop %v1330
        %v1363 = vrsqrt.pop %v1331
        %v1364 = vrsqrt.pop %v1332
        %v1365 = vrsqrt.pop %v1333
        %v1366 = vrsqrt.pop %v1334
        %v1367 = vrsqrt.pop %v1335
        %v1368 = vrsqrt.pop %v1336
        %v1369 = vrsqrt.pop %v1337
        %v1370 = vrsqrt.pop %v1338
        %v1371 = vrsqrt.pop %v1339
        %v1372 = vrsqrt.pop %v1340
        %v1373 = vrsqrt.pop %v1341
        %v1374 = vrsqrt.pop %v1342
        %v1375 = vrsqrt.pop %v1343
        %v1376 = vrsqrt.pop %v1344
        %v1377 = vrsqrt.pop %v1345
        %v1378 = vrsqrt.pop %v1346
        %v1379 = vrsqrt.pop %v1347
        %v1380 = vrsqrt.pop %v1348
        %v1381 = vrsqrt.pop %v1349
        %v1382 = vrsqrt.pop %v1350
        %v1383 = vrsqrt.pop %v1351
        %v1384 = vrsqrt.pop %v1352
        %v1385 = vrsqrt.pop %v1353
        %v1386 = vrsqrt.pop %v1354
        %v1387 = vrsqrt.pop %v1355
        %v1388 = vmul.f32 %v1100, %v1356
        %v1389 = vmul.f32 %v1101, %v1356
        %v1390 = vmul.f32 %v1102, %v1357
        %v1391 = vmul.f32 %v1103, %v1357
        %v1392 = vmul.f32 %v1104, %v1358
        %v1393 = vmul.f32 %v1105, %v1358
        %v1394 = vmul.f32 %v1106, %v1359
        %v1395 = vmul.f32 %v1107, %v1359
        %v1396 = vmul.f32 %v1108, %v1360
        %v1397 = vmul.f32 %v1109, %v1360
        %v1398 = vmul.f32 %v1110, %v1361
        %v1399 = vmul.f32 %v1111, %v1361
        %v1400 = vmul.f32 %v1112, %v1362
        %v1401 = vmul.f32 %v1113, %v1362
        %v1402 = vmul.f32 %v1114, %v1363
        %v1403 = vmul.f32 %v1115, %v1363
        %v1404 = vmul.f32 %v1116, %v1364
        %v1405 = vmul.f32 %v1117, %v1364
        %v1406 = vmul.f32 %v1118, %v1365
        %v1407 = vmul.f32 %v1119, %v1365
        %v1408 = vmul.f32 %v1120, %v1366
        %v1409 = vmul.f32 %v1121, %v1366
        %v1410 = vmul.f32 %v1122, %v1367
        %v1411 = vmul.f32 %v1123, %v1367
        %v1412 = vmul.f32 %v1124, %v1368
        %v1413 = vmul.f32 %v1125, %v1368
        %v1414 = vmul.f32 %v1126, %v1369
        %v1415 = vmul.f32 %v1127, %v1369
        %v1416 = vmul.f32 %v1128, %v1370
        %v1417 = vmul.f32 %v1129, %v1370
        %v1418 = vmul.f32 %v1130, %v1371
        %v1419 = vmul.f32 %v1131, %v1371
        %v1420 = vmul.f32 %v1132, %v1372
        %v1421 = vmul.f32 %v1133, %v1372
        %v1422 = vmul.f32 %v1134, %v1373
        %v1423 = vmul.f32 %v1135, %v1373
        %v1424 = vmul.f32 %v1136, %v1374
        %v1425 = vmul.f32 %v1137, %v1374
        %v1426 = vmul.f32 %v1138, %v1375
        %v1427 = vmul.f32 %v1139, %v1375
        %v1428 = vmul.f32 %v1140, %v1376
        %v1429 = vmul.f32 %v1141, %v1376
        %v1430 = vmul.f32 %v1142, %v1377
        %v1431 = vmul.f32 %v1143, %v1377
        %v1432 = vmul.f32 %v1144, %v1378
        %v1433 = vmul.f32 %v1145, %v1378
        %v1434 = vmul.f32 %v1146, %v1379
        %v1435 = vmul.f32 %v1147, %v1379
        %v1436 = vmul.f32 %v1148, %v1380
        %v1437 = vmul.f32 %v1149, %v1380
        %v1438 = vmul.f32 %v1150, %v1381
        %v1439 = vmul.f32 %v1151, %v1381
        %v1440 = vmul.f32 %v1152, %v1382
        %v1441 = vmul.f32 %v1153, %v1382
        %v1442 = vmul.f32 %v1154, %v1383
        %v1443 = vmul.f32 %v1155, %v1383
        %v1444 = vmul.f32 %v1156, %v1384
        %v1445 = vmul.f32 %v1157, %v1384
        %v1446 = vmul.f32 %v1158, %v1385
        %v1447 = vmul.f32 %v1159, %v1385
        %v1448 = vmul.f32 %v1160, %v1386
        %v1449 = vmul.f32 %v1161, %v1386
        %v1450 = vmul.f32 %v1162, %v1387
        %v1451 = vmul.f32 %v1163, %v1387
        %1452 = vst [vmem:[%s334] sm:$0xff] %v1388
        %1453 = vst [vmem:[%s334 + $0x8] sm:$0xff] %v1389
        %1454 = vst [vmem:[%s334 + $0x10] sm:$0xff] %v1390
        %1455 = vst [vmem:[%s334 + $0x18] sm:$0xff] %v1391
        %1456 = vst [vmem:[%s334 + $0x20] sm:$0xff] %v1392
        %1457 = vst [vmem:[%s334 + $0x28] sm:$0xff] %v1393
        %1458 = vst [vmem:[%s334 + $0x30] sm:$0xff] %v1394
        %1459 = vst [vmem:[%s334 + $0x38] sm:$0xff] %v1395
        %1460 = vst [vmem:[%s334 + $0x40] sm:$0xff] %v1396
        %1461 = vst [vmem:[%s334 + $0x48] sm:$0xff] %v1397
        %1462 = vst [vmem:[%s334 + $0x50] sm:$0xff] %v1398
        %1463 = vst [vmem:[%s334 + $0x58] sm:$0xff] %v1399
        %1464 = vst [vmem:[%s334 + $0x60] sm:$0xff] %v1400
        %1465 = vst [vmem:[%s334 + $0x68] sm:$0xff] %v1401
        %1466 = vst [vmem:[%s334 + $0x70] sm:$0xff] %v1402
        %1467 = vst [vmem:[%s334 + $0x78] sm:$0xff] %v1403
        %1468 = vst [vmem:[%s334 + $0x80] sm:$0xff] %v1404
        %1469 = vst [vmem:[%s334 + $0x88] sm:$0xff] %v1405
        %1470 = vst [vmem:[%s334 + $0x90] sm:$0xff] %v1406
        %1471 = vst [vmem:[%s334 + $0x98] sm:$0xff] %v1407
        %1472 = vst [vmem:[%s334 + $0xa0] sm:$0xff] %v1408
        %1473 = vst [vmem:[%s334 + $0xa8] sm:$0xff] %v1409
        %1474 = vst [vmem:[%s334 + $0xb0] sm:$0xff] %v1410
        %1475 = vst [vmem:[%s334 + $0xb8] sm:$0xff] %v1411
        %1476 = vst [vmem:[%s334 + $0xc0] sm:$0xff] %v1412
        %1477 = vst [vmem:[%s334 + $0xc8] sm:$0xff] %v1413
        %1478 = vst [vmem:[%s334 + $0xd0] sm:$0xff] %v1414
        %1479 = vst [vmem:[%s334 + $0xd8] sm:$0xff] %v1415
        %1480 = vst [vmem:[%s334 + $0xe0] sm:$0xff] %v1416
        %1481 = vst [vmem:[%s334 + $0xe8] sm:$0xff] %v1417
        %1482 = vst [vmem:[%s334 + $0xf0] sm:$0xff] %v1418
        %1483 = vst [vmem:[%s334 + $0xf8] sm:$0xff] %v1419
        %1484 = vst [vmem:[%s334 + $0x100] sm:$0xff] %v1420
        %1485 = vst [vmem:[%s334 + $0x108] sm:$0xff] %v1421
        %1486 = vst [vmem:[%s334 + $0x110] sm:$0xff] %v1422
        %1487 = vst [vmem:[%s334 + $0x118] sm:$0xff] %v1423
        %1488 = vst [vmem:[%s334 + $0x120] sm:$0xff] %v1424
        %1489 = vst [vmem:[%s334 + $0x128] sm:$0xff] %v1425
        %1490 = vst [vmem:[%s334 + $0x130] sm:$0xff] %v1426
        %1491 = vst [vmem:[%s334 + $0x138] sm:$0xff] %v1427
        %1492 = vst [vmem:[%s334 + $0x140] sm:$0xff] %v1428
        %1493 = vst [vmem:[%s334 + $0x148] sm:$0xff] %v1429
        %1494 = vst [vmem:[%s334 + $0x150] sm:$0xff] %v1430
        %1495 = vst [vmem:[%s334 + $0x158] sm:$0xff] %v1431
        %1496 = vst [vmem:[%s334 + $0x160] sm:$0xff] %v1432
        %1497 = vst [vmem:[%s334 + $0x168] sm:$0xff] %v1433
        %1498 = vst [vmem:[%s334 + $0x170] sm:$0xff] %v1434
        %1499 = vst [vmem:[%s334 + $0x178] sm:$0xff] %v1435
        %1500 = vst [vmem:[%s334 + $0x180] sm:$0xff] %v1436
        %1501 = vst [vmem:[%s334 + $0x188] sm:$0xff] %v1437
        %1502 = vst [vmem:[%s334 + $0x190] sm:$0xff] %v1438
        %1503 = vst [vmem:[%s334 + $0x198] sm:$0xff] %v1439
        %1504 = vst [vmem:[%s334 + $0x1a0] sm:$0xff] %v1440
        %1505 = vst [vmem:[%s334 + $0x1a8] sm:$0xff] %v1441
        %1506 = vst [vmem:[%s334 + $0x1b0] sm:$0xff] %v1442
        %1507 = vst [vmem:[%s334 + $0x1b8] sm:$0xff] %v1443
        %1508 = vst [vmem:[%s334 + $0x1c0] sm:$0xff] %v1444
        %1509 = vst [vmem:[%s334 + $0x1c8] sm:$0xff] %v1445
        %1510 = vst [vmem:[%s334 + $0x1d0] sm:$0xff] %v1446
        %1511 = vst [vmem:[%s334 + $0x1d8] sm:$0xff] %v1447
        %1512 = vst [vmem:[%s334 + $0x1e0] sm:$0xff] %v1448
        %1513 = vst [vmem:[%s334 + $0x1e8] sm:$0xff] %v1449
        %1514 = vst [vmem:[%s334 + $0x1f0] sm:$0xff] %v1450
        %1515 = vst [vmem:[%s334 + $0x1f8] sm:$0xff] %v1451
        %v1516 = vpack.c.bf16 %v1390, %v1388
        %v1517 = vpack.c.bf16 %v1391, %v1389
        %v1518 = vpack.c.bf16 %v1394, %v1392
        %v1519 = vpack.c.bf16 %v1395, %v1393
        %v1520 = vpack.c.bf16 %v1398, %v1396
        %v1521 = vpack.c.bf16 %v1399, %v1397
        %v1522 = vpack.c.bf16 %v1402, %v1400
        %v1523 = vpack.c.bf16 %v1403, %v1401
        %v1524 = vpack.c.bf16 %v1406, %v1404
        %v1525 = vpack.c.bf16 %v1407, %v1405
        %v1526 = vpack.c.bf16 %v1410, %v1408
        %v1527 = vpack.c.bf16 %v1411, %v1409
        %v1528 = vpack.c.bf16 %v1414, %v1412
        %v1529 = vpack.c.bf16 %v1415, %v1413
        %v1530 = vpack.c.bf16 %v1418, %v1416
        %v1531 = vpack.c.bf16 %v1419, %v1417
        %v1532 = vpack.c.bf16 %v1422, %v1420
        %v1533 = vpack.c.bf16 %v1423, %v1421
        %v1534 = vpack.c.bf16 %v1426, %v1424
        %v1535 = vpack.c.bf16 %v1427, %v1425
        %v1536 = vpack.c.bf16 %v1430, %v1428
        %v1537 = vpack.c.bf16 %v1431, %v1429
        %v1538 = vpack.c.bf16 %v1434, %v1432
        %v1539 = vpack.c.bf16 %v1435, %v1433
        %v1540 = vpack.c.bf16 %v1438, %v1436
        %v1541 = vpack.c.bf16 %v1439, %v1437
        %v1542 = vpack.c.bf16 %v1442, %v1440
        %v1543 = vpack.c.bf16 %v1443, %v1441
        %v1544 = vpack.c.bf16 %v1446, %v1444
        %v1545 = vpack.c.bf16 %v1447, %v1445
        %v1546 = vpack.c.bf16 %v1450, %v1448
        %v1547 = vpack.c.bf16 %v1451, %v1449
        %v1580 = vunpack.c.l.b16 %v1516
        %v1581 = vunpack.c.l.b16 %v1517
        %v1582 = vunpack.c.h.b16 %v1516
        %v1583 = vunpack.c.h.b16 %v1517
        %v1584 = vunpack.c.l.b16 %v1518
        %v1585 = vunpack.c.l.b16 %v1519
        %v1586 = vunpack.c.h.b16 %v1518
        %v1587 = vunpack.c.h.b16 %v1519
        %v1588 = vunpack.c.l.b16 %v1520
        %v1589 = vunpack.c.l.b16 %v1521
        %v1590 = vunpack.c.h.b16 %v1520
        %v1591 = vunpack.c.h.b16 %v1521
        %v1592 = vunpack.c.l.b16 %v1522
        %v1593 = vunpack.c.l.b16 %v1523
        %v1594 = vunpack.c.h.b16 %v1522
        %v1595 = vunpack.c.h.b16 %v1523
        %v1596 = vunpack.c.l.b16 %v1524
        %v1597 = vunpack.c.l.b16 %v1525
        %v1598 = vunpack.c.h.b16 %v1524
        %v1599 = vunpack.c.h.b16 %v1525
        %v1600 = vunpack.c.l.b16 %v1526
        %v1601 = vunpack.c.l.b16 %v1527
        %v1602 = vunpack.c.h.b16 %v1526
        %v1603 = vunpack.c.h.b16 %v1527
        %v1604 = vunpack.c.l.b16 %v1528
        %v1605 = vunpack.c.l.b16 %v1529
        %v1606 = vunpack.c.h.b16 %v1528
        %v1607 = vunpack.c.h.b16 %v1529
        %v1608 = vunpack.c.l.b16 %v1530
        %v1609 = vunpack.c.l.b16 %v1531
        %v1610 = vunpack.c.h.b16 %v1530
        %v1611 = vunpack.c.h.b16 %v1531
        %v1612 = vunpack.c.l.b16 %v1532
        %v1613 = vunpack.c.l.b16 %v1533
        %v1614 = vunpack.c.h.b16 %v1532
        %v1615 = vunpack.c.h.b16 %v1533
        %v1616 = vunpack.c.l.b16 %v1534
        %v1617 = vunpack.c.l.b16 %v1535
        %v1618 = vunpack.c.h.b16 %v1534
        %v1619 = vunpack.c.h.b16 %v1535
        %v1620 = vunpack.c.l.b16 %v1536
        %v1621 = vunpack.c.l.b16 %v1537
        %v1622 = vunpack.c.h.b16 %v1536
        %v1623 = vunpack.c.h.b16 %v1537
        %v1624 = vunpack.c.l.b16 %v1538
        %v1625 = vunpack.c.l.b16 %v1539
        %v1626 = vunpack.c.h.b16 %v1538
        %v1627 = vunpack.c.h.b16 %v1539
        %v1628 = vunpack.c.l.b16 %v1540
        %v1629 = vunpack.c.l.b16 %v1541
        %v1630 = vunpack.c.h.b16 %v1540
        %v1631 = vunpack.c.h.b16 %v1541
        %v1632 = vunpack.c.l.b16 %v1542
        %v1633 = vunpack.c.l.b16 %v1543
        %v1634 = vunpack.c.h.b16 %v1542
        %v1635 = vunpack.c.h.b16 %v1543
        %v1636 = vunpack.c.l.b16 %v1544
        %v1637 = vunpack.c.l.b16 %v1545
        %v1638 = vunpack.c.h.b16 %v1544
        %v1639 = vunpack.c.h.b16 %v1545
        %v1640 = vunpack.c.l.b16 %v1546
        %v1641 = vunpack.c.l.b16 %v1547
        %v1642 = vunpack.c.h.b16 %v1546
        %v1643 = vunpack.c.h.b16 %v1547
        %v1644 = vpack.c.b16 %v1581, %v1580
        %v1645 = vpack.c.b16 %v1583, %v1582
        %v1646 = vpack.c.b16 %v1585, %v1584
        %v1647 = vpack.c.b16 %v1587, %v1586
        %v1648 = vpack.c.b16 %v1589, %v1588
        %v1649 = vpack.c.b16 %v1591, %v1590
        %v1650 = vpack.c.b16 %v1593, %v1592
        %v1651 = vpack.c.b16 %v1595, %v1594
        %v1652 = vpack.c.b16 %v1597, %v1596
        %v1653 = vpack.c.b16 %v1599, %v1598
        %v1654 = vpack.c.b16 %v1601, %v1600
        %v1655 = vpack.c.b16 %v1603, %v1602
        %v1656 = vpack.c.b16 %v1605, %v1604
        %v1657 = vpack.c.b16 %v1607, %v1606
        %v1658 = vpack.c.b16 %v1609, %v1608
        %v1659 = vpack.c.b16 %v1611, %v1610
        %v1660 = vpack.c.b16 %v1613, %v1612
        %v1661 = vpack.c.b16 %v1615, %v1614
        %v1662 = vpack.c.b16 %v1617, %v1616
        %v1663 = vpack.c.b16 %v1619, %v1618
        %v1664 = vpack.c.b16 %v1621, %v1620
        %v1665 = vpack.c.b16 %v1623, %v1622
        %v1666 = vpack.c.b16 %v1625, %v1624
        %v1667 = vpack.c.b16 %v1627, %v1626
        %v1668 = vpack.c.b16 %v1629, %v1628
        %v1669 = vpack.c.b16 %v1631, %v1630
        %v1670 = vpack.c.b16 %v1633, %v1632
        %v1671 = vpack.c.b16 %v1635, %v1634
        %v1672 = vpack.c.b16 %v1637, %v1636
        %v1673 = vpack.c.b16 %v1639, %v1638
        %v1674 = vpack.c.b16 %v1641, %v1640
        %v1675 = vpack.c.b16 %v1643, %v1642
        %1708 = vst [vmem:[%s341] sm:$0xff] %v1644
        %1709 = vst [vmem:[%s341 + $0x8] sm:$0xff] %v1645
        %1710 = vst [vmem:[%s341 + $0x10] sm:$0xff] %v1646
        %1711 = vst [vmem:[%s341 + $0x18] sm:$0xff] %v1647
        %1712 = vst [vmem:[%s341 + $0x20] sm:$0xff] %v1648
        %1713 = vst [vmem:[%s341 + $0x28] sm:$0xff] %v1649
        %1714 = vst [vmem:[%s341 + $0x30] sm:$0xff] %v1650
        %1715 = vst [vmem:[%s341 + $0x38] sm:$0xff] %v1651
        %1716 = vst [vmem:[%s341 + $0x40] sm:$0xff] %v1652
        %1717 = vst [vmem:[%s341 + $0x48] sm:$0xff] %v1653
        %1718 = vst [vmem:[%s341 + $0x50] sm:$0xff] %v1654
        %1719 = vst [vmem:[%s341 + $0x58] sm:$0xff] %v1655
        %1720 = vst [vmem:[%s341 + $0x60] sm:$0xff] %v1656
        %1721 = vst [vmem:[%s341 + $0x68] sm:$0xff] %v1657
        %1722 = vst [vmem:[%s341 + $0x70] sm:$0xff] %v1658
        %1723 = vst [vmem:[%s341 + $0x78] sm:$0xff] %v1659
        %1724 = vst [vmem:[%s341 + $0x80] sm:$0xff] %v1660
        %1725 = vst [vmem:[%s341 + $0x88] sm:$0xff] %v1661
        %1726 = vst [vmem:[%s341 + $0x90] sm:$0xff] %v1662
        %1727 = vst [vmem:[%s341 + $0x98] sm:$0xff] %v1663
        %1728 = vst [vmem:[%s341 + $0xa0] sm:$0xff] %v1664
        %1729 = vst [vmem:[%s341 + $0xa8] sm:$0xff] %v1665
        %1730 = vst [vmem:[%s341 + $0xb0] sm:$0xff] %v1666
        %1731 = vst [vmem:[%s341 + $0xb8] sm:$0xff] %v1667
        %1732 = vst [vmem:[%s341 + $0xc0] sm:$0xff] %v1668
        %1733 = vst [vmem:[%s341 + $0xc8] sm:$0xff] %v1669
        %1734 = vst [vmem:[%s341 + $0xd0] sm:$0xff] %v1670
        %1735 = vst [vmem:[%s341 + $0xd8] sm:$0xff] %v1671
        %1736 = vst [vmem:[%s341 + $0xe0] sm:$0xff] %v1672
        %1737 = vst [vmem:[%s341 + $0xe8] sm:$0xff] %v1673
        %1738 = vst [vmem:[%s341 + $0xf0] sm:$0xff] %v1674
        %1739 = vst [vmem:[%s341 + $0xf8] sm:$0xff] %v1675
        %s1740 = sand.u32 %s175, 1
        %s1741 = scalar_lea.sflag [#allocation3], %s1740
        %s1742 = sand.u32 %s175, 1
        %s1743 = smul.addr %s1742, 512
        %s1744 = scalar_lea.vmem [#allocation2], %s1743
        %s1745 = sand.u32 %s203, 1
        %s1746 = scalar_lea.sflag [#allocation5], %s1745
        %s1747 = sand.u32 %s203, 1
        %s1748 = smul.addr %s1747, 256
        %s1749 = scalar_lea.vmem [#allocation4], %s1748
        // Predicated region
        $region41: #{hebbian_layer_forward.3} parent=39 // pred_check
          %p1750 = pneg %p185
        $region42: #{hebbian_layer_forward.3} parent=39 // pred_check_branch
          %1752 = sbr.rel (%p1750) target = $region44
        $region43: #{hebbian_layer_forward.3} parent=39 // pred_region
          %s1753 = smul.u32 32, %s29
          %s1755 = ssub.s32 8192, 8192
          %1756 = vsyncadd %s1741, %s1755
          %s1757 = smul.addr %s1753, 2
          %s1758 = smul.addr %s28, 64
          %s1759 = sadd.s32 %s1757, %s1758
          %s1760 = smul.addr %s1759, 128
          %s1761 = scalar_lea.hbm %s5, %s1760
          %s1762 = sshll.u32 %s1744, 4
          %s1763 = int_to_ptr.vmem [resolvable:$true] %s1762
          %1768 = dma.vmem_to_hbm [thread:$0]  %s1763, 8192, %s1761, %s1741, 256, 256, 16
        $region44: #{hebbian_layer_forward.3} parent=39 // pred_fallthru
          _
        // Predicated region
        $region45: #{hebbian_layer_forward.3} parent=39 // pred_check
          %p1769 = pneg %p213
        $region46: #{hebbian_layer_forward.3} parent=39 // pred_check_branch
          %1771 = sbr.rel (%p1769) target = $region48
        $region47: #{hebbian_layer_forward.3} parent=39 // pred_region
          %s1772 = smul.u32 32, %s29
          %s1774 = ssub.s32 4096, 4096
          %1775 = vsyncadd %s1746, %s1774
          %s1776 = smul.addr %s1772, 2
          %s1777 = smul.addr %s28, 64
          %s1778 = sadd.s32 %s1776, %s1777
          %s1779 = smul.addr %s1778, 64
          %s1780 = scalar_lea.hbm %s6, %s1779
          %s1781 = sshll.u32 %s1749, 4
          %s1782 = int_to_ptr.vmem [resolvable:$true] %s1781
          %1787 = dma.vmem_to_hbm [thread:$0]  %s1782, 4096, %s1780, %s1746, 128, 128, 8
        $region48: #{hebbian_layer_forward.3} parent=39 // pred_fallthru
          _
      $region40: #{hebbian_layer_forward.3} parent=5 // pred_fallthru
        _
      %p1788 = scmp.le.s32.totalorder 2, %s19
      // Predicated region
      $region49: #{hebbian_layer_forward.3} parent=5 // pred_check
        %p1789 = pneg %p1788
      $region50: #{hebbian_layer_forward.3} parent=5 // pred_check_branch
        %1791 = sbr.rel (%p1789) target = $region52
      $region51: #{hebbian_layer_forward.3} parent=5 // pred_region
        %s1792 = ssub.s32 %s19, 2
        // Predicated region
        $region53: #{hebbian_layer_forward.3} parent=51 // pred_check
          %p1793 = pneg %p191
        $region54: #{hebbian_layer_forward.3} parent=51 // pred_check_branch
          %1795 = sbr.rel (%p1793) target = $region56
        $region55: #{hebbian_layer_forward.3} parent=51 // pred_region
          %s1796 = sand.u32 %s176, 1
          %s1797 = scalar_lea.sflag [#allocation3], %s1796
          %s1798 = sand.u32 %s176, 1
          %s1799 = smul.addr %s1798, 512
          %s1800 = scalar_lea.vmem [#allocation2], %s1799
          %1801 = dma.done %s1797, 8192
        $region56: #{hebbian_layer_forward.3} parent=51 // pred_fallthru
          _
        // Predicated region
        $region57: #{hebbian_layer_forward.3} parent=51 // pred_check
          %p1802 = pneg %p219
        $region58: #{hebbian_layer_forward.3} parent=51 // pred_check_branch
          %1804 = sbr.rel (%p1802) target = $region60
        $region59: #{hebbian_layer_forward.3} parent=51 // pred_region
          %s1805 = sand.u32 %s204, 1
          %s1806 = scalar_lea.sflag [#allocation5], %s1805
          %s1807 = sand.u32 %s204, 1
          %s1808 = smul.addr %s1807, 256
          %s1809 = scalar_lea.vmem [#allocation4], %s1808
          %1810 = dma.done %s1806, 4096
        $region60: #{hebbian_layer_forward.3} parent=51 // pred_fallthru
          _
      $region52: #{hebbian_layer_forward.3} parent=5 // pred_fallthru
        _
    $region6: #{hebbian_layer_forward.3} parent=1 // loop_footer
      %s23 = sadd.s32 1, %s19
    $region7: #{hebbian_layer_forward.3} parent=1 // loop_footer_branch
      %18 = sbr.rel target = $region3
    $region8: #{hebbian_layer_forward.3} parent=1 // loop_exit
      _
    %1811 = vsyncpa [#allocation3], 1
    %s1812 = scalar_lea.sflag [#allocation3], 1
    %1813 = vsyncpa %s1812, 1
    %1814 = vsyncpa [#allocation5], 1
    %s1815 = scalar_lea.sflag [#allocation5], 1
    %1816 = vsyncpa %s1815, 1

// kernel: hebbian_layer_forward.2
$region0: #{hebbian_layer_forward.2}
  #allocation0 [shape = 'u32[]', space=smem, size = 0x4, offset = 0x4, fixed_abs, tag = 'smem constant byte address 0x4 - core index']
  #allocation1 [shape = 'u32[144,128]{1,0:T(1,128)}', space=vmem, size = 0x12000, scoped, tag = 'internal scratch']
  %s0 = inlined_call_operand.vmem [shape: f32[8,256], index: 0, kind: input, shape index: {}]
  %s1 = inlined_call_operand.vmem [shape: f32[8,256], index: 1, kind: input, shape index: {}]
  %s2 = inlined_call_operand.hbm [shape: f32[2,256,256], index: 2, kind: input, shape index: {}]
  %s3 = inlined_call_operand.vmem [shape: f32[1,256], index: 3, kind: input, shape index: {}]
  %s4 = inlined_call_operand.vmem [shape: f32[1,256], index: 4, kind: input, shape index: {}]
  %s5 = inlined_call_operand.hbm [shape: bf16[256,512], index: 5, kind: input, shape index: {}]
  %s6 = inlined_call_operand.vmem [shape: f32[1,512], index: 6, kind: input, shape index: {}]
  %s7 = inlined_call_operand.vmem [shape: f32[1,512], index: 7, kind: input, shape index: {}]
  %s8 = inlined_call_operand.vmem [shape: f32[1,512], index: 8, kind: input, shape index: {}]
  %s9 = inlined_call_operand.hbm [shape: bf16[512,256], index: 9, kind: input, shape index: {}]
  %s10 = inlined_call_operand.vmem [shape: f32[1,256], index: 10, kind: input, shape index: {}]
  %s11 = inlined_call_operand.vmem [shape: f32[1,256], index: 11, kind: input, shape index: {}]
  %s12 = inlined_call_operand.vmem [shape: f32[1,256], index: 12, kind: input, shape index: {}]
  %s13 = inlined_call_operand.vmem [shape: bf16[256,32], index: 13, kind: input, shape index: {}]
  %s14 = inlined_call_operand.vmem [shape: f32[1,32], index: 14, kind: input, shape index: {}]
  %s15 = inlined_call_operand.vmem [shape: f32[1,32], index: 15, kind: input, shape index: {}]
  %s16 = inlined_call_operand.vmem [shape: f32[1,32], index: 16, kind: input, shape index: {}]
  %s17 = inlined_call_operand.vmem [shape: f32[32,256], index: 17, kind: input, shape index: {}]
  %s18 = inlined_call_operand.vmem [shape: f32[8,256], index: 18, kind: output, shape index: {0}]
  %s19 = inlined_call_operand.vmem [shape: bf16[2,8,256], index: 19, kind: output, shape index: {1}]
  %s20 = inlined_call_operand.vmem [shape: bf16[2,8,256], index: 20, kind: output, shape index: {2}]
  %s21 = inlined_call_operand.vmem [shape: f32[1,256], index: 21, kind: output, shape index: {3}]
  %22 = xla_tuple %s18, %s19, %s20, %s21
  %s23 = sld [smem:[#allocation0]]
  $region118: #{hebbian_layer_forward.2} parent=0
    _
  %s25 = ssub.s32 1, %s23
  %s26 = scalar_select 0, %s25, %s23
  $region1: #{hebbian_layer_forward.2} parent=0
    #allocation2 [shape = 'u8[524288]{0}', space=vmem, size = 0x80000, scoped, tag = 'input window, operand 2, single buffered']
    #allocation3 [shape = 's32[1]{0}', space=sflag, size = 0x4, scoped, tag = 'scoped memory for hebbian_layer_forward.2']
    #allocation4 [shape = 'u8[262144]{0}', space=vmem, size = 0x40000, scoped, tag = 'input window, operand 5, single buffered']
    #allocation5 [shape = 's32[1]{0}', space=sflag, size = 0x4, scoped, tag = 'scoped memory for hebbian_layer_forward.2']
    #allocation6 [shape = 'u8[262144]{0}', space=vmem, size = 0x40000, scoped, tag = 'input window, operand 9, single buffered']
    %27 = vsyncpa [#allocation3], 0
    %28 = vsyncpa [#allocation5], 0
    // Predicated region
    $region2: #{hebbian_layer_forward.2} parent=1 // pred_check
      _
    $region3: #{hebbian_layer_forward.2} parent=1 // pred_check_branch
      %30 = sbr.rel (0) target = $region5
    $region4: #{hebbian_layer_forward.2} parent=1 // pred_region
      _
    $region5: #{hebbian_layer_forward.2} parent=1 // pred_fallthru
      _
    // Predicated region
    $region6: #{hebbian_layer_forward.2} parent=1 // pred_check
      _
    $region7: #{hebbian_layer_forward.2} parent=1 // pred_check_branch
      %32 = sbr.rel (0) target = $region9
    $region8: #{hebbian_layer_forward.2} parent=1 // pred_region
      _
    $region9: #{hebbian_layer_forward.2} parent=1 // pred_fallthru
      _
    // Predicated region
    $region10: #{hebbian_layer_forward.2} parent=1 // pred_check
      _
    $region11: #{hebbian_layer_forward.2} parent=1 // pred_check_branch
      %34 = sbr.rel (0) target = $region13
    $region12: #{hebbian_layer_forward.2} parent=1 // pred_region
      %s36 = ssub.s32 16384, 16384
      %37 = vsyncadd [#allocation3], %s36
      %s38 = sshll.u32 [#allocation2], 4
      %s39 = int_to_ptr.vmem [resolvable:$true] %s38
      %44 = dma.hbm_to_vmem [thread:$0]  %s2, 16384, %s39, [#allocation3], 256, 256, 16
    $region13: #{hebbian_layer_forward.2} parent=1 // pred_fallthru
      _
    // Predicated region
    $region14: #{hebbian_layer_forward.2} parent=1 // pred_check
      _
    $region15: #{hebbian_layer_forward.2} parent=1 // pred_check_branch
      %46 = sbr.rel (0) target = $region17
    $region16: #{hebbian_layer_forward.2} parent=1 // pred_region
      _
    $region17: #{hebbian_layer_forward.2} parent=1 // pred_fallthru
      _
    // Predicated region
    $region18: #{hebbian_layer_forward.2} parent=1 // pred_check
      _
    $region19: #{hebbian_layer_forward.2} parent=1 // pred_check_branch
      %48 = sbr.rel (0) target = $region21
    $region20: #{hebbian_layer_forward.2} parent=1 // pred_region
      _
    $region21: #{hebbian_layer_forward.2} parent=1 // pred_fallthru
      _
    // Predicated region
    $region22: #{hebbian_layer_forward.2} parent=1 // pred_check
      _
    $region23: #{hebbian_layer_forward.2} parent=1 // pred_check_branch
      %50 = sbr.rel (0) target = $region25
    $region24: #{hebbian_layer_forward.2} parent=1 // pred_region
      %s52 = ssub.s32 8192, 8192
      %53 = vsyncadd [#allocation5], %s52
      %s54 = sshll.u32 [#allocation4], 4
      %s55 = int_to_ptr.vmem [resolvable:$true] %s54
      %60 = dma.hbm_to_vmem [thread:$0]  %s5, 8192, %s55, [#allocation5], 256, 256, 16
    $region25: #{hebbian_layer_forward.2} parent=1 // pred_fallthru
      _
    // Predicated region
    $region26: #{hebbian_layer_forward.2} parent=1 // pred_check
      _
    $region27: #{hebbian_layer_forward.2} parent=1 // pred_check_branch
      %62 = sbr.rel (0) target = $region29
    $region28: #{hebbian_layer_forward.2} parent=1 // pred_region
      _
    $region29: #{hebbian_layer_forward.2} parent=1 // pred_fallthru
      _
    // Predicated region
    $region30: #{hebbian_layer_forward.2} parent=1 // pred_check
      _
    $region31: #{hebbian_layer_forward.2} parent=1 // pred_check_branch
      %64 = sbr.rel (0) target = $region33
    $region32: #{hebbian_layer_forward.2} parent=1 // pred_region
      _
    $region33: #{hebbian_layer_forward.2} parent=1 // pred_fallthru
      _
    // Predicated region
    $region34: #{hebbian_layer_forward.2} parent=1 // pred_check
      _
    $region35: #{hebbian_layer_forward.2} parent=1 // pred_check_branch
      %66 = sbr.rel (0) target = $region37
    $region36: #{hebbian_layer_forward.2} parent=1 // pred_region
      _
    $region37: #{hebbian_layer_forward.2} parent=1 // pred_fallthru
      _
    // Predicated region
    $region38: #{hebbian_layer_forward.2} parent=1 // pred_check
      _
    $region39: #{hebbian_layer_forward.2} parent=1 // pred_check_branch
      %68 = sbr.rel (0) target = $region41
    $region40: #{hebbian_layer_forward.2} parent=1 // pred_region
      %s70 = ssub.s32 8192, 8192
      %71 = vsyncadd [#allocation5], %s70
      %s72 = sshll.u32 [#allocation6], 4
      %s73 = int_to_ptr.vmem [resolvable:$true] %s72
      %78 = dma.hbm_to_vmem [thread:$0]  %s9, 8192, %s73, [#allocation5], 128, 128, 8
    $region41: #{hebbian_layer_forward.2} parent=1 // pred_fallthru
      _
    // Predicated region
    $region42: #{hebbian_layer_forward.2} parent=1 // pred_check
      _
    $region43: #{hebbian_layer_forward.2} parent=1 // pred_check_branch
      %80 = sbr.rel (0) target = $region45
    $region44: #{hebbian_layer_forward.2} parent=1 // pred_region
      _
    $region45: #{hebbian_layer_forward.2} parent=1 // pred_fallthru
      _
    // Predicated region
    $region46: #{hebbian_layer_forward.2} parent=1 // pred_check
      _
    $region47: #{hebbian_layer_forward.2} parent=1 // pred_check_branch
      %82 = sbr.rel (0) target = $region49
    $region48: #{hebbian_layer_forward.2} parent=1 // pred_region
      _
    $region49: #{hebbian_layer_forward.2} parent=1 // pred_fallthru
      _
    // Predicated region
    $region50: #{hebbian_layer_forward.2} parent=1 // pred_check
      _
    $region51: #{hebbian_layer_forward.2} parent=1 // pred_check_branch
      %84 = sbr.rel (0) target = $region53
    $region52: #{hebbian_layer_forward.2} parent=1 // pred_region
      _
    $region53: #{hebbian_layer_forward.2} parent=1 // pred_fallthru
      _
    // Predicated region
    $region54: #{hebbian_layer_forward.2} parent=1 // pred_check
      _
    $region55: #{hebbian_layer_forward.2} parent=1 // pred_check_branch
      %86 = sbr.rel (0) target = $region57
    $region56: #{hebbian_layer_forward.2} parent=1 // pred_region
      _
    $region57: #{hebbian_layer_forward.2} parent=1 // pred_fallthru
      _
    // Predicated region
    $region58: #{hebbian_layer_forward.2} parent=1 // pred_check
      _
    $region59: #{hebbian_layer_forward.2} parent=1 // pred_check_branch
      %88 = sbr.rel (0) target = $region61
    $region60: #{hebbian_layer_forward.2} parent=1 // pred_region
      _
    $region61: #{hebbian_layer_forward.2} parent=1 // pred_fallthru
      _
    // Predicated region
    $region62: #{hebbian_layer_forward.2} parent=1 // pred_check
      _
    $region63: #{hebbian_layer_forward.2} parent=1 // pred_check_branch
      %90 = sbr.rel (0) target = $region65
    $region64: #{hebbian_layer_forward.2} parent=1 // pred_region
      _
    $region65: #{hebbian_layer_forward.2} parent=1 // pred_fallthru
      _
    // Predicated region
    $region66: #{hebbian_layer_forward.2} parent=1 // pred_check
      _
    $region67: #{hebbian_layer_forward.2} parent=1 // pred_check_branch
      %92 = sbr.rel (0) target = $region69
    $region68: #{hebbian_layer_forward.2} parent=1 // pred_region
      _
    $region69: #{hebbian_layer_forward.2} parent=1 // pred_fallthru
      _
    // Predicated region
    $region70: #{hebbian_layer_forward.2} parent=1 // pred_check
      _
    $region71: #{hebbian_layer_forward.2} parent=1 // pred_check_branch
      %94 = sbr.rel (0) target = $region73
    $region72: #{hebbian_layer_forward.2} parent=1 // pred_region
      _
    $region73: #{hebbian_layer_forward.2} parent=1 // pred_fallthru
      _
    // Predicated region
    $region74: #{hebbian_layer_forward.2} parent=1 // pred_check
      _
    $region75: #{hebbian_layer_forward.2} parent=1 // pred_check_branch
      %96 = sbr.rel (0) target = $region77
    $region76: #{hebbian_layer_forward.2} parent=1 // pred_region
      %97 = dma.done [#allocation3], 16384
    $region77: #{hebbian_layer_forward.2} parent=1 // pred_fallthru
      _
    // Predicated region
    $region78: #{hebbian_layer_forward.2} parent=1 // pred_check
      _
    $region79: #{hebbian_layer_forward.2} parent=1 // pred_check_branch
      %99 = sbr.rel (0) target = $region81
    $region80: #{hebbian_layer_forward.2} parent=1 // pred_region
      %100 = dma.done [#allocation5], 8192
    $region81: #{hebbian_layer_forward.2} parent=1 // pred_fallthru
      _
    // Predicated region
    $region82: #{hebbian_layer_forward.2} parent=1 // pred_check
      _
    $region83: #{hebbian_layer_forward.2} parent=1 // pred_check_branch
      %102 = sbr.rel (0) target = $region85
    $region84: #{hebbian_layer_forward.2} parent=1 // pred_region
      %103 = dma.done [#allocation5], 8192
    $region85: #{hebbian_layer_forward.2} parent=1 // pred_fallthru
      _
    %v105 = vld [vmem:[%s0] sm:$0xff]
    %v106 = vld [vmem:[%s0 + $0x8] sm:$0xff]
    %v107 = vpack.c.bf16 %v105, %v105
    %v108 = vpack.c.bf16 %v106, %v106
    %v109 = vld [vmem:[%s1] sm:$0xff]
    %v110 = vld [vmem:[%s1 + $0x8] sm:$0xff]
    %v111 = vpack.c.bf16 %v109, %v109
    %v112 = vpack.c.bf16 %v110, %v110
    %v113 = vld [vmem:[#allocation2] sm:$0xff]
    %v114 = vld [vmem:[#allocation2 + $0x8] sm:$0xff]
    %v115 = vld [vmem:[#allocation2 + $0x10] sm:$0xff]
    %v116 = vld [vmem:[#allocation2 + $0x18] sm:$0xff]
    %v117 = vld [vmem:[#allocation2 + $0x20] sm:$0xff]
    %v118 = vld [vmem:[#allocation2 + $0x28] sm:$0xff]
    %v119 = vld [vmem:[#allocation2 + $0x30] sm:$0xff]
    %v120 = vld [vmem:[#allocation2 + $0x38] sm:$0xff]
    %v121 = vld [vmem:[#allocation2 + $0x40] sm:$0xff]
    %v122 = vld [vmem:[#allocation2 + $0x48] sm:$0xff]
    %v123 = vld [vmem:[#allocation2 + $0x50] sm:$0xff]
    %v124 = vld [vmem:[#allocation2 + $0x58] sm:$0xff]
    %v125 = vld [vmem:[#allocation2 + $0x60] sm:$0xff]
    %v126 = vld [vmem:[#allocation2 + $0x68] sm:$0xff]
    %v127 = vld [vmem:[#allocation2 + $0x70] sm:$0xff]
    %v128 = vld [vmem:[#allocation2 + $0x78] sm:$0xff]
    %v129 = vld [vmem:[#allocation2 + $0x80] sm:$0xff]
    %v130 = vld [vmem:[#allocation2 + $0x88] sm:$0xff]
    %v131 = vld [vmem:[#allocation2 + $0x90] sm:$0xff]
    %v132 = vld [vmem:[#allocation2 + $0x98] sm:$0xff]
    %v133 = vld [vmem:[#allocation2 + $0xa0] sm:$0xff]
    %v134 = vld [vmem:[#allocation2 + $0xa8] sm:$0xff]
    %v135 = vld [vmem:[#allocation2 + $0xb0] sm:$0xff]
    %v136 = vld [vmem:[#allocation2 + $0xb8] sm:$0xff]
    %v137 = vld [vmem:[#allocation2 + $0xc0] sm:$0xff]
    %v138 = vld [vmem:[#allocation2 + $0xc8] sm:$0xff]
    %v139 = vld [vmem:[#allocation2 + $0xd0] sm:$0xff]
    %v140 = vld [vmem:[#allocation2 + $0xd8] sm:$0xff]
    %v141 = vld [vmem:[#allocation2 + $0xe0] sm:$0xff]
    %v142 = vld [vmem:[#allocation2 + $0xe8] sm:$0xff]
    %v143 = vld [vmem:[#allocation2 + $0xf0] sm:$0xff]
    %v144 = vld [vmem:[#allocation2 + $0xf8] sm:$0xff]
    %v145 = vld [vmem:[#allocation2 + $0x100] sm:$0xff]
    %v146 = vld [vmem:[#allocation2 + $0x108] sm:$0xff]
    %v147 = vld [vmem:[#allocation2 + $0x110] sm:$0xff]
    %v148 = vld [vmem:[#allocation2 + $0x118] sm:$0xff]
    %v149 = vld [vmem:[#allocation2 + $0x120] sm:$0xff]
    %v150 = vld [vmem:[#allocation2 + $0x128] sm:$0xff]
    %v151 = vld [vmem:[#allocation2 + $0x130] sm:$0xff]
    %v152 = vld [vmem:[#allocation2 + $0x138] sm:$0xff]
    %v153 = vld [vmem:[#allocation2 + $0x140] sm:$0xff]
    %v154 = vld [vmem:[#allocation2 + $0x148] sm:$0xff]
    %v155 = vld [vmem:[#allocation2 + $0x150] sm:$0xff]
    %v156 = vld [vmem:[#allocation2 + $0x158] sm:$0xff]
    %v157 = vld [vmem:[#allocation2 + $0x160] sm:$0xff]
    %v158 = vld [vmem:[#allocation2 + $0x168] sm:$0xff]
    %v159 = vld [vmem:[#allocation2 + $0x170] sm:$0xff]
    %v160 = vld [vmem:[#allocation2 + $0x178] sm:$0xff]
    %v161 = vld [vmem:[#allocation2 + $0x180] sm:$0xff]
    %v162 = vld [vmem:[#allocation2 + $0x188] sm:$0xff]
    %v163 = vld [vmem:[#allocation2 + $0x190] sm:$0xff]
    %v164 = vld [vmem:[#allocation2 + $0x198] sm:$0xff]
    %v165 = vld [vmem:[#allocation2 + $0x1a0] sm:$0xff]
    %v166 = vld [vmem:[#allocation2 + $0x1a8] sm:$0xff]
    %v167 = vld [vmem:[#allocation2 + $0x1b0] sm:$0xff]
    %v168 = vld [vmem:[#allocation2 + $0x1b8] sm:$0xff]
    %v169 = vld [vmem:[#allocation2 + $0x1c0] sm:$0xff]
    %v170 = vld [vmem:[#allocation2 + $0x1c8] sm:$0xff]
    %v171 = vld [vmem:[#allocation2 + $0x1d0] sm:$0xff]
    %v172 = vld [vmem:[#allocation2 + $0x1d8] sm:$0xff]
    %v173 = vld [vmem:[#allocation2 + $0x1e0] sm:$0xff]
    %v174 = vld [vmem:[#allocation2 + $0x1e8] sm:$0xff]
    %v175 = vld [vmem:[#allocation2 + $0x1f0] sm:$0xff]
    %v176 = vld [vmem:[#allocation2 + $0x1f8] sm:$0xff]
    %v177 = vpack.c.bf16 %v115, %v113
    %v178 = vpack.c.bf16 %v116, %v114
    %v179 = vpack.c.bf16 %v119, %v117
    %v180 = vpack.c.bf16 %v120, %v118
    %v181 = vpack.c.bf16 %v123, %v121
    %v182 = vpack.c.bf16 %v124, %v122
    %v183 = vpack.c.bf16 %v127, %v125
    %v184 = vpack.c.bf16 %v128, %v126
    %v185 = vpack.c.bf16 %v131, %v129
    %v186 = vpack.c.bf16 %v132, %v130
    %v187 = vpack.c.bf16 %v135, %v133
    %v188 = vpack.c.bf16 %v136, %v134
    %v189 = vpack.c.bf16 %v139, %v137
    %v190 = vpack.c.bf16 %v140, %v138
    %v191 = vpack.c.bf16 %v143, %v141
    %v192 = vpack.c.bf16 %v144, %v142
    %v193 = vpack.c.bf16 %v147, %v145
    %v194 = vpack.c.bf16 %v148, %v146
    %v195 = vpack.c.bf16 %v151, %v149
    %v196 = vpack.c.bf16 %v152, %v150
    %v197 = vpack.c.bf16 %v155, %v153
    %v198 = vpack.c.bf16 %v156, %v154
    %v199 = vpack.c.bf16 %v159, %v157
    %v200 = vpack.c.bf16 %v160, %v158
    %v201 = vpack.c.bf16 %v163, %v161
    %v202 = vpack.c.bf16 %v164, %v162
    %v203 = vpack.c.bf16 %v167, %v165
    %v204 = vpack.c.bf16 %v168, %v166
    %v205 = vpack.c.bf16 %v171, %v169
    %v206 = vpack.c.bf16 %v172, %v170
    %v207 = vpack.c.bf16 %v175, %v173
    %v208 = vpack.c.bf16 %v176, %v174
    %s209 = scalar_lea.vmem [#allocation2], 512
    %v210 = vld [vmem:[%s209] sm:$0xff]
    %v211 = vld [vmem:[%s209 + $0x8] sm:$0xff]
    %v212 = vld [vmem:[%s209 + $0x10] sm:$0xff]
    %v213 = vld [vmem:[%s209 + $0x18] sm:$0xff]
    %v214 = vld [vmem:[%s209 + $0x20] sm:$0xff]
    %v215 = vld [vmem:[%s209 + $0x28] sm:$0xff]
    %v216 = vld [vmem:[%s209 + $0x30] sm:$0xff]
    %v217 = vld [vmem:[%s209 + $0x38] sm:$0xff]
    %v218 = vld [vmem:[%s209 + $0x40] sm:$0xff]
    %v219 = vld [vmem:[%s209 + $0x48] sm:$0xff]
    %v220 = vld [vmem:[%s209 + $0x50] sm:$0xff]
    %v221 = vld [vmem:[%s209 + $0x58] sm:$0xff]
    %v222 = vld [vmem:[%s209 + $0x60] sm:$0xff]
    %v223 = vld [vmem:[%s209 + $0x68] sm:$0xff]
    %v224 = vld [vmem:[%s209 + $0x70] sm:$0xff]
    %v225 = vld [vmem:[%s209 + $0x78] sm:$0xff]
    %v226 = vld [vmem:[%s209 + $0x80] sm:$0xff]
    %v227 = vld [vmem:[%s209 + $0x88] sm:$0xff]
    %v228 = vld [vmem:[%s209 + $0x90] sm:$0xff]
    %v229 = vld [vmem:[%s209 + $0x98] sm:$0xff]
    %v230 = vld [vmem:[%s209 + $0xa0] sm:$0xff]
    %v231 = vld [vmem:[%s209 + $0xa8] sm:$0xff]
    %v232 = vld [vmem:[%s209 + $0xb0] sm:$0xff]
    %v233 = vld [vmem:[%s209 + $0xb8] sm:$0xff]
    %v234 = vld [vmem:[%s209 + $0xc0] sm:$0xff]
    %v235 = vld [vmem:[%s209 + $0xc8] sm:$0xff]
    %v236 = vld [vmem:[%s209 + $0xd0] sm:$0xff]
    %v237 = vld [vmem:[%s209 + $0xd8] sm:$0xff]
    %v238 = vld [vmem:[%s209 + $0xe0] sm:$0xff]
    %v239 = vld [vmem:[%s209 + $0xe8] sm:$0xff]
    %v240 = vld [vmem:[%s209 + $0xf0] sm:$0xff]
    %v241 = vld [vmem:[%s209 + $0xf8] sm:$0xff]
    %v242 = vld [vmem:[%s209 + $0x100] sm:$0xff]
    %v243 = vld [vmem:[%s209 + $0x108] sm:$0xff]
    %v244 = vld [vmem:[%s209 + $0x110] sm:$0xff]
    %v245 = vld [vmem:[%s209 + $0x118] sm:$0xff]
    %v246 = vld [vmem:[%s209 + $0x120] sm:$0xff]
    %v247 = vld [vmem:[%s209 + $0x128] sm:$0xff]
    %v248 = vld [vmem:[%s209 + $0x130] sm:$0xff]
    %v249 = vld [vmem:[%s209 + $0x138] sm:$0xff]
    %v250 = vld [vmem:[%s209 + $0x140] sm:$0xff]
    %v251 = vld [vmem:[%s209 + $0x148] sm:$0xff]
    %v252 = vld [vmem:[%s209 + $0x150] sm:$0xff]
    %v253 = vld [vmem:[%s209 + $0x158] sm:$0xff]
    %v254 = vld [vmem:[%s209 + $0x160] sm:$0xff]
    %v255 = vld [vmem:[%s209 + $0x168] sm:$0xff]
    %v256 = vld [vmem:[%s209 + $0x170] sm:$0xff]
    %v257 = vld [vmem:[%s209 + $0x178] sm:$0xff]
    %v258 = vld [vmem:[%s209 + $0x180] sm:$0xff]
    %v259 = vld [vmem:[%s209 + $0x188] sm:$0xff]
    %v260 = vld [vmem:[%s209 + $0x190] sm:$0xff]
    %v261 = vld [vmem:[%s209 + $0x198] sm:$0xff]
    %v262 = vld [vmem:[%s209 + $0x1a0] sm:$0xff]
    %v263 = vld [vmem:[%s209 + $0x1a8] sm:$0xff]
    %v264 = vld [vmem:[%s209 + $0x1b0] sm:$0xff]
    %v265 = vld [vmem:[%s209 + $0x1b8] sm:$0xff]
    %v266 = vld [vmem:[%s209 + $0x1c0] sm:$0xff]
    %v267 = vld [vmem:[%s209 + $0x1c8] sm:$0xff]
    %v268 = vld [vmem:[%s209 + $0x1d0] sm:$0xff]
    %v269 = vld [vmem:[%s209 + $0x1d8] sm:$0xff]
    %v270 = vld [vmem:[%s209 + $0x1e0] sm:$0xff]
    %v271 = vld [vmem:[%s209 + $0x1e8] sm:$0xff]
    %v272 = vld [vmem:[%s209 + $0x1f0] sm:$0xff]
    %v273 = vld [vmem:[%s209 + $0x1f8] sm:$0xff]
    %v274 = vpack.c.bf16 %v212, %v210
    %v275 = vpack.c.bf16 %v213, %v211
    %v276 = vpack.c.bf16 %v216, %v214
    %v277 = vpack.c.bf16 %v217, %v215
    %v278 = vpack.c.bf16 %v220, %v218
    %v279 = vpack.c.bf16 %v221, %v219
    %v280 = vpack.c.bf16 %v224, %v222
    %v281 = vpack.c.bf16 %v225, %v223
    %v282 = vpack.c.bf16 %v228, %v226
    %v283 = vpack.c.bf16 %v229, %v227
    %v284 = vpack.c.bf16 %v232, %v230
    %v285 = vpack.c.bf16 %v233, %v231
    %v286 = vpack.c.bf16 %v236, %v234
    %v287 = vpack.c.bf16 %v237, %v235
    %v288 = vpack.c.bf16 %v240, %v238
    %v289 = vpack.c.bf16 %v241, %v239
    %v290 = vpack.c.bf16 %v244, %v242
    %v291 = vpack.c.bf16 %v245, %v243
    %v292 = vpack.c.bf16 %v248, %v246
    %v293 = vpack.c.bf16 %v249, %v247
    %v294 = vpack.c.bf16 %v252, %v250
    %v295 = vpack.c.bf16 %v253, %v251
    %v296 = vpack.c.bf16 %v256, %v254
    %v297 = vpack.c.bf16 %v257, %v255
    %v298 = vpack.c.bf16 %v260, %v258
    %v299 = vpack.c.bf16 %v261, %v259
    %v300 = vpack.c.bf16 %v264, %v262
    %v301 = vpack.c.bf16 %v265, %v263
    %v302 = vpack.c.bf16 %v268, %v266
    %v303 = vpack.c.bf16 %v269, %v267
    %v304 = vpack.c.bf16 %v272, %v270
    %v305 = vpack.c.bf16 %v273, %v271
    %306 = vmatprep.subr.bf16.mxu0 %v178
    %307 = vmatpush1.bf16.msra.mxu0 %v177
    %308 = vmatprep.subr.bf16.mxu0 %v180
    %309 = vmatpush1.bf16.msra.mxu0 %v179
    %310 = vmatprep.subr.bf16.mxu0 %v182
    %311 = vmatpush1.bf16.msra.mxu0 %v181
    %312 = vmatprep.subr.bf16.mxu0 %v184
    %313 = vmatpush1.bf16.msra.mxu0 %v183
    %314 = vmatprep.subr.bf16.mxu0 %v186
    %315 = vmatpush1.bf16.msra.mxu0 %v185
    %316 = vmatprep.subr.bf16.mxu0 %v188
    %317 = vmatpush1.bf16.msra.mxu0 %v187
    %318 = vmatprep.subr.bf16.mxu0 %v190
    %319 = vmatpush1.bf16.msra.mxu0 %v189
    %320 = vmatprep.subr.bf16.mxu0 %v192
    %321 = vmatpush1.bf16.msra.mxu0 %v191
    %322 = vmatprep.subr.bf16.mxu0 %v194
    %323 = vmatpush1.bf16.msra.mxu0 %v193
    %324 = vmatprep.subr.bf16.mxu0 %v196
    %325 = vmatpush1.bf16.msra.mxu0 %v195
    %326 = vmatprep.subr.bf16.mxu0 %v198
    %327 = vmatpush1.bf16.msra.mxu0 %v197
    %328 = vmatprep.subr.bf16.mxu0 %v200
    %329 = vmatpush1.bf16.msra.mxu0 %v199
    %330 = vmatprep.subr.bf16.mxu0 %v202
    %331 = vmatpush1.bf16.msra.mxu0 %v201
    %332 = vmatprep.subr.bf16.mxu0 %v204
    %333 = vmatpush1.bf16.msra.mxu0 %v203
    %334 = vmatprep.subr.bf16.mxu0 %v206
    %335 = vmatpush1.bf16.msra.mxu0 %v205
    %336 = vmatprep.subr.bf16.mxu0 %v208
    %337 = vmatpush1.bf16.msra.mxu0 %v207
    %338 = vmatprep.mubr.bf16.mxu0 %v108
    %339 = vmatmul.mubr.bf16.gmra.mrb[0].mxu0 %v107
    %v340 = vpop.f32.mrb[0].mxu0
    %v341 = vadd.f32 0.0, %v340
    %v342 = vpop.f32.mrb[0].mxu0
    %v343 = vadd.f32 0.0, %v342
    %v344 = vpop.f32.mrb[0].mxu0
    %v345 = vpop.f32.mrb[0].mxu0
    %346 = vdwg.mxu0
    %v347 = vmax.f32 %v341, 0.0
    %v348 = vmax.f32 %v343, 0.0
    %349 = vmatprep.subr.bf16.mxu0 %v275
    %350 = vmatpush1.bf16.msra.mxu0 %v274
    %351 = vmatprep.subr.bf16.mxu0 %v277
    %352 = vmatpush1.bf16.msra.mxu0 %v276
    %353 = vmatprep.subr.bf16.mxu0 %v279
    %354 = vmatpush1.bf16.msra.mxu0 %v278
    %355 = vmatprep.subr.bf16.mxu0 %v281
    %356 = vmatpush1.bf16.msra.mxu0 %v280
    %357 = vmatprep.subr.bf16.mxu0 %v283
    %358 = vmatpush1.bf16.msra.mxu0 %v282
    %359 = vmatprep.subr.bf16.mxu0 %v285
    %360 = vmatpush1.bf16.msra.mxu0 %v284
    %361 = vmatprep.subr.bf16.mxu0 %v287
    %362 = vmatpush1.bf16.msra.mxu0 %v286
    %363 = vmatprep.subr.bf16.mxu0 %v289
    %364 = vmatpush1.bf16.msra.mxu0 %v288
    %365 = vmatprep.subr.bf16.mxu0 %v291
    %366 = vmatpush1.bf16.msra.mxu0 %v290
    %367 = vmatprep.subr.bf16.mxu0 %v293
    %368 = vmatpush1.bf16.msra.mxu0 %v292
    %369 = vmatprep.subr.bf16.mxu0 %v295
    %370 = vmatpush1.bf16.msra.mxu0 %v294
    %371 = vmatprep.subr.bf16.mxu0 %v297
    %372 = vmatpush1.bf16.msra.mxu0 %v296
    %373 = vmatprep.subr.bf16.mxu0 %v299
    %374 = vmatpush1.bf16.msra.mxu0 %v298
    %375 = vmatprep.subr.bf16.mxu0 %v301
    %376 = vmatpush1.bf16.msra.mxu0 %v300
    %377 = vmatprep.subr.bf16.mxu0 %v303
    %378 = vmatpush1.bf16.msra.mxu0 %v302
    %379 = vmatprep.subr.bf16.mxu0 %v305
    %380 = vmatpush1.bf16.msra.mxu0 %v304
    %381 = vmatprep.mubr.bf16.mxu0 %v112
    %382 = vmatmul.mubr.bf16.gmra.mrb[0].mxu0 %v111
    %v383 = vpop.f32.mrb[0].mxu0
    %v384 = vadd.f32 0.0, %v383
    %v385 = vpop.f32.mrb[0].mxu0
    %v386 = vadd.f32 0.0, %v385
    %v387 = vpop.f32.mrb[0].mxu0
    %v388 = vpop.f32.mrb[0].mxu0
    %389 = vdwg.mxu0
    %v390 = vmax.f32 %v384, 0.0
    %v391 = vmax.f32 %v386, 0.0
    %v392 = vld [vmem:[%s3] sm:$0x3]
    %v393 = vld [vmem:[%s4] sm:$0x3]
    %v394 = vadd.f32 %v390, %v391
    %395 = vadd.xlane.f32.xlu0 %v394
    %v396 = vpop.xlane.xlu0 %395
    %v397 = vrcp.pop 256.0
    %v398 = vmul.f32 %v396, %v397
    %v399 = vsub.f32 %v390, %v398
    %v400 = vsub.f32 %v391, %v398
    %v401 = vmul.f32 %v399, %v399
    %v402 = vmul.f32 %v400, %v400
    %v403 = vadd.f32 %v401, %v402
    %404 = vadd.xlane.f32.xlu0 %v403
    %v405 = vpop.xlane.xlu0 %404
    %v406 = vmul.f32 %v405, %v397
    %v407 = vadd.f32 %v406, 1e-05
    %v408 = vrsqrt.pop %v407
    %v409 = vmul.f32 %v399, %v408
    %v410 = vmul.f32 %v400, %v408
    %v412 = vlaneseq
    %v413 = vshrl.u32 %v412, 7
    %v414 = vsub.s32 0, %v413
    %v415 = vrot.slane %v392, %v414
    %v416 = vlaneseq
    %v417 = vshrl.u32 %v416, 7
    %v418 = vsub.s32 1, %v417
    %v419 = vrot.slane %v392, %v418
    %v422 = vmul.f32 %v409, %v415
    %v423 = vmul.f32 %v410, %v419
    %v425 = vlaneseq
    %v426 = vshrl.u32 %v425, 7
    %v427 = vsub.s32 0, %v426
    %v428 = vrot.slane %v393, %v427
    %v429 = vlaneseq
    %v430 = vshrl.u32 %v429, 7
    %v431 = vsub.s32 1, %v430
    %v432 = vrot.slane %v393, %v431
    %v435 = vadd.f32 %v422, %v428
    %v436 = vadd.f32 %v423, %v432
    %v437 = vadd.f32 %v347, %v435
    %v438 = vadd.f32 %v348, %v436
    %439 = vst [vmem:[%s18] sm:$0xff] %v437
    %440 = vst [vmem:[%s18 + $0x8] sm:$0xff] %v438
    %v443 = vunpack.c.l.b16 %v107
    %v444 = vunpack.c.l.b16 %v108
    %v445 = vpack.c.b16 %v444, %v443
    %447 = vst [vmem:[%s19] sm:$0xff] %v445
    %v450 = vunpack.c.l.b16 %v111
    %v451 = vunpack.c.l.b16 %v112
    %v452 = vpack.c.b16 %v451, %v450
    %s454 = scalar_lea.vmem %s19, 8
    %455 = vst [vmem:[%s454] sm:$0xff] %v452
    %v456 = vpack.c.bf16 %v347, %v347
    %v457 = vpack.c.bf16 %v348, %v348
    %v460 = vunpack.c.l.b16 %v456
    %v461 = vunpack.c.l.b16 %v457
    %v462 = vpack.c.b16 %v461, %v460
    %464 = vst [vmem:[%s20] sm:$0xff] %v462
    %v465 = vpack.c.bf16 %v390, %v390
    %v466 = vpack.c.bf16 %v391, %v391
    %v469 = vunpack.c.l.b16 %v465
    %v470 = vunpack.c.l.b16 %v466
    %v471 = vpack.c.b16 %v470, %v469
    %s473 = scalar_lea.vmem %s20, 8
    %474 = vst [vmem:[%s473] sm:$0xff] %v471
    %v475 = vpack.c.bf16 %v437, %v437
    %v476 = vpack.c.bf16 %v438, %v438
    %v477 = vld [vmem:[#allocation4] sm:$0xff]
    %v478 = vld [vmem:[#allocation4 + $0x8] sm:$0xff]
    %v479 = vld [vmem:[#allocation4 + $0x10] sm:$0xff]
    %v480 = vld [vmem:[#allocation4 + $0x18] sm:$0xff]
    %v481 = vld [vmem:[#allocation4 + $0x20] sm:$0xff]
    %v482 = vld [vmem:[#allocation4 + $0x28] sm:$0xff]
    %v483 = vld [vmem:[#allocation4 + $0x30] sm:$0xff]
    %v484 = vld [vmem:[#allocation4 + $0x38] sm:$0xff]
    %v485 = vld [vmem:[#allocation4 + $0x40] sm:$0xff]
    %v486 = vld [vmem:[#allocation4 + $0x48] sm:$0xff]
    %v487 = vld [vmem:[#allocation4 + $0x50] sm:$0xff]
    %v488 = vld [vmem:[#allocation4 + $0x58] sm:$0xff]
    %v489 = vld [vmem:[#allocation4 + $0x60] sm:$0xff]
    %v490 = vld [vmem:[#allocation4 + $0x68] sm:$0xff]
    %v491 = vld [vmem:[#allocation4 + $0x70] sm:$0xff]
    %v492 = vld [vmem:[#allocation4 + $0x78] sm:$0xff]
    %v493 = vld [vmem:[#allocation4 + $0x80] sm:$0xff]
    %v494 = vld [vmem:[#allocation4 + $0x88] sm:$0xff]
    %v495 = vld [vmem:[#allocation4 + $0x90] sm:$0xff]
    %v496 = vld [vmem:[#allocation4 + $0x98] sm:$0xff]
    %v497 = vld [vmem:[#allocation4 + $0xa0] sm:$0xff]
    %v498 = vld [vmem:[#allocation4 + $0xa8] sm:$0xff]
    %v499 = vld [vmem:[#allocation4 + $0xb0] sm:$0xff]
    %v500 = vld [vmem:[#allocation4 + $0xb8] sm:$0xff]
    %v501 = vld [vmem:[#allocation4 + $0xc0] sm:$0xff]
    %v502 = vld [vmem:[#allocation4 + $0xc8] sm:$0xff]
    %v503 = vld [vmem:[#allocation4 + $0xd0] sm:$0xff]
    %v504 = vld [vmem:[#allocation4 + $0xd8] sm:$0xff]
    %v505 = vld [vmem:[#allocation4 + $0xe0] sm:$0xff]
    %v506 = vld [vmem:[#allocation4 + $0xe8] sm:$0xff]
    %v507 = vld [vmem:[#allocation4 + $0xf0] sm:$0xff]
    %v508 = vld [vmem:[#allocation4 + $0xf8] sm:$0xff]
    %v509 = vld [vmem:[#allocation4 + $0x100] sm:$0xff]
    %v510 = vld [vmem:[#allocation4 + $0x108] sm:$0xff]
    %v511 = vld [vmem:[#allocation4 + $0x110] sm:$0xff]
    %v512 = vld [vmem:[#allocation4 + $0x118] sm:$0xff]
    %v513 = vld [vmem:[#allocation4 + $0x120] sm:$0xff]
    %v514 = vld [vmem:[#allocation4 + $0x128] sm:$0xff]
    %v515 = vld [vmem:[#allocation4 + $0x130] sm:$0xff]
    %v516 = vld [vmem:[#allocation4 + $0x138] sm:$0xff]
    %v517 = vld [vmem:[#allocation4 + $0x140] sm:$0xff]
    %v518 = vld [vmem:[#allocation4 + $0x148] sm:$0xff]
    %v519 = vld [vmem:[#allocation4 + $0x150] sm:$0xff]
    %v520 = vld [vmem:[#allocation4 + $0x158] sm:$0xff]
    %v521 = vld [vmem:[#allocation4 + $0x160] sm:$0xff]
    %v522 = vld [vmem:[#allocation4 + $0x168] sm:$0xff]
    %v523 = vld [vmem:[#allocation4 + $0x170] sm:$0xff]
    %v524 = vld [vmem:[#allocation4 + $0x178] sm:$0xff]
    %v525 = vld [vmem:[#allocation4 + $0x180] sm:$0xff]
    %v526 = vld [vmem:[#allocation4 + $0x188] sm:$0xff]
    %v527 = vld [vmem:[#allocation4 + $0x190] sm:$0xff]
    %v528 = vld [vmem:[#allocation4 + $0x198] sm:$0xff]
    %v529 = vld [vmem:[#allocation4 + $0x1a0] sm:$0xff]
    %v530 = vld [vmem:[#allocation4 + $0x1a8] sm:$0xff]
    %v531 = vld [vmem:[#allocation4 + $0x1b0] sm:$0xff]
    %v532 = vld [vmem:[#allocation4 + $0x1b8] sm:$0xff]
    %v533 = vld [vmem:[#allocation4 + $0x1c0] sm:$0xff]
    %v534 = vld [vmem:[#allocation4 + $0x1c8] sm:$0xff]
    %v535 = vld [vmem:[#allocation4 + $0x1d0] sm:$0xff]
    %v536 = vld [vmem:[#allocation4 + $0x1d8] sm:$0xff]
    %v537 = vld [vmem:[#allocation4 + $0x1e0] sm:$0xff]
    %v538 = vld [vmem:[#allocation4 + $0x1e8] sm:$0xff]
    %v539 = vld [vmem:[#allocation4 + $0x1f0] sm:$0xff]
    %v540 = vld [vmem:[#allocation4 + $0x1f8] sm:$0xff]
    %v541 = vld [vmem:[%s6] sm:$0xf]
    %v543 = vlaneseq
    %v544 = vshrl.u32 %v543, 7
    %v545 = vsub.s32 0, %v544
    %v546 = vrot.slane %v541, %v545
    %v547 = vlaneseq
    %v548 = vshrl.u32 %v547, 7
    %v549 = vsub.s32 1, %v548
    %v550 = vrot.slane %v541, %v549
    %v551 = vlaneseq
    %v552 = vshrl.u32 %v551, 7
    %v553 = vsub.s32 2, %v552
    %v554 = vrot.slane %v541, %v553
    %v555 = vlaneseq
    %v556 = vshrl.u32 %v555, 7
    %v557 = vsub.s32 3, %v556
    %v558 = vrot.slane %v541, %v557
    %v627 = vunpack.c.l.b16 %v477
    %v628 = vunpack.c.h.b16 %v477
    %v629 = vunpack.c.l.b16 %v478
    %v630 = vunpack.c.h.b16 %v478
    %v631 = vunpack.c.l.b16 %v479
    %v632 = vunpack.c.h.b16 %v479
    %v633 = vunpack.c.l.b16 %v480
    %v634 = vunpack.c.h.b16 %v480
    %v635 = vunpack.c.l.b16 %v481
    %v636 = vunpack.c.h.b16 %v481
    %v637 = vunpack.c.l.b16 %v482
    %v638 = vunpack.c.h.b16 %v482
    %v639 = vunpack.c.l.b16 %v483
    %v640 = vunpack.c.h.b16 %v483
    %v641 = vunpack.c.l.b16 %v484
    %v642 = vunpack.c.h.b16 %v484
    %v643 = vunpack.c.l.b16 %v485
    %v644 = vunpack.c.h.b16 %v485
    %v645 = vunpack.c.l.b16 %v486
    %v646 = vunpack.c.h.b16 %v486
    %v647 = vunpack.c.l.b16 %v487
    %v648 = vunpack.c.h.b16 %v487
    %v649 = vunpack.c.l.b16 %v488
    %v650 = vunpack.c.h.b16 %v488
    %v651 = vunpack.c.l.b16 %v489
    %v652 = vunpack.c.h.b16 %v489
    %v653 = vunpack.c.l.b16 %v490
    %v654 = vunpack.c.h.b16 %v490
    %v655 = vunpack.c.l.b16 %v491
    %v656 = vunpack.c.h.b16 %v491
    %v657 = vunpack.c.l.b16 %v492
    %v658 = vunpack.c.h.b16 %v492
    %v659 = vunpack.c.l.b16 %v493
    %v660 = vunpack.c.h.b16 %v493
    %v661 = vunpack.c.l.b16 %v494
    %v662 = vunpack.c.h.b16 %v494
    %v663 = vunpack.c.l.b16 %v495
    %v664 = vunpack.c.h.b16 %v495
    %v665 = vunpack.c.l.b16 %v496
    %v666 = vunpack.c.h.b16 %v496
    %v667 = vunpack.c.l.b16 %v497
    %v668 = vunpack.c.h.b16 %v497
    %v669 = vunpack.c.l.b16 %v498
    %v670 = vunpack.c.h.b16 %v498
    %v671 = vunpack.c.l.b16 %v499
    %v672 = vunpack.c.h.b16 %v499
    %v673 = vunpack.c.l.b16 %v500
    %v674 = vunpack.c.h.b16 %v500
    %v675 = vunpack.c.l.b16 %v501
    %v676 = vunpack.c.h.b16 %v501
    %v677 = vunpack.c.l.b16 %v502
    %v678 = vunpack.c.h.b16 %v502
    %v679 = vunpack.c.l.b16 %v503
    %v680 = vunpack.c.h.b16 %v503
    %v681 = vunpack.c.l.b16 %v504
    %v682 = vunpack.c.h.b16 %v504
    %v683 = vunpack.c.l.b16 %v505
    %v684 = vunpack.c.h.b16 %v505
    %v685 = vunpack.c.l.b16 %v506
    %v686 = vunpack.c.h.b16 %v506
    %v687 = vunpack.c.l.b16 %v507
    %v688 = vunpack.c.h.b16 %v507
    %v689 = vunpack.c.l.b16 %v508
    %v690 = vunpack.c.h.b16 %v508
    %v691 = vunpack.c.l.b16 %v509
    %v692 = vunpack.c.h.b16 %v509
    %v693 = vunpack.c.l.b16 %v510
    %v694 = vunpack.c.h.b16 %v510
    %v695 = vunpack.c.l.b16 %v511
    %v696 = vunpack.c.h.b16 %v511
    %v697 = vunpack.c.l.b16 %v512
    %v698 = vunpack.c.h.b16 %v512
    %v699 = vunpack.c.l.b16 %v513
    %v700 = vunpack.c.h.b16 %v513
    %v701 = vunpack.c.l.b16 %v514
    %v702 = vunpack.c.h.b16 %v514
    %v703 = vunpack.c.l.b16 %v515
    %v704 = vunpack.c.h.b16 %v515
    %v705 = vunpack.c.l.b16 %v516
    %v706 = vunpack.c.h.b16 %v516
    %v707 = vunpack.c.l.b16 %v517
    %v708 = vunpack.c.h.b16 %v517
    %v709 = vunpack.c.l.b16 %v518
    %v710 = vunpack.c.h.b16 %v518
    %v711 = vunpack.c.l.b16 %v519
    %v712 = vunpack.c.h.b16 %v519
    %v713 = vunpack.c.l.b16 %v520
    %v714 = vunpack.c.h.b16 %v520
    %v715 = vunpack.c.l.b16 %v521
    %v716 = vunpack.c.h.b16 %v521
    %v717 = vunpack.c.l.b16 %v522
    %v718 = vunpack.c.h.b16 %v522
    %v719 = vunpack.c.l.b16 %v523
    %v720 = vunpack.c.h.b16 %v523
    %v721 = vunpack.c.l.b16 %v524
    %v722 = vunpack.c.h.b16 %v524
    %v723 = vunpack.c.l.b16 %v525
    %v724 = vunpack.c.h.b16 %v525
    %v725 = vunpack.c.l.b16 %v526
    %v726 = vunpack.c.h.b16 %v526
    %v727 = vunpack.c.l.b16 %v527
    %v728 = vunpack.c.h.b16 %v527
    %v729 = vunpack.c.l.b16 %v528
    %v730 = vunpack.c.h.b16 %v528
    %v731 = vunpack.c.l.b16 %v529
    %v732 = vunpack.c.h.b16 %v529
    %v733 = vunpack.c.l.b16 %v530
    %v734 = vunpack.c.h.b16 %v530
    %v735 = vunpack.c.l.b16 %v531
    %v736 = vunpack.c.h.b16 %v531
    %v737 = vunpack.c.l.b16 %v532
    %v738 = vunpack.c.h.b16 %v532
    %v739 = vunpack.c.l.b16 %v533
    %v740 = vunpack.c.h.b16 %v533
    %v741 = vunpack.c.l.b16 %v534
    %v742 = vunpack.c.h.b16 %v534
    %v743 = vunpack.c.l.b16 %v535
    %v744 = vunpack.c.h.b16 %v535
    %v745 = vunpack.c.l.b16 %v536
    %v746 = vunpack.c.h.b16 %v536
    %v747 = vunpack.c.l.b16 %v537
    %v748 = vunpack.c.h.b16 %v537
    %v749 = vunpack.c.l.b16 %v538
    %v750 = vunpack.c.h.b16 %v538
    %v751 = vunpack.c.l.b16 %v539
    %v752 = vunpack.c.h.b16 %v539
    %v753 = vunpack.c.l.b16 %v540
    %v754 = vunpack.c.h.b16 %v540
    %v755 = vpack.c.b16 %v631, %v627
    %v756 = vpack.c.b16 %v632, %v628
    %v757 = vpack.c.b16 %v633, %v629
    %v758 = vpack.c.b16 %v634, %v630
    %v759 = vpack.c.b16 %v639, %v635
    %v760 = vpack.c.b16 %v640, %v636
    %v761 = vpack.c.b16 %v641, %v637
    %v762 = vpack.c.b16 %v642, %v638
    %v763 = vpack.c.b16 %v647, %v643
    %v764 = vpack.c.b16 %v648, %v644
    %v765 = vpack.c.b16 %v649, %v645
    %v766 = vpack.c.b16 %v650, %v646
    %v767 = vpack.c.b16 %v655, %v651
    %v768 = vpack.c.b16 %v656, %v652
    %v769 = vpack.c.b16 %v657, %v653
    %v770 = vpack.c.b16 %v658, %v654
    %v771 = vpack.c.b16 %v663, %v659
    %v772 = vpack.c.b16 %v664, %v660
    %v773 = vpack.c.b16 %v665, %v661
    %v774 = vpack.c.b16 %v666, %v662
    %v775 = vpack.c.b16 %v671, %v667
    %v776 = vpack.c.b16 %v672, %v668
    %v777 = vpack.c.b16 %v673, %v669
    %v778 = vpack.c.b16 %v674, %v670
    %v779 = vpack.c.b16 %v679, %v675
    %v780 = vpack.c.b16 %v680, %v676
    %v781 = vpack.c.b16 %v681, %v677
    %v782 = vpack.c.b16 %v682, %v678
    %v783 = vpack.c.b16 %v687, %v683
    %v784 = vpack.c.b16 %v688, %v684
    %v785 = vpack.c.b16 %v689, %v685
    %v786 = vpack.c.b16 %v690, %v686
    %v787 = vpack.c.b16 %v695, %v691
    %v788 = vpack.c.b16 %v696, %v692
    %v789 = vpack.c.b16 %v697, %v693
    %v790 = vpack.c.b16 %v698, %v694
    %v791 = vpack.c.b16 %v703, %v699
    %v792 = vpack.c.b16 %v704, %v700
    %v793 = vpack.c.b16 %v705, %v701
    %v794 = vpack.c.b16 %v706, %v702
    %v795 = vpack.c.b16 %v711, %v707
    %v796 = vpack.c.b16 %v712, %v708
    %v797 = vpack.c.b16 %v713, %v709
    %v798 = vpack.c.b16 %v714, %v710
    %v799 = vpack.c.b16 %v719, %v715
    %v800 = vpack.c.b16 %v720, %v716
    %v801 = vpack.c.b16 %v721, %v717
    %v802 = vpack.c.b16 %v722, %v718
    %v803 = vpack.c.b16 %v727, %v723
    %v804 = vpack.c.b16 %v728, %v724
    %v805 = vpack.c.b16 %v729, %v725
    %v806 = vpack.c.b16 %v730, %v726
    %v807 = vpack.c.b16 %v735, %v731
    %v808 = vpack.c.b16 %v736, %v732
    %v809 = vpack.c.b16 %v737, %v733
    %v810 = vpack.c.b16 %v738, %v734
    %v811 = vpack.c.b16 %v743, %v739
    %v812 = vpack.c.b16 %v744, %v740
    %v813 = vpack.c.b16 %v745, %v741
    %v814 = vpack.c.b16 %v746, %v742
    %v815 = vpack.c.b16 %v751, %v747
    %v816 = vpack.c.b16 %v752, %v748
    %v817 = vpack.c.b16 %v753, %v749
    %v818 = vpack.c.b16 %v754, %v750
    %883 = vmatprep.subr.bf16.mxu0 %v756
    %884 = vmatpush1.bf16.msra.mxu0 %v755
    %885 = vmatprep.subr.bf16.mxu0 %v760
    %886 = vmatpush1.bf16.msra.mxu0 %v759
    %887 = vmatprep.subr.bf16.mxu0 %v764
    %888 = vmatpush1.bf16.msra.mxu0 %v763
    %889 = vmatprep.subr.bf16.mxu0 %v768
    %890 = vmatpush1.bf16.msra.mxu0 %v767
    %891 = vmatprep.subr.bf16.mxu0 %v772
    %892 = vmatpush1.bf16.msra.mxu0 %v771
    %893 = vmatprep.subr.bf16.mxu0 %v776
    %894 = vmatpush1.bf16.msra.mxu0 %v775
    %895 = vmatprep.subr.bf16.mxu0 %v780
    %896 = vmatpush1.bf16.msra.mxu0 %v779
    %897 = vmatprep.subr.bf16.mxu0 %v784
    %898 = vmatpush1.bf16.msra.mxu0 %v783
    %899 = vmatprep.subr.bf16.mxu0 %v788
    %900 = vmatpush1.bf16.msra.mxu0 %v787
    %901 = vmatprep.subr.bf16.mxu0 %v792
    %902 = vmatpush1.bf16.msra.mxu0 %v791
    %903 = vmatprep.subr.bf16.mxu0 %v796
    %904 = vmatpush1.bf16.msra.mxu0 %v795
    %905 = vmatprep.subr.bf16.mxu0 %v800
    %906 = vmatpush1.bf16.msra.mxu0 %v799
    %907 = vmatprep.subr.bf16.mxu0 %v804
    %908 = vmatpush1.bf16.msra.mxu0 %v803
    %909 = vmatprep.subr.bf16.mxu0 %v808
    %910 = vmatpush1.bf16.msra.mxu0 %v807
    %911 = vmatprep.subr.bf16.mxu0 %v812
    %912 = vmatpush1.bf16.msra.mxu0 %v811
    %913 = vmatprep.subr.bf16.mxu0 %v816
    %914 = vmatpush1.bf16.msra.mxu0 %v815
    %915 = vmatprep.mubr.bf16.mxu0 %v476
    %916 = vmatmul.mubr.bf16.gmra.mrb[0].mxu0 %v475
    %v917 = vpop.f32.mrb[0].mxu0
    %v918 = vadd.f32 %v546, %v917
    %v919 = vpop.f32.mrb[0].mxu0
    %v920 = vadd.f32 %v550, %v919
    %v921 = vpop.f32.mrb[0].mxu0
    %v922 = vpop.f32.mrb[0].mxu0
    %923 = vdwg.mxu0
    %924 = vmatprep.subr.bf16.mxu0 %v758
    %925 = vmatpush1.bf16.msra.mxu0 %v757
    %926 = vmatprep.subr.bf16.mxu0 %v762
    %927 = vmatpush1.bf16.msra.mxu0 %v761
    %928 = vmatprep.subr.bf16.mxu0 %v766
    %929 = vmatpush1.bf16.msra.mxu0 %v765
    %930 = vmatprep.subr.bf16.mxu0 %v770
    %931 = vmatpush1.bf16.msra.mxu0 %v769
    %932 = vmatprep.subr.bf16.mxu0 %v774
    %933 = vmatpush1.bf16.msra.mxu0 %v773
    %934 = vmatprep.subr.bf16.mxu0 %v778
    %935 = vmatpush1.bf16.msra.mxu0 %v777
    %936 = vmatprep.subr.bf16.mxu0 %v782
    %937 = vmatpush1.bf16.msra.mxu0 %v781
    %938 = vmatprep.subr.bf16.mxu0 %v786
    %939 = vmatpush1.bf16.msra.mxu0 %v785
    %940 = vmatprep.subr.bf16.mxu0 %v790
    %941 = vmatpush1.bf16.msra.mxu0 %v789
    %942 = vmatprep.subr.bf16.mxu0 %v794
    %943 = vmatpush1.bf16.msra.mxu0 %v793
    %944 = vmatprep.subr.bf16.mxu0 %v798
    %945 = vmatpush1.bf16.msra.mxu0 %v797
    %946 = vmatprep.subr.bf16.mxu0 %v802
    %947 = vmatpush1.bf16.msra.mxu0 %v801
    %948 = vmatprep.subr.bf16.mxu0 %v806
    %949 = vmatpush1.bf16.msra.mxu0 %v805
    %950 = vmatprep.subr.bf16.mxu0 %v810
    %951 = vmatpush1.bf16.msra.mxu0 %v809
    %952 = vmatprep.subr.bf16.mxu0 %v814
    %953 = vmatpush1.bf16.msra.mxu0 %v813
    %954 = vmatprep.subr.bf16.mxu0 %v818
    %955 = vmatpush1.bf16.msra.mxu0 %v817
    %956 = vmatprep.mubr.bf16.mxu0 %v476
    %957 = vmatmul.mubr.bf16.gmra.mrb[0].mxu0 %v475
    %v958 = vpop.f32.mrb[0].mxu0
    %v959 = vadd.f32 %v554, %v958
    %v960 = vpop.f32.mrb[0].mxu0
    %v961 = vadd.f32 %v558, %v960
    %v962 = vpop.f32.mrb[0].mxu0
    %v963 = vpop.f32.mrb[0].mxu0
    %964 = vdwg.mxu0
    %v965 = vld [vmem:[%s7] sm:$0xf]
    %v966 = vld [vmem:[%s8] sm:$0xf]
    %v967 = vadd.f32 %v918, %v920
    %v968 = vadd.f32 %v967, %v959
    %v969 = vadd.f32 %v968, %v961
    %970 = vadd.xlane.f32.xlu0 %v969
    %v971 = vpop.xlane.xlu0 %970
    %v972 = vrcp.pop 512.0
    %v973 = vmul.f32 %v971, %v972
    %v974 = vsub.f32 %v918, %v973
    %v975 = vsub.f32 %v920, %v973
    %v976 = vsub.f32 %v959, %v973
    %v977 = vsub.f32 %v961, %v973
    %v978 = vmul.f32 %v974, %v974
    %v979 = vmul.f32 %v975, %v975
    %v980 = vmul.f32 %v976, %v976
    %v981 = vmul.f32 %v977, %v977
    %v982 = vadd.f32 %v978, %v979
    %v983 = vadd.f32 %v982, %v980
    %v984 = vadd.f32 %v983, %v981
    %985 = vadd.xlane.f32.xlu0 %v984
    %v986 = vpop.xlane.xlu0 %985
    %v987 = vmul.f32 %v986, %v972
    %v988 = vadd.f32 %v987, 1e-05
    %v989 = vrsqrt.pop %v988
    %v990 = vmul.f32 %v974, %v989
    %v991 = vmul.f32 %v975, %v989
    %v992 = vmul.f32 %v976, %v989
    %v993 = vmul.f32 %v977, %v989
    %v995 = vlaneseq
    %v996 = vshrl.u32 %v995, 7
    %v997 = vsub.s32 0, %v996
    %v998 = vrot.slane %v965, %v997
    %v999 = vlaneseq
    %v1000 = vshrl.u32 %v999, 7
    %v1001 = vsub.s32 1, %v1000
    %v1002 = vrot.slane %v965, %v1001
    %v1003 = vlaneseq
    %v1004 = vshrl.u32 %v1003, 7
    %v1005 = vsub.s32 2, %v1004
    %v1006 = vrot.slane %v965, %v1005
    %v1007 = vlaneseq
    %v1008 = vshrl.u32 %v1007, 7
    %v1009 = vsub.s32 3, %v1008
    %v1010 = vrot.slane %v965, %v1009
    %v1015 = vmul.f32 %v990, %v998
    %v1016 = vmul.f32 %v991, %v1002
    %v1017 = vmul.f32 %v992, %v1006
    %v1018 = vmul.f32 %v993, %v1010
    %v1020 = vlaneseq
    %v1021 = vshrl.u32 %v1020, 7
    %v1022 = vsub.s32 0, %v1021
    %v1023 = vrot.slane %v966, %v1022
    %v1024 = vlaneseq
    %v1025 = vshrl.u32 %v1024, 7
    %v1026 = vsub.s32 1, %v1025
    %v1027 = vrot.slane %v966, %v1026
    %v1028 = vlaneseq
    %v1029 = vshrl.u32 %v1028, 7
    %v1030 = vsub.s32 2, %v1029
    %v1031 = vrot.slane %v966, %v1030
    %v1032 = vlaneseq
    %v1033 = vshrl.u32 %v1032, 7
    %v1034 = vsub.s32 3, %v1033
    %v1035 = vrot.slane %v966, %v1034
    %v1040 = vadd.f32 %v1015, %v1023
    %v1041 = vadd.f32 %v1016, %v1027
    %v1042 = vadd.f32 %v1017, %v1031
    %v1043 = vadd.f32 %v1018, %v1035
    %v1044 = vmax.f32 %v1040, 0.0
    %v1045 = vmax.f32 %v1041, 0.0
    %v1046 = vmax.f32 %v1042, 0.0
    %v1047 = vmax.f32 %v1043, 0.0
    %v1048 = vpack.c.bf16 %v1044, %v1044
    %v1049 = vpack.c.bf16 %v1045, %v1045
    %v1050 = vpack.c.bf16 %v1046, %v1046
    %v1051 = vpack.c.bf16 %v1047, %v1047
    %v1052 = vld [vmem:[#allocation6] sm:$0xff]
    %v1053 = vld [vmem:[#allocation6 + $0x8] sm:$0xff]
    %v1054 = vld [vmem:[#allocation6 + $0x10] sm:$0xff]
    %v1055 = vld [vmem:[#allocation6 + $0x18] sm:$0xff]
    %v1056 = vld [vmem:[#allocation6 + $0x20] sm:$0xff]
    %v1057 = vld [vmem:[#allocation6 + $0x28] sm:$0xff]
    %v1058 = vld [vmem:[#allocation6 + $0x30] sm:$0xff]
    %v1059 = vld [vmem:[#allocation6 + $0x38] sm:$0xff]
    %v1060 = vld [vmem:[#allocation6 + $0x40] sm:$0xff]
    %v1061 = vld [vmem:[#allocation6 + $0x48] sm:$0xff]
    %v1062 = vld [vmem:[#allocation6 + $0x50] sm:$0xff]
    %v1063 = vld [vmem:[#allocation6 + $0x58] sm:$0xff]
    %v1064 = vld [vmem:[#allocation6 + $0x60] sm:$0xff]
    %v1065 = vld [vmem:[#allocation6 + $0x68] sm:$0xff]
    %v1066 = vld [vmem:[#allocation6 + $0x70] sm:$0xff]
    %v1067 = vld [vmem:[#allocation6 + $0x78] sm:$0xff]
    %v1068 = vld [vmem:[#allocation6 + $0x80] sm:$0xff]
    %v1069 = vld [vmem:[#allocation6 + $0x88] sm:$0xff]
    %v1070 = vld [vmem:[#allocation6 + $0x90] sm:$0xff]
    %v1071 = vld [vmem:[#allocation6 + $0x98] sm:$0xff]
    %v1072 = vld [vmem:[#allocation6 + $0xa0] sm:$0xff]
    %v1073 = vld [vmem:[#allocation6 + $0xa8] sm:$0xff]
    %v1074 = vld [vmem:[#allocation6 + $0xb0] sm:$0xff]
    %v1075 = vld [vmem:[#allocation6 + $0xb8] sm:$0xff]
    %v1076 = vld [vmem:[#allocation6 + $0xc0] sm:$0xff]
    %v1077 = vld [vmem:[#allocation6 + $0xc8] sm:$0xff]
    %v1078 = vld [vmem:[#allocation6 + $0xd0] sm:$0xff]
    %v1079 = vld [vmem:[#allocation6 + $0xd8] sm:$0xff]
    %v1080 = vld [vmem:[#allocation6 + $0xe0] sm:$0xff]
    %v1081 = vld [vmem:[#allocation6 + $0xe8] sm:$0xff]
    %v1082 = vld [vmem:[#allocation6 + $0xf0] sm:$0xff]
    %v1083 = vld [vmem:[#allocation6 + $0xf8] sm:$0xff]
    %v1084 = vld [vmem:[#allocation6 + $0x100] sm:$0xff]
    %v1085 = vld [vmem:[#allocation6 + $0x108] sm:$0xff]
    %v1086 = vld [vmem:[#allocation6 + $0x110] sm:$0xff]
    %v1087 = vld [vmem:[#allocation6 + $0x118] sm:$0xff]
    %v1088 = vld [vmem:[#allocation6 + $0x120] sm:$0xff]
    %v1089 = vld [vmem:[#allocation6 + $0x128] sm:$0xff]
    %v1090 = vld [vmem:[#allocation6 + $0x130] sm:$0xff]
    %v1091 = vld [vmem:[#allocation6 + $0x138] sm:$0xff]
    %v1092 = vld [vmem:[#allocation6 + $0x140] sm:$0xff]
    %v1093 = vld [vmem:[#allocation6 + $0x148] sm:$0xff]
    %v1094 = vld [vmem:[#allocation6 + $0x150] sm:$0xff]
    %v1095 = vld [vmem:[#allocation6 + $0x158] sm:$0xff]
    %v1096 = vld [vmem:[#allocation6 + $0x160] sm:$0xff]
    %v1097 = vld [vmem:[#allocation6 + $0x168] sm:$0xff]
    %v1098 = vld [vmem:[#allocation6 + $0x170] sm:$0xff]
    %v1099 = vld [vmem:[#allocation6 + $0x178] sm:$0xff]
    %v1100 = vld [vmem:[#allocation6 + $0x180] sm:$0xff]
    %v1101 = vld [vmem:[#allocation6 + $0x188] sm:$0xff]
    %v1102 = vld [vmem:[#allocation6 + $0x190] sm:$0xff]
    %v1103 = vld [vmem:[#allocation6 + $0x198] sm:$0xff]
    %v1104 = vld [vmem:[#allocation6 + $0x1a0] sm:$0xff]
    %v1105 = vld [vmem:[#allocation6 + $0x1a8] sm:$0xff]
    %v1106 = vld [vmem:[#allocation6 + $0x1b0] sm:$0xff]
    %v1107 = vld [vmem:[#allocation6 + $0x1b8] sm:$0xff]
    %v1108 = vld [vmem:[#allocation6 + $0x1c0] sm:$0xff]
    %v1109 = vld [vmem:[#allocation6 + $0x1c8] sm:$0xff]
    %v1110 = vld [vmem:[#allocation6 + $0x1d0] sm:$0xff]
    %v1111 = vld [vmem:[#allocation6 + $0x1d8] sm:$0xff]
    %v1112 = vld [vmem:[#allocation6 + $0x1e0] sm:$0xff]
    %v1113 = vld [vmem:[#allocation6 + $0x1e8] sm:$0xff]
    %v1114 = vld [vmem:[#allocation6 + $0x1f0] sm:$0xff]
    %v1115 = vld [vmem:[#allocation6 + $0x1f8] sm:$0xff]
    %v1116 = vld [vmem:[%s10] sm:$0x3]
    %v1118 = vlaneseq
    %v1119 = vshrl.u32 %v1118, 7
    %v1120 = vsub.s32 0, %v1119
    %v1121 = vrot.slane %v1116, %v1120
    %v1122 = vlaneseq
    %v1123 = vshrl.u32 %v1122, 7
    %v1124 = vsub.s32 1, %v1123
    %v1125 = vrot.slane %v1116, %v1124
    %v1192 = vunpack.c.l.b16 %v1052
    %v1193 = vunpack.c.h.b16 %v1052
    %v1194 = vunpack.c.l.b16 %v1053
    %v1195 = vunpack.c.h.b16 %v1053
    %v1196 = vunpack.c.l.b16 %v1054
    %v1197 = vunpack.c.h.b16 %v1054
    %v1198 = vunpack.c.l.b16 %v1055
    %v1199 = vunpack.c.h.b16 %v1055
    %v1200 = vunpack.c.l.b16 %v1056
    %v1201 = vunpack.c.h.b16 %v1056
    %v1202 = vunpack.c.l.b16 %v1057
    %v1203 = vunpack.c.h.b16 %v1057
    %v1204 = vunpack.c.l.b16 %v1058
    %v1205 = vunpack.c.h.b16 %v1058
    %v1206 = vunpack.c.l.b16 %v1059
    %v1207 = vunpack.c.h.b16 %v1059
    %v1208 = vunpack.c.l.b16 %v1060
    %v1209 = vunpack.c.h.b16 %v1060
    %v1210 = vunpack.c.l.b16 %v1061
    %v1211 = vunpack.c.h.b16 %v1061
    %v1212 = vunpack.c.l.b16 %v1062
    %v1213 = vunpack.c.h.b16 %v1062
    %v1214 = vunpack.c.l.b16 %v1063
    %v1215 = vunpack.c.h.b16 %v1063
    %v1216 = vunpack.c.l.b16 %v1064
    %v1217 = vunpack.c.h.b16 %v1064
    %v1218 = vunpack.c.l.b16 %v1065
    %v1219 = vunpack.c.h.b16 %v1065
    %v1220 = vunpack.c.l.b16 %v1066
    %v1221 = vunpack.c.h.b16 %v1066
    %v1222 = vunpack.c.l.b16 %v1067
    %v1223 = vunpack.c.h.b16 %v1067
    %v1224 = vunpack.c.l.b16 %v1068
    %v1225 = vunpack.c.h.b16 %v1068
    %v1226 = vunpack.c.l.b16 %v1069
    %v1227 = vunpack.c.h.b16 %v1069
    %v1228 = vunpack.c.l.b16 %v1070
    %v1229 = vunpack.c.h.b16 %v1070
    %v1230 = vunpack.c.l.b16 %v1071
    %v1231 = vunpack.c.h.b16 %v1071
    %v1232 = vunpack.c.l.b16 %v1072
    %v1233 = vunpack.c.h.b16 %v1072
    %v1234 = vunpack.c.l.b16 %v1073
    %v1235 = vunpack.c.h.b16 %v1073
    %v1236 = vunpack.c.l.b16 %v1074
    %v1237 = vunpack.c.h.b16 %v1074
    %v1238 = vunpack.c.l.b16 %v1075
    %v1239 = vunpack.c.h.b16 %v1075
    %v1240 = vunpack.c.l.b16 %v1076
    %v1241 = vunpack.c.h.b16 %v1076
    %v1242 = vunpack.c.l.b16 %v1077
    %v1243 = vunpack.c.h.b16 %v1077
    %v1244 = vunpack.c.l.b16 %v1078
    %v1245 = vunpack.c.h.b16 %v1078
    %v1246 = vunpack.c.l.b16 %v1079
    %v1247 = vunpack.c.h.b16 %v1079
    %v1248 = vunpack.c.l.b16 %v1080
    %v1249 = vunpack.c.h.b16 %v1080
    %v1250 = vunpack.c.l.b16 %v1081
    %v1251 = vunpack.c.h.b16 %v1081
    %v1252 = vunpack.c.l.b16 %v1082
    %v1253 = vunpack.c.h.b16 %v1082
    %v1254 = vunpack.c.l.b16 %v1083
    %v1255 = vunpack.c.h.b16 %v1083
    %v1256 = vunpack.c.l.b16 %v1084
    %v1257 = vunpack.c.h.b16 %v1084
    %v1258 = vunpack.c.l.b16 %v1085
    %v1259 = vunpack.c.h.b16 %v1085
    %v1260 = vunpack.c.l.b16 %v1086
    %v1261 = vunpack.c.h.b16 %v1086
    %v1262 = vunpack.c.l.b16 %v1087
    %v1263 = vunpack.c.h.b16 %v1087
    %v1264 = vunpack.c.l.b16 %v1088
    %v1265 = vunpack.c.h.b16 %v1088
    %v1266 = vunpack.c.l.b16 %v1089
    %v1267 = vunpack.c.h.b16 %v1089
    %v1268 = vunpack.c.l.b16 %v1090
    %v1269 = vunpack.c.h.b16 %v1090
    %v1270 = vunpack.c.l.b16 %v1091
    %v1271 = vunpack.c.h.b16 %v1091
    %v1272 = vunpack.c.l.b16 %v1092
    %v1273 = vunpack.c.h.b16 %v1092
    %v1274 = vunpack.c.l.b16 %v1093
    %v1275 = vunpack.c.h.b16 %v1093
    %v1276 = vunpack.c.l.b16 %v1094
    %v1277 = vunpack.c.h.b16 %v1094
    %v1278 = vunpack.c.l.b16 %v1095
    %v1279 = vunpack.c.h.b16 %v1095
    %v1280 = vunpack.c.l.b16 %v1096
    %v1281 = vunpack.c.h.b16 %v1096
    %v1282 = vunpack.c.l.b16 %v1097
    %v1283 = vunpack.c.h.b16 %v1097
    %v1284 = vunpack.c.l.b16 %v1098
    %v1285 = vunpack.c.h.b16 %v1098
    %v1286 = vunpack.c.l.b16 %v1099
    %v1287 = vunpack.c.h.b16 %v1099
    %v1288 = vunpack.c.l.b16 %v1100
    %v1289 = vunpack.c.h.b16 %v1100
    %v1290 = vunpack.c.l.b16 %v1101
    %v1291 = vunpack.c.h.b16 %v1101
    %v1292 = vunpack.c.l.b16 %v1102
    %v1293 = vunpack.c.h.b16 %v1102
    %v1294 = vunpack.c.l.b16 %v1103
    %v1295 = vunpack.c.h.b16 %v1103
    %v1296 = vunpack.c.l.b16 %v1104
    %v1297 = vunpack.c.h.b16 %v1104
    %v1298 = vunpack.c.l.b16 %v1105
    %v1299 = vunpack.c.h.b16 %v1105
    %v1300 = vunpack.c.l.b16 %v1106
    %v1301 = vunpack.c.h.b16 %v1106
    %v1302 = vunpack.c.l.b16 %v1107
    %v1303 = vunpack.c.h.b16 %v1107
    %v1304 = vunpack.c.l.b16 %v1108
    %v1305 = vunpack.c.h.b16 %v1108
    %v1306 = vunpack.c.l.b16 %v1109
    %v1307 = vunpack.c.h.b16 %v1109
    %v1308 = vunpack.c.l.b16 %v1110
    %v1309 = vunpack.c.h.b16 %v1110
    %v1310 = vunpack.c.l.b16 %v1111
    %v1311 = vunpack.c.h.b16 %v1111
    %v1312 = vunpack.c.l.b16 %v1112
    %v1313 = vunpack.c.h.b16 %v1112
    %v1314 = vunpack.c.l.b16 %v1113
    %v1315 = vunpack.c.h.b16 %v1113
    %v1316 = vunpack.c.l.b16 %v1114
    %v1317 = vunpack.c.h.b16 %v1114
    %v1318 = vunpack.c.l.b16 %v1115
    %v1319 = vunpack.c.h.b16 %v1115
    %v1320 = vpack.c.b16 %v1194, %v1192
    %v1321 = vpack.c.b16 %v1195, %v1193
    %v1322 = vpack.c.b16 %v1198, %v1196
    %v1323 = vpack.c.b16 %v1199, %v1197
    %v1324 = vpack.c.b16 %v1202, %v1200
    %v1325 = vpack.c.b16 %v1203, %v1201
    %v1326 = vpack.c.b16 %v1206, %v1204
    %v1327 = vpack.c.b16 %v1207, %v1205
    %v1328 = vpack.c.b16 %v1210, %v1208
    %v1329 = vpack.c.b16 %v1211, %v1209
    %v1330 = vpack.c.b16 %v1214, %v1212
    %v1331 = vpack.c.b16 %v1215, %v1213
    %v1332 = vpack.c.b16 %v1218, %v1216
    %v1333 = vpack.c.b16 %v1219, %v1217
    %v1334 = vpack.c.b16 %v1222, %v1220
    %v1335 = vpack.c.b16 %v1223, %v1221
    %v1336 = vpack.c.b16 %v1226, %v1224
    %v1337 = vpack.c.b16 %v1227, %v1225
    %v1338 = vpack.c.b16 %v1230, %v1228
    %v1339 = vpack.c.b16 %v1231, %v1229
    %v1340 = vpack.c.b16 %v1234, %v1232
    %v1341 = vpack.c.b16 %v1235, %v1233
    %v1342 = vpack.c.b16 %v1238, %v1236
    %v1343 = vpack.c.b16 %v1239, %v1237
    %v1344 = vpack.c.b16 %v1242, %v1240
    %v1345 = vpack.c.b16 %v1243, %v1241
    %v1346 = vpack.c.b16 %v1246, %v1244
    %v1347 = vpack.c.b16 %v1247, %v1245
    %v1348 = vpack.c.b16 %v1250, %v1248
    %v1349 = vpack.c.b16 %v1251, %v1249
    %v1350 = vpack.c.b16 %v1254, %v1252
    %v1351 = vpack.c.b16 %v1255, %v1253
    %v1352 = vpack.c.b16 %v1258, %v1256
    %v1353 = vpack.c.b16 %v1259, %v1257
    %v1354 = vpack.c.b16 %v1262, %v1260
    %v1355 = vpack.c.b16 %v1263, %v1261
    %v1356 = vpack.c.b16 %v1266, %v1264
    %v1357 = vpack.c.b16 %v1267, %v1265
    %v1358 = vpack.c.b16 %v1270, %v1268
    %v1359 = vpack.c.b16 %v1271, %v1269
    %v1360 = vpack.c.b16 %v1274, %v1272
    %v1361 = vpack.c.b16 %v1275, %v1273
    %v1362 = vpack.c.b16 %v1278, %v1276
    %v1363 = vpack.c.b16 %v1279, %v1277
    %v1364 = vpack.c.b16 %v1282, %v1280
    %v1365 = vpack.c.b16 %v1283, %v1281
    %v1366 = vpack.c.b16 %v1286, %v1284
    %v1367 = vpack.c.b16 %v1287, %v1285
    %v1368 = vpack.c.b16 %v1290, %v1288
    %v1369 = vpack.c.b16 %v1291, %v1289
    %v1370 = vpack.c.b16 %v1294, %v1292
    %v1371 = vpack.c.b16 %v1295, %v1293
    %v1372 = vpack.c.b16 %v1298, %v1296
    %v1373 = vpack.c.b16 %v1299, %v1297
    %v1374 = vpack.c.b16 %v1302, %v1300
    %v1375 = vpack.c.b16 %v1303, %v1301
    %v1376 = vpack.c.b16 %v1306, %v1304
    %v1377 = vpack.c.b16 %v1307, %v1305
    %v1378 = vpack.c.b16 %v1310, %v1308
    %v1379 = vpack.c.b16 %v1311, %v1309
    %v1380 = vpack.c.b16 %v1314, %v1312
    %v1381 = vpack.c.b16 %v1315, %v1313
    %v1382 = vpack.c.b16 %v1318, %v1316
    %v1383 = vpack.c.b16 %v1319, %v1317
    %1448 = vmatprep.subr.bf16.mxu0 %v1321
    %1449 = vmatpush1.bf16.msra.mxu0 %v1320
    %1450 = vmatprep.subr.bf16.mxu0 %v1323
    %1451 = vmatpush1.bf16.msra.mxu0 %v1322
    %1452 = vmatprep.subr.bf16.mxu0 %v1325
    %1453 = vmatpush1.bf16.msra.mxu0 %v1324
    %1454 = vmatprep.subr.bf16.mxu0 %v1327
    %1455 = vmatpush1.bf16.msra.mxu0 %v1326
    %1456 = vmatprep.subr.bf16.mxu0 %v1329
    %1457 = vmatpush1.bf16.msra.mxu0 %v1328
    %1458 = vmatprep.subr.bf16.mxu0 %v1331
    %1459 = vmatpush1.bf16.msra.mxu0 %v1330
    %1460 = vmatprep.subr.bf16.mxu0 %v1333
    %1461 = vmatpush1.bf16.msra.mxu0 %v1332
    %1462 = vmatprep.subr.bf16.mxu0 %v1335
    %1463 = vmatpush1.bf16.msra.mxu0 %v1334
    %1464 = vmatprep.subr.bf16.mxu0 %v1337
    %1465 = vmatpush1.bf16.msra.mxu0 %v1336
    %1466 = vmatprep.subr.bf16.mxu0 %v1339
    %1467 = vmatpush1.bf16.msra.mxu0 %v1338
    %1468 = vmatprep.subr.bf16.mxu0 %v1341
    %1469 = vmatpush1.bf16.msra.mxu0 %v1340
    %1470 = vmatprep.subr.bf16.mxu0 %v1343
    %1471 = vmatpush1.bf16.msra.mxu0 %v1342
    %1472 = vmatprep.subr.bf16.mxu0 %v1345
    %1473 = vmatpush1.bf16.msra.mxu0 %v1344
    %1474 = vmatprep.subr.bf16.mxu0 %v1347
    %1475 = vmatpush1.bf16.msra.mxu0 %v1346
    %1476 = vmatprep.subr.bf16.mxu0 %v1349
    %1477 = vmatpush1.bf16.msra.mxu0 %v1348
    %1478 = vmatprep.subr.bf16.mxu0 %v1351
    %1479 = vmatpush1.bf16.msra.mxu0 %v1350
    %1480 = vmatprep.mubr.bf16.mxu0 %v1049
    %1481 = vmatmul.mubr.bf16.gmra.mrb[0].mxu0 %v1048
    %v1482 = vpop.f32.mrb[0].mxu0
    %v1483 = vadd.f32 %v1121, %v1482
    %v1484 = vpop.f32.mrb[0].mxu0
    %v1485 = vadd.f32 %v1125, %v1484
    %v1486 = vpop.f32.mrb[0].mxu0
    %v1487 = vpop.f32.mrb[0].mxu0
    %1488 = vdwg.mxu0
    %1489 = vmatprep.subr.bf16.mxu0 %v1353
    %1490 = vmatpush1.bf16.msra.mxu0 %v1352
    %1491 = vmatprep.subr.bf16.mxu0 %v1355
    %1492 = vmatpush1.bf16.msra.mxu0 %v1354
    %1493 = vmatprep.subr.bf16.mxu0 %v1357
    %1494 = vmatpush1.bf16.msra.mxu0 %v1356
    %1495 = vmatprep.subr.bf16.mxu0 %v1359
    %1496 = vmatpush1.bf16.msra.mxu0 %v1358
    %1497 = vmatprep.subr.bf16.mxu0 %v1361
    %1498 = vmatpush1.bf16.msra.mxu0 %v1360
    %1499 = vmatprep.subr.bf16.mxu0 %v1363
    %1500 = vmatpush1.bf16.msra.mxu0 %v1362
    %1501 = vmatprep.subr.bf16.mxu0 %v1365
    %1502 = vmatpush1.bf16.msra.mxu0 %v1364
    %1503 = vmatprep.subr.bf16.mxu0 %v1367
    %1504 = vmatpush1.bf16.msra.mxu0 %v1366
    %1505 = vmatprep.subr.bf16.mxu0 %v1369
    %1506 = vmatpush1.bf16.msra.mxu0 %v1368
    %1507 = vmatprep.subr.bf16.mxu0 %v1371
    %1508 = vmatpush1.bf16.msra.mxu0 %v1370
    %1509 = vmatprep.subr.bf16.mxu0 %v1373
    %1510 = vmatpush1.bf16.msra.mxu0 %v1372
    %1511 = vmatprep.subr.bf16.mxu0 %v1375
    %1512 = vmatpush1.bf16.msra.mxu0 %v1374
    %1513 = vmatprep.subr.bf16.mxu0 %v1377
    %1514 = vmatpush1.bf16.msra.mxu0 %v1376
    %1515 = vmatprep.subr.bf16.mxu0 %v1379
    %1516 = vmatpush1.bf16.msra.mxu0 %v1378
    %1517 = vmatprep.subr.bf16.mxu0 %v1381
    %1518 = vmatpush1.bf16.msra.mxu0 %v1380
    %1519 = vmatprep.subr.bf16.mxu0 %v1383
    %1520 = vmatpush1.bf16.msra.mxu0 %v1382
    %1521 = vmatprep.mubr.bf16.mxu0 %v1051
    %1522 = vmatmul.mubr.bf16.gmra.mrb[0].mxu0 %v1050
    %v1523 = vpop.f32.mrb[0].mxu0
    %v1524 = vadd.f32 %v1483, %v1523
    %v1525 = vpop.f32.mrb[0].mxu0
    %v1526 = vadd.f32 %v1485, %v1525
    %v1527 = vpop.f32.mrb[0].mxu0
    %v1528 = vpop.f32.mrb[0].mxu0
    %1529 = vdwg.mxu0
    %v1530 = vld [vmem:[%s11] sm:$0x3]
    %v1531 = vld [vmem:[%s12] sm:$0x3]
    %v1532 = vadd.f32 %v1524, %v1526
    %1533 = vadd.xlane.f32.xlu0 %v1532
    %v1534 = vpop.xlane.xlu0 %1533
    %v1535 = vmul.f32 %v1534, %v397
    %v1536 = vsub.f32 %v1524, %v1535
    %v1537 = vsub.f32 %v1526, %v1535
    %v1538 = vmul.f32 %v1536, %v1536
    %v1539 = vmul.f32 %v1537, %v1537
    %v1540 = vadd.f32 %v1538, %v1539
    %1541 = vadd.xlane.f32.xlu0 %v1540
    %v1542 = vpop.xlane.xlu0 %1541
    %v1543 = vmul.f32 %v1542, %v397
    %v1544 = vadd.f32 %v1543, 1e-05
    %v1545 = vrsqrt.pop %v1544
    %v1546 = vmul.f32 %v1536, %v1545
    %v1547 = vmul.f32 %v1537, %v1545
    %v1549 = vlaneseq
    %v1550 = vshrl.u32 %v1549, 7
    %v1551 = vsub.s32 0, %v1550
    %v1552 = vrot.slane %v1530, %v1551
    %v1553 = vlaneseq
    %v1554 = vshrl.u32 %v1553, 7
    %v1555 = vsub.s32 1, %v1554
    %v1556 = vrot.slane %v1530, %v1555
    %v1559 = vmul.f32 %v1546, %v1552
    %v1560 = vmul.f32 %v1547, %v1556
    %v1562 = vlaneseq
    %v1563 = vshrl.u32 %v1562, 7
    %v1564 = vsub.s32 0, %v1563
    %v1565 = vrot.slane %v1531, %v1564
    %v1566 = vlaneseq
    %v1567 = vshrl.u32 %v1566, 7
    %v1568 = vsub.s32 1, %v1567
    %v1569 = vrot.slane %v1531, %v1568
    %v1572 = vadd.f32 %v1559, %v1565
    %v1573 = vadd.f32 %v1560, %v1569
    %v1574 = vmax.f32 %v1572, 0.0
    %v1575 = vmax.f32 %v1573, 0.0
    %v1576 = vpack.c.bf16 %v1574, %v1574
    %v1577 = vpack.c.bf16 %v1575, %v1575
    %v1578 = vld [vmem:[%s13] sm:$0xf]
    %v1579 = vld [vmem:[%s13 + $0x4] sm:$0xf]
    %v1580 = vld [vmem:[%s13 + $0x8] sm:$0xf]
    %v1581 = vld [vmem:[%s13 + $0xc] sm:$0xf]
    %v1582 = vld [vmem:[%s13 + $0x10] sm:$0xf]
    %v1583 = vld [vmem:[%s13 + $0x14] sm:$0xf]
    %v1584 = vld [vmem:[%s13 + $0x18] sm:$0xf]
    %v1585 = vld [vmem:[%s13 + $0x1c] sm:$0xf]
    %v1586 = vld [vmem:[%s13 + $0x20] sm:$0xf]
    %v1587 = vld [vmem:[%s13 + $0x24] sm:$0xf]
    %v1588 = vld [vmem:[%s13 + $0x28] sm:$0xf]
    %v1589 = vld [vmem:[%s13 + $0x2c] sm:$0xf]
    %v1590 = vld [vmem:[%s13 + $0x30] sm:$0xf]
    %v1591 = vld [vmem:[%s13 + $0x34] sm:$0xf]
    %v1592 = vld [vmem:[%s13 + $0x38] sm:$0xf]
    %v1593 = vld [vmem:[%s13 + $0x3c] sm:$0xf]
    %v1594 = vld [vmem:[%s13 + $0x40] sm:$0xf]
    %v1595 = vld [vmem:[%s13 + $0x44] sm:$0xf]
    %v1596 = vld [vmem:[%s13 + $0x48] sm:$0xf]
    %v1597 = vld [vmem:[%s13 + $0x4c] sm:$0xf]
    %v1598 = vld [vmem:[%s13 + $0x50] sm:$0xf]
    %v1599 = vld [vmem:[%s13 + $0x54] sm:$0xf]
    %v1600 = vld [vmem:[%s13 + $0x58] sm:$0xf]
    %v1601 = vld [vmem:[%s13 + $0x5c] sm:$0xf]
    %v1602 = vld [vmem:[%s13 + $0x60] sm:$0xf]
    %v1603 = vld [vmem:[%s13 + $0x64] sm:$0xf]
    %v1604 = vld [vmem:[%s13 + $0x68] sm:$0xf]
    %v1605 = vld [vmem:[%s13 + $0x6c] sm:$0xf]
    %v1606 = vld [vmem:[%s13 + $0x70] sm:$0xf]
    %v1607 = vld [vmem:[%s13 + $0x74] sm:$0xf]
    %v1608 = vld [vmem:[%s13 + $0x78] sm:$0xf]
    %v1609 = vld [vmem:[%s13 + $0x7c] sm:$0xf]
    %v1610 = vld [vmem:[%s14] sm:$0x1]
    %v1612 = vlaneseq
    %v1613 = vshrl.u32 %v1612, 7
    %v1614 = vsub.s32 0, %v1613
    %v1615 = vrot.slane %v1610, %v1614
    %v1649 = vunpack.c.l.b16 %v1578
    %v1650 = vunpack.c.l.b16 %v1579
    %v1651 = vunpack.c.l.b16 %v1580
    %v1652 = vunpack.c.l.b16 %v1581
    %v1653 = vunpack.c.l.b16 %v1582
    %v1654 = vunpack.c.l.b16 %v1583
    %v1655 = vunpack.c.l.b16 %v1584
    %v1656 = vunpack.c.l.b16 %v1585
    %v1657 = vunpack.c.l.b16 %v1586
    %v1658 = vunpack.c.l.b16 %v1587
    %v1659 = vunpack.c.l.b16 %v1588
    %v1660 = vunpack.c.l.b16 %v1589
    %v1661 = vunpack.c.l.b16 %v1590
    %v1662 = vunpack.c.l.b16 %v1591
    %v1663 = vunpack.c.l.b16 %v1592
    %v1664 = vunpack.c.l.b16 %v1593
    %v1665 = vunpack.c.l.b16 %v1594
    %v1666 = vunpack.c.l.b16 %v1595
    %v1667 = vunpack.c.l.b16 %v1596
    %v1668 = vunpack.c.l.b16 %v1597
    %v1669 = vunpack.c.l.b16 %v1598
    %v1670 = vunpack.c.l.b16 %v1599
    %v1671 = vunpack.c.l.b16 %v1600
    %v1672 = vunpack.c.l.b16 %v1601
    %v1673 = vunpack.c.l.b16 %v1602
    %v1674 = vunpack.c.l.b16 %v1603
    %v1675 = vunpack.c.l.b16 %v1604
    %v1676 = vunpack.c.l.b16 %v1605
    %v1677 = vunpack.c.l.b16 %v1606
    %v1678 = vunpack.c.l.b16 %v1607
    %v1679 = vunpack.c.l.b16 %v1608
    %v1680 = vunpack.c.l.b16 %v1609
    %v1681 = vpack.c.b16 %v1650, %v1649
    %v1682 = vpack.c.b16 %v1652, %v1651
    %v1683 = vpack.c.b16 %v1654, %v1653
    %v1684 = vpack.c.b16 %v1656, %v1655
    %v1685 = vpack.c.b16 %v1658, %v1657
    %v1686 = vpack.c.b16 %v1660, %v1659
    %v1687 = vpack.c.b16 %v1662, %v1661
    %v1688 = vpack.c.b16 %v1664, %v1663
    %v1689 = vpack.c.b16 %v1666, %v1665
    %v1690 = vpack.c.b16 %v1668, %v1667
    %v1691 = vpack.c.b16 %v1670, %v1669
    %v1692 = vpack.c.b16 %v1672, %v1671
    %v1693 = vpack.c.b16 %v1674, %v1673
    %v1694 = vpack.c.b16 %v1676, %v1675
    %v1695 = vpack.c.b16 %v1678, %v1677
    %v1696 = vpack.c.b16 %v1680, %v1679
    %1713 = vmatprep.subr.bf16.mxu0 0
    %1714 = vmatpush1.bf16.msra.mxu0 %v1681
    %1715 = vmatprep.subr.bf16.mxu0 0
    %1716 = vmatpush1.bf16.msra.mxu0 %v1682
    %1717 = vmatprep.subr.bf16.mxu0 0
    %1718 = vmatpush1.bf16.msra.mxu0 %v1683
    %1719 = vmatprep.subr.bf16.mxu0 0
    %1720 = vmatpush1.bf16.msra.mxu0 %v1684
    %1721 = vmatprep.subr.bf16.mxu0 0
    %1722 = vmatpush1.bf16.msra.mxu0 %v1685
    %1723 = vmatprep.subr.bf16.mxu0 0
    %1724 = vmatpush1.bf16.msra.mxu0 %v1686
    %1725 = vmatprep.subr.bf16.mxu0 0
    %1726 = vmatpush1.bf16.msra.mxu0 %v1687
    %1727 = vmatprep.subr.bf16.mxu0 0
    %1728 = vmatpush1.bf16.msra.mxu0 %v1688
    %1729 = vmatprep.subr.bf16.mxu0 0
    %1730 = vmatpush1.bf16.msra.mxu0 %v1689
    %1731 = vmatprep.subr.bf16.mxu0 0
    %1732 = vmatpush1.bf16.msra.mxu0 %v1690
    %1733 = vmatprep.subr.bf16.mxu0 0
    %1734 = vmatpush1.bf16.msra.mxu0 %v1691
    %1735 = vmatprep.subr.bf16.mxu0 0
    %1736 = vmatpush1.bf16.msra.mxu0 %v1692
    %1737 = vmatprep.subr.bf16.mxu0 0
    %1738 = vmatpush1.bf16.msra.mxu0 %v1693
    %1739 = vmatprep.subr.bf16.mxu0 0
    %1740 = vmatpush1.bf16.msra.mxu0 %v1694
    %1741 = vmatprep.subr.bf16.mxu0 0
    %1742 = vmatpush1.bf16.msra.mxu0 %v1695
    %1743 = vmatprep.subr.bf16.mxu0 0
    %1744 = vmatpush1.bf16.msra.mxu0 %v1696
    %1745 = vmatprep.mubr.bf16.mxu0 %v1577
    %1746 = vmatmul.mubr.bf16.gmra.mrb[0].mxu0 %v1576
    %v1747 = vpop.f32.mrb[0].mxu0
    %v1748 = vadd.f32 %v1615, %v1747
    %v1749 = vpop.f32.mrb[0].mxu0
    %v1750 = vpop.f32.mrb[0].mxu0
    %v1751 = vpop.f32.mrb[0].mxu0
    %1752 = vdwg.mxu0
    %v1753 = vld [vmem:[%s15] sm:$0x1]
    %v1754 = vld [vmem:[%s16] sm:$0x1]
    %vm1755 = vcmask 261120
    %v1756 = vsel %vm1755, %v1748, 0.0
    %1757 = vadd.xlane.f32.xlu0 %v1756
    %v1758 = vpop.xlane.xlu0 %1757
    %v1759 = vrcp.pop 32.0
    %v1760 = vmul.f32 %v1758, %v1759
    %v1761 = vsub.f32 %v1748, %v1760
    %v1762 = vmul.f32 %v1761, %v1761
    %v1763 = vsel %vm1755, %v1762, 0.0
    %1764 = vadd.xlane.f32.xlu0 %v1763
    %v1765 = vpop.xlane.xlu0 %1764
    %v1766 = vmul.f32 %v1765, %v1759
    %v1767 = vadd.f32 %v1766, 1e-05
    %v1768 = vrsqrt.pop %v1767
    %v1769 = vmul.f32 %v1761, %v1768
    %v1771 = vlaneseq
    %v1772 = vshrl.u32 %v1771, 7
    %v1773 = vsub.s32 0, %v1772
    %v1774 = vrot.slane %v1753, %v1773
    %v1776 = vmul.f32 %v1769, %v1774
    %v1778 = vlaneseq
    %v1779 = vshrl.u32 %v1778, 7
    %v1780 = vsub.s32 0, %v1779
    %v1781 = vrot.slane %v1754, %v1780
    %v1783 = vadd.f32 %v1776, %v1781
    %v1784 = vtanh.pop %v1783
    %v1785 = vsel %vm1755, %v1784, 0.0
    %v1786 = vrot.slane %v1785, 4
    %v1787 = vadd.f32 %v1785, %v1786
    %v1788 = vrot.slane %v1787, 2
    %v1789 = vadd.f32 %v1787, %v1788
    %v1790 = vrot.slane %v1789, 1
    %v1791 = vadd.f32 %v1789, %v1790
    %v1792 = vrcp.pop 8.0
    %v1793 = vmul.f32 %v1791, %v1792
    %v1794 = vld [vmem:[%s17] sm:$0xff]
    %v1795 = vld [vmem:[%s17 + $0x8] sm:$0xff]
    %v1796 = vld [vmem:[%s17 + $0x10] sm:$0xff]
    %v1797 = vld [vmem:[%s17 + $0x18] sm:$0xff]
    %v1798 = vld [vmem:[%s17 + $0x20] sm:$0xff]
    %v1799 = vld [vmem:[%s17 + $0x28] sm:$0xff]
    %v1800 = vld [vmem:[%s17 + $0x30] sm:$0xff]
    %v1801 = vld [vmem:[%s17 + $0x38] sm:$0xff]
    %v1803 = vsel %vm1755, %v1793, 0
    %1805 = vmatprep.subr.mxu0 %v1795
    %1806 = vmatpush1.msra.mxu0 %v1794
    %1807 = vmatprep.subr.mxu0 %v1797
    %1808 = vmatpush1.msra.mxu0 %v1796
    %1809 = vmatprep.subr.mxu0 %v1799
    %1810 = vmatpush1.msra.mxu0 %v1798
    %1811 = vmatprep.subr.mxu0 %v1801
    %1812 = vmatpush1.msra.mxu0 %v1800
    %1813 = vmatprep.subr.mxu0 0.0
    %1814 = vmatpush1.msra.mxu0 0.0
    %1815 = vmatprep.subr.mxu0 0.0
    %1816 = vmatpush1.msra.mxu0 0.0
    %1817 = vmatprep.subr.mxu0 0.0
    %1818 = vmatpush1.msra.mxu0 0.0
    %1819 = vmatprep.subr.mxu0 0.0
    %1820 = vmatpush1.msra.mxu0 0.0
    %1821 = vmatprep.subr.mxu0 0.0
    %1822 = vmatpush1.msra.mxu0 0.0
    %1823 = vmatprep.subr.mxu0 0.0
    %1824 = vmatpush1.msra.mxu0 0.0
    %1825 = vmatprep.subr.mxu0 0.0
    %1826 = vmatpush1.msra.mxu0 0.0
    %1827 = vmatprep.subr.mxu0 0.0
    %1828 = vmatpush1.msra.mxu0 0.0
    %1829 = vmatprep.subr.mxu0 0.0
    %1830 = vmatpush1.msra.mxu0 0.0
    %1831 = vmatprep.subr.mxu0 0.0
    %1832 = vmatpush1.msra.mxu0 0.0
    %1833 = vmatprep.subr.mxu0 0.0
    %1834 = vmatpush1.msra.mxu0 0.0
    %1835 = vmatprep.subr.mxu0 0.0
    %1836 = vmatpush1.msra.mxu0 0.0
    %1837 = vmatprep.subr.mxu0 0.0
    %1838 = vmatpush1.msra.mxu0 0.0
    %1839 = vmatprep.subr.mxu0 0.0
    %1840 = vmatpush1.msra.mxu0 0.0
    %1841 = vmatprep.subr.mxu0 0.0
    %1842 = vmatpush1.msra.mxu0 0.0
    %1843 = vmatprep.subr.mxu0 0.0
    %1844 = vmatpush1.msra.mxu0 0.0
    %1845 = vmatprep.subr.mxu0 0.0
    %1846 = vmatpush1.msra.mxu0 0.0
    %1847 = vmatprep.subr.mxu0 0.0
    %1848 = vmatpush1.msra.mxu0 0.0
    %1849 = vmatprep.subr.mxu0 0.0
    %1850 = vmatpush1.msra.mxu0 0.0
    %1851 = vmatprep.subr.mxu0 0.0
    %1852 = vmatpush1.msra.mxu0 0.0
    %1853 = vmatprep.subr.mxu0 0.0
    %1854 = vmatpush1.msra.mxu0 0.0
    %1855 = vmatprep.subr.mxu0 0.0
    %1856 = vmatpush1.msra.mxu0 0.0
    %1857 = vmatprep.subr.mxu0 0.0
    %1858 = vmatpush1.msra.mxu0 0.0
    %1859 = vmatprep.subr.mxu0 0.0
    %1860 = vmatpush1.msra.mxu0 0.0
    %1861 = vmatprep.subr.mxu0 0.0
    %1862 = vmatpush1.msra.mxu0 0.0
    %1863 = vmatprep.subr.mxu0 0.0
    %1864 = vmatpush1.msra.mxu0 0.0
    %1865 = vmatprep.subr.mxu0 0.0
    %1866 = vmatpush1.msra.mxu0 0.0
    %1867 = vmatprep.subr.mxu0 0.0
    %1868 = vmatpush1.msra.mxu0 0.0
    %1869 = vmatprep.mubr.f32.mxu0 0.0
    %1870 = vmatmul.mubr.f32.gmra.mrb[0].mxu0 %v1803
    %v1871 = vpop.f32.mrb[0].mxu0
    %v1872 = vadd.f32 0.0, %v1871
    %v1873 = vpop.f32.mrb[0].mxu0
    %v1874 = vadd.f32 0.0, %v1873
    %1875 = vdwg.mxu0
    %v1876 = vmul.f32 %v1872, 9.9
    %v1877 = vmul.f32 %v1874, 9.9
    %v1880 = vcombine.low %v1876, %v1877
    %v1882 = vunpack.c.l.s4 1966171168
    %v1883 = vunpack.c.0.s8 %v1882
    %v1884 = vlaneseq
    %v1885 = vshrl.u32 %v1884, 7
    %v1886 = vsub.s32 %v1883, %v1885
    %v1887 = vrot.slane %v1880, %v1886
    %v1889 = vunpack.c.l.s4 1966171168
    %v1890 = vunpack.c.0.s8 %v1889
    %v1891 = vlaneseq
    %v1892 = vshrl.u32 %v1891, 7
    %v1893 = vsub.s32 %v1890, %v1892
    %v1894 = vrot.slane %v1887, %v1893
    %v1896 = vlaneseq
    %vm1897 = vcmp.ge.s32.totalorder %v1896, 0
    %vm1898 = vcmp.lt.s32.totalorder %v1896, 256
    %vm1899 = vmand %vm1897, %vm1898
    %1900 = vst.msk [vmem:[%s21] sm:$0x3] %vm1899, %v1894
    // Predicated region
    $region86: #{hebbian_layer_forward.2} parent=1 // pred_check
      _
    $region87: #{hebbian_layer_forward.2} parent=1 // pred_check_branch
      %1902 = sbr.rel (0) target = $region89
    $region88: #{hebbian_layer_forward.2} parent=1 // pred_region
      _
    $region89: #{hebbian_layer_forward.2} parent=1 // pred_fallthru
      _
    // Predicated region
    $region90: #{hebbian_layer_forward.2} parent=1 // pred_check
      _
    $region91: #{hebbian_layer_forward.2} parent=1 // pred_check_branch
      %1904 = sbr.rel (0) target = $region93
    $region92: #{hebbian_layer_forward.2} parent=1 // pred_region
      _
    $region93: #{hebbian_layer_forward.2} parent=1 // pred_fallthru
      _
    // Predicated region
    $region94: #{hebbian_layer_forward.2} parent=1 // pred_check
      _
    $region95: #{hebbian_layer_forward.2} parent=1 // pred_check_branch
      %1906 = sbr.rel (0) target = $region97
    $region96: #{hebbian_layer_forward.2} parent=1 // pred_region
      _
    $region97: #{hebbian_layer_forward.2} parent=1 // pred_fallthru
      _
    // Predicated region
    $region98: #{hebbian_layer_forward.2} parent=1 // pred_check
      _
    $region99: #{hebbian_layer_forward.2} parent=1 // pred_check_branch
      %1908 = sbr.rel (0) target = $region101
    $region100: #{hebbian_layer_forward.2} parent=1 // pred_region
      _
    $region101: #{hebbian_layer_forward.2} parent=1 // pred_fallthru
      _
    // Predicated region
    $region102: #{hebbian_layer_forward.2} parent=1 // pred_check
      _
    $region103: #{hebbian_layer_forward.2} parent=1 // pred_check_branch
      %1910 = sbr.rel (0) target = $region105
    $region104: #{hebbian_layer_forward.2} parent=1 // pred_region
      _
    $region105: #{hebbian_layer_forward.2} parent=1 // pred_fallthru
      _
    // Predicated region
    $region106: #{hebbian_layer_forward.2} parent=1 // pred_check
      _
    $region107: #{hebbian_layer_forward.2} parent=1 // pred_check_branch
      %1912 = sbr.rel (0) target = $region109
    $region108: #{hebbian_layer_forward.2} parent=1 // pred_region
      _
    $region109: #{hebbian_layer_forward.2} parent=1 // pred_fallthru
      _
    // Predicated region
    $region110: #{hebbian_layer_forward.2} parent=1 // pred_check
      _
    $region111: #{hebbian_layer_forward.2} parent=1 // pred_check_branch
      %1914 = sbr.rel (0) target = $region113
    $region112: #{hebbian_layer_forward.2} parent=1 // pred_region
      _
    $region113: #{hebbian_layer_forward.2} parent=1 // pred_fallthru
      _
    // Predicated region
    $region114: #{hebbian_layer_forward.2} parent=1 // pred_check
      _
    $region115: #{hebbian_layer_forward.2} parent=1 // pred_check_branch
      %1916 = sbr.rel (0) target = $region117
    $region116: #{hebbian_layer_forward.2} parent=1 // pred_region
      _
    $region117: #{hebbian_layer_forward.2} parent=1 // pred_fallthru
      _
    %1917 = vsyncpa [#allocation3], 1
    %1918 = vsyncpa [#allocation5], 1

</llo_original>
